<compile_context>
chip_gen: v5e
topology: v5e:2x2
jax: 0.10.0
libtpu: 0.0.40
codegen_flags: <defaults>
</compile_context>

<pallas_src>
import jax
import jax.numpy as jnp
from jax.experimental import pallas as pl
from jax.experimental.pallas import tpu as pltpu


def residual_stack_kernel(x_ref, w_ref, aff_ref, o_ref,
                          act_ref, pad_ref, patch_ref):
    """One grid step = one residual block applied to one batch tile.

    x_ref    : (NB, H, W, Cp)       input tile (read at block 0 only)
    w_ref    : (1, 2, 9*Cp, Cp)     bf16 im2col weights [conv1, conv2]
    aff_ref  : (1, 4, Cp)           f32 folded BN [s1, b1, s2, b2]
    o_ref    : (NB, H, W, Cp)       output tile (written at last block only)
    act_ref  : (NB, H, W, Cp) f32   VMEM: activation resident across blocks
    pad_ref  : (NB, H+2, W+2, Cp)   VMEM bf16: zero-halo padded activation
    patch_ref: (NB*H*W, 9*Cp) bf16  VMEM: im2col patch tile
    """
    NB, H, W, Cp = x_ref.shape
    l = pl.program_id(1)
    nblocks = pl.num_programs(1)

    @pl.when(l == 0)
    def _init():
        # Load the block-stack input once; keep it resident in VMEM.
        act_ref[...] = x_ref[...].astype(jnp.float32)
        # Zero ONLY the 1-pixel halo; the interior is fully rewritten before
        # every conv, so the halo stays zero across convs / blocks / batch tiles.
        zrow = jnp.zeros((NB, 1, W + 2, Cp), pad_ref.dtype)
        pad_ref[:, 0:1, :, :] = zrow
        pad_ref[:, H + 1:H + 2, :, :] = zrow
        zcol = jnp.zeros((NB, H, 1, Cp), pad_ref.dtype)
        pad_ref[:, 1:H + 1, 0:1, :] = zcol
        pad_ref[:, 1:H + 1, W + 1:W + 2, :] = zcol

    def conv3x3(inp_nhwc, w2d):
        # Write the (bf16) interior into the persistent zero-halo scratch.
        pad_ref[:, 1:H + 1, 1:W + 1, :] = inp_nhwc.astype(pad_ref.dtype)
        # im2col: build one (NB*H*W, 9*Cp) patch tile (lane-aligned 128-wide
        # column stores), then a single big MXU matmul with f32 accumulation.
        for dy in range(3):
            for dx in range(3):
                tap = dy * 3 + dx
                win = pad_ref[:, dy:dy + H, dx:dx + W, :]
                patch_ref[:, tap * Cp:(tap + 1) * Cp] = win.reshape(NB * H * W, Cp)
        return jnp.dot(patch_ref[...], w2d,
                       preferred_element_type=jnp.float32)   # (NB*H*W, Cp) f32

    w1 = w_ref[0, 0]                  # (9*Cp, Cp) bf16
    w2 = w_ref[0, 1]
    s1 = aff_ref[0, 0:1, :]           # (1, Cp) f32
    b1 = aff_ref[0, 1:2, :]
    s2 = aff_ref[0, 2:3, :]
    b2 = aff_ref[0, 3:4, :]

    # conv1 -> folded BN1 -> ReLU   (f32 intermediates are short-lived: h1 is
    # cast to bf16 into pad_ref right away; the residual lives in act_ref, VMEM)
    h1 = jnp.maximum(conv3x3(act_ref[...], w1) * s1 + b1, 0.0)

    # conv2 -> folded BN2
    h2 = conv3x3(h1.reshape(NB, H, W, Cp), w2) * s2 + b2

    # residual add (from VMEM-resident activation) + ReLU
    res = act_ref[...].reshape(NB * H * W, Cp)
    act_ref[...] = jnp.maximum(h2 + res, 0.0).reshape(NB, H, W, Cp)

    @pl.when(l == nblocks - 1)
    def _finalize():
        o_ref[...] = act_ref[...].astype(o_ref.dtype)


def _pick_images_per_step(N, H, W, Cp, budget_bytes=28 * 1024 * 1024):
    """Largest batch-tile that fits the VMEM budget, preferring >=2 tiles so
    both v7x TensorCores get work along the parallel grid axis."""
    def footprint(nb):
        act = nb * H * W * Cp * 4
        pad = nb * (H + 2) * (W + 2) * Cp * 2
        patch = nb * H * W * 9 * Cp * 2
        io = 2 * 2 * nb * H * W * Cp * 4          # in + out, double-buffered
        wts = 2 * 2 * 9 * Cp * Cp * 2             # per-block weights, double-buffered
        return act + pad + patch + io + wts

    divs = [d for d in range(1, N + 1) if N % d == 0 and footprint(d) <= budget_bytes]
    if not divs:
        return 1
    pref = [d for d in divs if N // d >= 2]
    return max(pref) if pref else max(divs)


def residual_blocks_pallas(x_pad, w_all, aff_all, images_per_step):
    """x_pad: (N, H, W, Cp) f32; w_all: (nblocks, 2, 9*Cp, Cp) bf16;
    aff_all: (nblocks, 4, Cp) f32."""
    N, H, W, Cp = x_pad.shape
    nblocks = w_all.shape[0]
    NB = images_per_step
    assert N % NB == 0

    return pl.pallas_call(
        residual_stack_kernel,
        out_shape=jax.ShapeDtypeStruct((N, H, W, Cp), x_pad.dtype),
        grid_spec=pltpu.PrefetchScalarGridSpec(
            num_scalar_prefetch=0,
            grid=(N // NB, nblocks),
            in_specs=[
                pl.BlockSpec((NB, H, W, Cp), lambda n, l: (n, 0, 0, 0)),
                pl.BlockSpec((1, 2, 9 * Cp, Cp), lambda n, l: (l, 0, 0, 0)),
                pl.BlockSpec((1, 4, Cp), lambda n, l: (l, 0, 0)),
            ],
            out_specs=pl.BlockSpec((NB, H, W, Cp), lambda n, l: (n, 0, 0, 0)),
            scratch_shapes=[
                pltpu.VMEM((NB, H, W, Cp), jnp.float32),            # resident act
                pltpu.VMEM((NB, H + 2, W + 2, Cp), jnp.bfloat16),   # zero-halo pad
                pltpu.VMEM((NB * H * W, 9 * Cp), jnp.bfloat16),     # im2col patches
            ],
        ),
        compiler_params=pltpu.CompilerParams(
            dimension_semantics=("parallel", "arbitrary"),
            vmem_limit_bytes=64 * 1024 * 1024,
        ),
    )(x_pad, w_all, aff_all)


def fold_bn(gamma, beta, mean, var, conv_bias, eps=1e-5):
    """Fold BN (inference) + conv bias into per-channel scale/bias (shape (C,))."""
    scale = gamma / jnp.sqrt(var + eps)
    bias = beta + scale * (conv_bias - mean)
    return scale, bias


def residual_blocks_forward(x_nchw, block_params, eps=1e-5):
    """Full ResidualBlocks forward.  x_nchw: (N, C, H, W) like PyTorch."""
    if not block_params:
        return x_nchw

    N, C, H, W = x_nchw.shape
    Cp = ((C + 127) // 128) * 128      # lane-dense channel padding

    x = jnp.transpose(x_nchw, (0, 2, 3, 1)).astype(jnp.float32)   # NCHW -> NHWC
    x = jnp.pad(x, ((0, 0), (0, 0), (0, 0), (0, Cp - C)))

    def pad_w(w):   # (3,3,C,C) HWIO -> (9*Cp, Cp) im2col layout (tap-major, then c_in)
        wp = jnp.pad(w, ((0, 0), (0, 0), (0, Cp - C), (0, Cp - C)))
        return wp.reshape(9 * Cp, Cp)

    def pad_v(v):
        return jnp.pad(v, (0, Cp - C))

    w_blocks, aff_blocks = [], []
    for p in block_params:
        s1, b1 = fold_bn(p["g1"], p["be1"], p["m1"], p["v1"], p["cb1"], eps)
        s2, b2 = fold_bn(p["g2"], p["be2"], p["m2"], p["v2"], p["cb2"], eps)
        w_blocks.append(jnp.stack([pad_w(p["w1"]), pad_w(p["w2"])]))
        aff_blocks.append(jnp.stack([pad_v(s1), pad_v(b1), pad_v(s2), pad_v(b2)]))

    w_all = jnp.stack(w_blocks).astype(jnp.bfloat16)    # (nblocks, 2, 9*Cp, Cp)
    aff_all = jnp.stack(aff_blocks).astype(jnp.float32)  # (nblocks, 4, Cp)

    NB = _pick_images_per_step(N, H, W, Cp)
    out = residual_blocks_pallas(x, w_all, aff_all, NB)   # (N, H, W, Cp)

    out = out[..., :C]
    return jnp.transpose(out, (0, 3, 1, 2))               # NHWC -> NCHW


# ---------------- pure-JAX reference (for correctness check) ----------------
def _ref_block(x_nhwc, p, eps=1e-5):
    def conv(x, w, b):
        y = jax.lax.conv_general_dilated(
            x, w, window_strides=(1, 1), padding="SAME",
            dimension_numbers=("NHWC", "HWIO", "NHWC"))
        return y + b

    def bn(x, g, be, m, v):
        return (x - m) / jnp.sqrt(v + eps) * g + be

    h = jax.nn.relu(bn(conv(x_nhwc, p["w1"], p["cb1"]),
                       p["g1"], p["be1"], p["m1"], p["v1"]))
    h = bn(conv(h, p["w2"], p["cb2"]), p["g2"], p["be2"], p["m2"], p["v2"])
    return jax.nn.relu(h + x_nhwc)


def _ref_forward(x_nchw, block_params):
    x = jnp.transpose(x_nchw, (0, 2, 3, 1))
    for p in block_params:
        x = _ref_block(x, p)
    return jnp.transpose(x, (0, 3, 1, 2))


if __name__ == "__main__":
    N, C, H, W = 2, 8, 8, 8   # small NCHW input, in_channels == out_channels
    nblocks = 2

    root = jax.random.PRNGKey(0)
    kx, kp = jax.random.split(root)
    x_nchw = jax.random.normal(kx, (N, C, H, W), jnp.float32)

    def nrm(k, shape, s=0.1):
        return s * jax.random.normal(k, shape, jnp.float32)

    block_params = []
    for i in range(nblocks):
        ks = jax.random.split(jax.random.fold_in(kp, i), 12)
        block_params.append(dict(
            w1=nrm(ks[0], (3, 3, C, C)), cb1=nrm(ks[1], (C,)),
            g1=1.0 + nrm(ks[2], (C,)), be1=nrm(ks[3], (C,)),
            m1=nrm(ks[4], (C,)), v1=jnp.abs(nrm(ks[5], (C,))) + 0.5,
            w2=nrm(ks[6], (3, 3, C, C)), cb2=nrm(ks[7], (C,)),
            g2=1.0 + nrm(ks[8], (C,)), be2=nrm(ks[9], (C,)),
            m2=nrm(ks[10], (C,)), v2=jnp.abs(nrm(ks[11], (C,))) + 0.5,
        ))

    out = jax.block_until_ready(residual_blocks_forward(x_nchw, block_params))
    ref = jax.block_until_ready(_ref_forward(x_nchw, block_params))

    assert out.shape == (N, C, H, W), out.shape
    # Tolerance sized for bf16 MXU inputs (f32 accumulation) vs. pure-f32 reference.
    err = float(jnp.max(jnp.abs(out - ref)))
    assert jnp.allclose(out, ref, atol=5e-2, rtol=5e-2), err
    print("KERNEL_OK")
</pallas_src>

<mosaic_0001>
module attributes {stable_mosaic.version = 11 : i64} {
  func.func @residual_stack_kernel(%arg0: i32, %arg1: i32, %arg2: memref<1x8x8x128xf32, #tpu.memory_space<vmem>>, %arg3: memref<1x2x1152x128xbf16, #tpu.memory_space<vmem>>, %arg4: memref<1x4x128xf32, #tpu.memory_space<vmem>>, %arg5: memref<1x8x8x128xf32, #tpu.memory_space<vmem>>, %arg6: memref<1x8x8x128xf32, #tpu.memory_space<vmem>>, %arg7: memref<1x10x10x128xbf16, #tpu.memory_space<vmem>>, %arg8: memref<64x1152xbf16, #tpu.memory_space<vmem>>) attributes {dimension_semantics = [#tpu.dimension_semantics<parallel>, #tpu.dimension_semantics<arbitrary>], iteration_bounds = array<i64: 2, 2>, scalar_prefetch = 0 : i64, scratch_operands = 3 : i64, tpu.core_type = #tpu.core_type<tc>, window_params = [{transform_indices = @transform_0, window_bounds = array<i64: 1, 8, 8, 128>}, {transform_indices = @transform_1, window_bounds = array<i64: 1, 2, 1152, 128>}, {transform_indices = @transform_2, window_bounds = array<i64: 1, 4, 128>}, {transform_indices = @transform_3, window_bounds = array<i64: 1, 8, 8, 128>}]} {
    %c0_i32 = arith.constant 0 : i32
    %0 = arith.cmpi eq, %arg1, %c0_i32 : i32
    %1 = arith.extui %0 : i1 to i32
    %c0_i32_0 = arith.constant 0 : i32
    %2 = arith.cmpi ne, %1, %c0_i32_0 : i32
    scf.if %2 {
      %c0_145 = arith.constant 0 : index
      %c0_146 = arith.constant 0 : index
      %c0_147 = arith.constant 0 : index
      %c0_148 = arith.constant 0 : index
      %99 = vector.load %arg2[%c0_145, %c0_146, %c0_147, %c0_148] : memref<1x8x8x128xf32, #tpu.memory_space<vmem>>, vector<1x8x8x128xf32>
      %c0_149 = arith.constant 0 : index
      %c0_150 = arith.constant 0 : index
      %c0_151 = arith.constant 0 : index
      %c0_152 = arith.constant 0 : index
      %100 = vector.load %arg6[%c0_149, %c0_150, %c0_151, %c0_152] : memref<1x8x8x128xf32, #tpu.memory_space<vmem>>, vector<1x8x8x128xf32>
      tpu.vector_store %arg6[%c0_149, %c0_150, %c0_151, %c0_152], %99 {strides = array<i32>} : memref<1x8x8x128xf32, #tpu.memory_space<vmem>>, vector<1x8x8x128xf32>,
      %cst_153 = arith.constant 0.000000e+00 : bf16
      %101 = vector.broadcast %cst_153 : bf16 to vector<1x1x10x128xbf16>
      %c0_154 = arith.constant 0 : index
      %c0_155 = arith.constant 0 : index
      %c0_156 = arith.constant 0 : index
      %c0_157 = arith.constant 0 : index
      %102 = vector.load %arg7[%c0_154, %c0_155, %c0_156, %c0_157] : memref<1x10x10x128xbf16, #tpu.memory_space<vmem>>, vector<1x1x10x128xbf16>
      tpu.vector_store %arg7[%c0_154, %c0_155, %c0_156, %c0_157], %101 {strides = array<i32>} : memref<1x10x10x128xbf16, #tpu.memory_space<vmem>>, vector<1x1x10x128xbf16>,
      %c0_158 = arith.constant 0 : index
      %c9 = arith.constant 9 : index
      %c0_159 = arith.constant 0 : index
      %c0_160 = arith.constant 0 : index
      %103 = vector.load %arg7[%c0_158, %c9, %c0_159, %c0_160] : memref<1x10x10x128xbf16, #tpu.memory_space<vmem>>, vector<1x1x10x128xbf16>
      tpu.vector_store %arg7[%c0_158, %c9, %c0_159, %c0_160], %101 {strides = array<i32>} : memref<1x10x10x128xbf16, #tpu.memory_space<vmem>>, vector<1x1x10x128xbf16>,
      %cst_161 = arith.constant 0.000000e+00 : bf16
      %104 = vector.broadcast %cst_161 : bf16 to vector<1x8x1x128xbf16>
      %c0_162 = arith.constant 0 : index
      %c1_163 = arith.constant 1 : index
      %c0_164 = arith.constant 0 : index
      %c0_165 = arith.constant 0 : index
      %105 = vector.load %arg7[%c0_162, %c1_163, %c0_164, %c0_165] : memref<1x10x10x128xbf16, #tpu.memory_space<vmem>>, vector<1x8x1x128xbf16>
      tpu.vector_store %arg7[%c0_162, %c1_163, %c0_164, %c0_165], %104 {strides = array<i32>} : memref<1x10x10x128xbf16, #tpu.memory_space<vmem>>, vector<1x8x1x128xbf16>,
      %c0_166 = arith.constant 0 : index
      %c1_167 = arith.constant 1 : index
      %c9_168 = arith.constant 9 : index
      %c0_169 = arith.constant 0 : index
      %106 = vector.load %arg7[%c0_166, %c1_167, %c9_168, %c0_169] : memref<1x10x10x128xbf16, #tpu.memory_space<vmem>>, vector<1x8x1x128xbf16>
      tpu.vector_store %arg7[%c0_166, %c1_167, %c9_168, %c0_169], %104 {strides = array<i32>} : memref<1x10x10x128xbf16, #tpu.memory_space<vmem>>, vector<1x8x1x128xbf16>,
    } else {
    }
    %c0 = arith.constant 0 : index
    %c0_1 = arith.constant 0 : index
    %c0_2 = arith.constant 0 : index
    %c0_3 = arith.constant 0 : index
    %3 = vector.load %arg3[%c0, %c0_1, %c0_2, %c0_3] : memref<1x2x1152x128xbf16, #tpu.memory_space<vmem>>, vector<1x1x1152x128xbf16>
    %4 = vector.shape_cast %3 : vector<1x1x1152x128xbf16> to vector<1152x128xbf16>
    %c0_4 = arith.constant 0 : index
    %c1 = arith.constant 1 : index
    %c0_5 = arith.constant 0 : index
    %c0_6 = arith.constant 0 : index
    %5 = vector.load %arg3[%c0_4, %c1, %c0_5, %c0_6] : memref<1x2x1152x128xbf16, #tpu.memory_space<vmem>>, vector<1x1x1152x128xbf16>
    %6 = vector.shape_cast %5 : vector<1x1x1152x128xbf16> to vector<1152x128xbf16>
    %c0_7 = arith.constant 0 : index
    %c0_8 = arith.constant 0 : index
    %c0_9 = arith.constant 0 : index
    %7 = vector.load %arg4[%c0_7, %c0_8, %c0_9] : memref<1x4x128xf32, #tpu.memory_space<vmem>>, vector<1x1x128xf32>
    %8 = vector.shape_cast %7 : vector<1x1x128xf32> to vector<1x128xf32>
    %c0_10 = arith.constant 0 : index
    %c1_11 = arith.constant 1 : index
    %c0_12 = arith.constant 0 : index
    %9 = vector.load %arg4[%c0_10, %c1_11, %c0_12] : memref<1x4x128xf32, #tpu.memory_space<vmem>>, vector<1x1x128xf32>
    %10 = vector.shape_cast %9 : vector<1x1x128xf32> to vector<1x128xf32>
    %c0_13 = arith.constant 0 : index
    %c2 = arith.constant 2 : index
    %c0_14 = arith.constant 0 : index
    %11 = vector.load %arg4[%c0_13, %c2, %c0_14] : memref<1x4x128xf32, #tpu.memory_space<vmem>>, vector<1x1x128xf32>
    %12 = vector.shape_cast %11 : vector<1x1x128xf32> to vector<1x128xf32>
    %c0_15 = arith.constant 0 : index
    %c3 = arith.constant 3 : index
    %c0_16 = arith.constant 0 : index
    %13 = vector.load %arg4[%c0_15, %c3, %c0_16] : memref<1x4x128xf32, #tpu.memory_space<vmem>>, vector<1x1x128xf32>
    %14 = vector.shape_cast %13 : vector<1x1x128xf32> to vector<1x128xf32>
    %c0_17 = arith.constant 0 : index
    %c0_18 = arith.constant 0 : index
    %c0_19 = arith.constant 0 : index
    %c0_20 = arith.constant 0 : index
    %15 = vector.load %arg6[%c0_17, %c0_18, %c0_19, %c0_20] : memref<1x8x8x128xf32, #tpu.memory_space<vmem>>, vector<1x8x8x128xf32>
    %16 = arith.truncf %15 : vector<1x8x8x128xf32> to vector<1x8x8x128xbf16>
    %c0_21 = arith.constant 0 : index
    %c1_22 = arith.constant 1 : index
    %c1_23 = arith.constant 1 : index
    %c0_24 = arith.constant 0 : index
    %17 = vector.load %arg7[%c0_21, %c1_22, %c1_23, %c0_24] : memref<1x10x10x128xbf16, #tpu.memory_space<vmem>>, vector<1x8x8x128xbf16>
    tpu.vector_store %arg7[%c0_21, %c1_22, %c1_23, %c0_24], %16 {strides = array<i32>} : memref<1x10x10x128xbf16, #tpu.memory_space<vmem>>, vector<1x8x8x128xbf16>,
    %c0_25 = arith.constant 0 : index
    %c0_26 = arith.constant 0 : index
    %c0_27 = arith.constant 0 : index
    %c0_28 = arith.constant 0 : index
    %18 = vector.load %arg7[%c0_25, %c0_26, %c0_27, %c0_28] : memref<1x10x10x128xbf16, #tpu.memory_space<vmem>>, vector<1x8x8x128xbf16>
    %19 = vector.shape_cast %18 : vector<1x8x8x128xbf16> to vector<64x128xbf16>
    %c0_29 = arith.constant 0 : index
    %c0_30 = arith.constant 0 : index
    %20 = vector.load %arg8[%c0_29, %c0_30] : memref<64x1152xbf16, #tpu.memory_space<vmem>>, vector<64x128xbf16>
    tpu.vector_store %arg8[%c0_29, %c0_30], %19 {strides = array<i32>} : memref<64x1152xbf16, #tpu.memory_space<vmem>>, vector<64x128xbf16>,
    %c0_31 = arith.constant 0 : index
    %c0_32 = arith.constant 0 : index
    %c1_33 = arith.constant 1 : index
    %c0_34 = arith.constant 0 : index
    %21 = vector.load %arg7[%c0_31, %c0_32, %c1_33, %c0_34] : memref<1x10x10x128xbf16, #tpu.memory_space<vmem>>, vector<1x8x8x128xbf16>
    %22 = vector.shape_cast %21 : vector<1x8x8x128xbf16> to vector<64x128xbf16>
    %c0_35 = arith.constant 0 : index
    %c128 = arith.constant 128 : index
    %23 = vector.load %arg8[%c0_35, %c128] : memref<64x1152xbf16, #tpu.memory_space<vmem>>, vector<64x128xbf16>
    tpu.vector_store %arg8[%c0_35, %c128], %22 {strides = array<i32>} : memref<64x1152xbf16, #tpu.memory_space<vmem>>, vector<64x128xbf16>,
    %c0_36 = arith.constant 0 : index
    %c0_37 = arith.constant 0 : index
    %c2_38 = arith.constant 2 : index
    %c0_39 = arith.constant 0 : index
    %24 = vector.load %arg7[%c0_36, %c0_37, %c2_38, %c0_39] : memref<1x10x10x128xbf16, #tpu.memory_space<vmem>>, vector<1x8x8x128xbf16>
    %25 = vector.shape_cast %24 : vector<1x8x8x128xbf16> to vector<64x128xbf16>
    %c0_40 = arith.constant 0 : index
    %c256 = arith.constant 256 : index
    %26 = vector.load %arg8[%c0_40, %c256] : memref<64x1152xbf16, #tpu.memory_space<vmem>>, vector<64x128xbf16>
    tpu.vector_store %arg8[%c0_40, %c256], %25 {strides = array<i32>} : memref<64x1152xbf16, #tpu.memory_space<vmem>>, vector<64x128xbf16>,
    %c0_41 = arith.constant 0 : index
    %c1_42 = arith.constant 1 : index
    %c0_43 = arith.constant 0 : index
    %c0_44 = arith.constant 0 : index
    %27 = vector.load %arg7[%c0_41, %c1_42, %c0_43, %c0_44] : memref<1x10x10x128xbf16, #tpu.memory_space<vmem>>, vector<1x8x8x128xbf16>
    %28 = vector.shape_cast %27 : vector<1x8x8x128xbf16> to vector<64x128xbf16>
    %c0_45 = arith.constant 0 : index
    %c384 = arith.constant 384 : index
    %29 = vector.load %arg8[%c0_45, %c384] : memref<64x1152xbf16, #tpu.memory_space<vmem>>, vector<64x128xbf16>
    tpu.vector_store %arg8[%c0_45, %c384], %28 {strides = array<i32>} : memref<64x1152xbf16, #tpu.memory_space<vmem>>, vector<64x128xbf16>,
    %c0_46 = arith.constant 0 : index
    %c1_47 = arith.constant 1 : index
    %c1_48 = arith.constant 1 : index
    %c0_49 = arith.constant 0 : index
    %30 = vector.load %arg7[%c0_46, %c1_47, %c1_48, %c0_49] : memref<1x10x10x128xbf16, #tpu.memory_space<vmem>>, vector<1x8x8x128xbf16>
    %31 = vector.shape_cast %30 : vector<1x8x8x128xbf16> to vector<64x128xbf16>
    %c0_50 = arith.constant 0 : index
    %c512 = arith.constant 512 : index
    %32 = vector.load %arg8[%c0_50, %c512] : memref<64x1152xbf16, #tpu.memory_space<vmem>>, vector<64x128xbf16>
    tpu.vector_store %arg8[%c0_50, %c512], %31 {strides = array<i32>} : memref<64x1152xbf16, #tpu.memory_space<vmem>>, vector<64x128xbf16>,
    %c0_51 = arith.constant 0 : index
    %c1_52 = arith.constant 1 : index
    %c2_53 = arith.constant 2 : index
    %c0_54 = arith.constant 0 : index
    %33 = vector.load %arg7[%c0_51, %c1_52, %c2_53, %c0_54] : memref<1x10x10x128xbf16, #tpu.memory_space<vmem>>, vector<1x8x8x128xbf16>
    %34 = vector.shape_cast %33 : vector<1x8x8x128xbf16> to vector<64x128xbf16>
    %c0_55 = arith.constant 0 : index
    %c640 = arith.constant 640 : index
    %35 = vector.load %arg8[%c0_55, %c640] : memref<64x1152xbf16, #tpu.memory_space<vmem>>, vector<64x128xbf16>
    tpu.vector_store %arg8[%c0_55, %c640], %34 {strides = array<i32>} : memref<64x1152xbf16, #tpu.memory_space<vmem>>, vector<64x128xbf16>,
    %c0_56 = arith.constant 0 : index
    %c2_57 = arith.constant 2 : index
    %c0_58 = arith.constant 0 : index
    %c0_59 = arith.constant 0 : index
    %36 = vector.load %arg7[%c0_56, %c2_57, %c0_58, %c0_59] : memref<1x10x10x128xbf16, #tpu.memory_space<vmem>>, vector<1x8x8x128xbf16>
    %37 = vector.shape_cast %36 : vector<1x8x8x128xbf16> to vector<64x128xbf16>
    %c0_60 = arith.constant 0 : index
    %c768 = arith.constant 768 : index
    %38 = vector.load %arg8[%c0_60, %c768] : memref<64x1152xbf16, #tpu.memory_space<vmem>>, vector<64x128xbf16>
    tpu.vector_store %arg8[%c0_60, %c768], %37 {strides = array<i32>} : memref<64x1152xbf16, #tpu.memory_space<vmem>>, vector<64x128xbf16>,
    %c0_61 = arith.constant 0 : index
    %c2_62 = arith.constant 2 : index
    %c1_63 = arith.constant 1 : index
    %c0_64 = arith.constant 0 : index
    %39 = vector.load %arg7[%c0_61, %c2_62, %c1_63, %c0_64] : memref<1x10x10x128xbf16, #tpu.memory_space<vmem>>, vector<1x8x8x128xbf16>
    %40 = vector.shape_cast %39 : vector<1x8x8x128xbf16> to vector<64x128xbf16>
    %c0_65 = arith.constant 0 : index
    %c896 = arith.constant 896 : index
    %41 = vector.load %arg8[%c0_65, %c896] : memref<64x1152xbf16, #tpu.memory_space<vmem>>, vector<64x128xbf16>
    tpu.vector_store %arg8[%c0_65, %c896], %40 {strides = array<i32>} : memref<64x1152xbf16, #tpu.memory_space<vmem>>, vector<64x128xbf16>,
    %c0_66 = arith.constant 0 : index
    %c2_67 = arith.constant 2 : index
    %c2_68 = arith.constant 2 : index
    %c0_69 = arith.constant 0 : index
    %42 = vector.load %arg7[%c0_66, %c2_67, %c2_68, %c0_69] : memref<1x10x10x128xbf16, #tpu.memory_space<vmem>>, vector<1x8x8x128xbf16>
    %43 = vector.shape_cast %42 : vector<1x8x8x128xbf16> to vector<64x128xbf16>
    %c0_70 = arith.constant 0 : index
    %c1024 = arith.constant 1024 : index
    %44 = vector.load %arg8[%c0_70, %c1024] : memref<64x1152xbf16, #tpu.memory_space<vmem>>, vector<64x128xbf16>
    tpu.vector_store %arg8[%c0_70, %c1024], %43 {strides = array<i32>} : memref<64x1152xbf16, #tpu.memory_space<vmem>>, vector<64x128xbf16>,
    %c0_71 = arith.constant 0 : index
    %c0_72 = arith.constant 0 : index
    %45 = vector.load %arg8[%c0_71, %c0_72] : memref<64x1152xbf16, #tpu.memory_space<vmem>>, vector<64x1152xbf16>
    %cst = arith.constant dense<0.000000e+00> : vector<64x128xf32>
    %46 = tpu.matmul %45, %4, %cst {dimension_numbers = #tpu.dot_dimension_numbers<[1], [0], [0], [1], [0, 0, 1, 1], [], []>} : vector<64x1152xbf16>, vector<1152x128xbf16>, vector<64x128xf32> -> vector<64x128xf32>
    %47 = vector.broadcast %8 : vector<1x128xf32> to vector<64x128xf32>
    %48 = arith.mulf %46, %47 : vector<64x128xf32>
    %49 = vector.broadcast %10 : vector<1x128xf32> to vector<64x128xf32>
    %50 = arith.addf %48, %49 : vector<64x128xf32>
    %cst_73 = arith.constant 0.000000e+00 : f32
    %51 = vector.broadcast %cst_73 : f32 to vector<64x128xf32>
    %52 = arith.maximumf %50, %51 : vector<64x128xf32>
    %53 = vector.shape_cast %52 : vector<64x128xf32> to vector<1x8x8x128xf32>
    %54 = arith.truncf %53 : vector<1x8x8x128xf32> to vector<1x8x8x128xbf16>
    %c0_74 = arith.constant 0 : index
    %c1_75 = arith.constant 1 : index
    %c1_76 = arith.constant 1 : index
    %c0_77 = arith.constant 0 : index
    %55 = vector.load %arg7[%c0_74, %c1_75, %c1_76, %c0_77] : memref<1x10x10x128xbf16, #tpu.memory_space<vmem>>, vector<1x8x8x128xbf16>
    tpu.vector_store %arg7[%c0_74, %c1_75, %c1_76, %c0_77], %54 {strides = array<i32>} : memref<1x10x10x128xbf16, #tpu.memory_space<vmem>>, vector<1x8x8x128xbf16>,
    %c0_78 = arith.constant 0 : index
    %c0_79 = arith.constant 0 : index
    %c0_80 = arith.constant 0 : index
    %c0_81 = arith.constant 0 : index
    %56 = vector.load %arg7[%c0_78, %c0_79, %c0_80, %c0_81] : memref<1x10x10x128xbf16, #tpu.memory_space<vmem>>, vector<1x8x8x128xbf16>
    %57 = vector.shape_cast %56 : vector<1x8x8x128xbf16> to vector<64x128xbf16>
    %c0_82 = arith.constant 0 : index
    %c0_83 = arith.constant 0 : index
    %58 = vector.load %arg8[%c0_82, %c0_83] : memref<64x1152xbf16, #tpu.memory_space<vmem>>, vector<64x128xbf16>
    tpu.vector_store %arg8[%c0_82, %c0_83], %57 {strides = array<i32>} : memref<64x1152xbf16, #tpu.memory_space<vmem>>, vector<64x128xbf16>,
    %c0_84 = arith.constant 0 : index
    %c0_85 = arith.constant 0 : index
    %c1_86 = arith.constant 1 : index
    %c0_87 = arith.constant 0 : index
    %59 = vector.load %arg7[%c0_84, %c0_85, %c1_86, %c0_87] : memref<1x10x10x128xbf16, #tpu.memory_space<vmem>>, vector<1x8x8x128xbf16>
    %60 = vector.shape_cast %59 : vector<1x8x8x128xbf16> to vector<64x128xbf16>
    %c0_88 = arith.constant 0 : index
    %c128_89 = arith.constant 128 : index
    %61 = vector.load %arg8[%c0_88, %c128_89] : memref<64x1152xbf16, #tpu.memory_space<vmem>>, vector<64x128xbf16>
    tpu.vector_store %arg8[%c0_88, %c128_89], %60 {strides = array<i32>} : memref<64x1152xbf16, #tpu.memory_space<vmem>>, vector<64x128xbf16>,
    %c0_90 = arith.constant 0 : index
    %c0_91 = arith.constant 0 : index
    %c2_92 = arith.constant 2 : index
    %c0_93 = arith.constant 0 : index
    %62 = vector.load %arg7[%c0_90, %c0_91, %c2_92, %c0_93] : memref<1x10x10x128xbf16, #tpu.memory_space<vmem>>, vector<1x8x8x128xbf16>
    %63 = vector.shape_cast %62 : vector<1x8x8x128xbf16> to vector<64x128xbf16>
    %c0_94 = arith.constant 0 : index
    %c256_95 = arith.constant 256 : index
    %64 = vector.load %arg8[%c0_94, %c256_95] : memref<64x1152xbf16, #tpu.memory_space<vmem>>, vector<64x128xbf16>
    tpu.vector_store %arg8[%c0_94, %c256_95], %63 {strides = array<i32>} : memref<64x1152xbf16, #tpu.memory_space<vmem>>, vector<64x128xbf16>,
    %c0_96 = arith.constant 0 : index
    %c1_97 = arith.constant 1 : index
    %c0_98 = arith.constant 0 : index
    %c0_99 = arith.constant 0 : index
    %65 = vector.load %arg7[%c0_96, %c1_97, %c0_98, %c0_99] : memref<1x10x10x128xbf16, #tpu.memory_space<vmem>>, vector<1x8x8x128xbf16>
    %66 = vector.shape_cast %65 : vector<1x8x8x128xbf16> to vector<64x128xbf16>
    %c0_100 = arith.constant 0 : index
    %c384_101 = arith.constant 384 : index
    %67 = vector.load %arg8[%c0_100, %c384_101] : memref<64x1152xbf16, #tpu.memory_space<vmem>>, vector<64x128xbf16>
    tpu.vector_store %arg8[%c0_100, %c384_101], %66 {strides = array<i32>} : memref<64x1152xbf16, #tpu.memory_space<vmem>>, vector<64x128xbf16>,
    %c0_102 = arith.constant 0 : index
    %c1_103 = arith.constant 1 : index
    %c1_104 = arith.constant 1 : index
    %c0_105 = arith.constant 0 : index
    %68 = vector.load %arg7[%c0_102, %c1_103, %c1_104, %c0_105] : memref<1x10x10x128xbf16, #tpu.memory_space<vmem>>, vector<1x8x8x128xbf16>
    %69 = vector.shape_cast %68 : vector<1x8x8x128xbf16> to vector<64x128xbf16>
    %c0_106 = arith.constant 0 : index
    %c512_107 = arith.constant 512 : index
    %70 = vector.load %arg8[%c0_106, %c512_107] : memref<64x1152xbf16, #tpu.memory_space<vmem>>, vector<64x128xbf16>
    tpu.vector_store %arg8[%c0_106, %c512_107], %69 {strides = array<i32>} : memref<64x1152xbf16, #tpu.memory_space<vmem>>, vector<64x128xbf16>,
    %c0_108 = arith.constant 0 : index
    %c1_109 = arith.constant 1 : index
    %c2_110 = arith.constant 2 : index
    %c0_111 = arith.constant 0 : index
    %71 = vector.load %arg7[%c0_108, %c1_109, %c2_110, %c0_111] : memref<1x10x10x128xbf16, #tpu.memory_space<vmem>>, vector<1x8x8x128xbf16>
    %72 = vector.shape_cast %71 : vector<1x8x8x128xbf16> to vector<64x128xbf16>
    %c0_112 = arith.constant 0 : index
    %c640_113 = arith.constant 640 : index
    %73 = vector.load %arg8[%c0_112, %c640_113] : memref<64x1152xbf16, #tpu.memory_space<vmem>>, vector<64x128xbf16>
    tpu.vector_store %arg8[%c0_112, %c640_113], %72 {strides = array<i32>} : memref<64x1152xbf16, #tpu.memory_space<vmem>>, vector<64x128xbf16>,
    %c0_114 = arith.constant 0 : index
    %c2_115 = arith.constant 2 : index
    %c0_116 = arith.constant 0 : index
    %c0_117 = arith.constant 0 : index
    %74 = vector.load %arg7[%c0_114, %c2_115, %c0_116, %c0_117] : memref<1x10x10x128xbf16, #tpu.memory_space<vmem>>, vector<1x8x8x128xbf16>
    %75 = vector.shape_cast %74 : vector<1x8x8x128xbf16> to vector<64x128xbf16>
    %c0_118 = arith.constant 0 : index
    %c768_119 = arith.constant 768 : index
    %76 = vector.load %arg8[%c0_118, %c768_119] : memref<64x1152xbf16, #tpu.memory_space<vmem>>, vector<64x128xbf16>
    tpu.vector_store %arg8[%c0_118, %c768_119], %75 {strides = array<i32>} : memref<64x1152xbf16, #tpu.memory_space<vmem>>, vector<64x128xbf16>,
    %c0_120 = arith.constant 0 : index
    %c2_121 = arith.constant 2 : index
    %c1_122 = arith.constant 1 : index
    %c0_123 = arith.constant 0 : index
    %77 = vector.load %arg7[%c0_120, %c2_121, %c1_122, %c0_123] : memref<1x10x10x128xbf16, #tpu.memory_space<vmem>>, vector<1x8x8x128xbf16>
    %78 = vector.shape_cast %77 : vector<1x8x8x128xbf16> to vector<64x128xbf16>
    %c0_124 = arith.constant 0 : index
    %c896_125 = arith.constant 896 : index
    %79 = vector.load %arg8[%c0_124, %c896_125] : memref<64x1152xbf16, #tpu.memory_space<vmem>>, vector<64x128xbf16>
    tpu.vector_store %arg8[%c0_124, %c896_125], %78 {strides = array<i32>} : memref<64x1152xbf16, #tpu.memory_space<vmem>>, vector<64x128xbf16>,
    %c0_126 = arith.constant 0 : index
    %c2_127 = arith.constant 2 : index
    %c2_128 = arith.constant 2 : index
    %c0_129 = arith.constant 0 : index
    %80 = vector.load %arg7[%c0_126, %c2_127, %c2_128, %c0_129] : memref<1x10x10x128xbf16, #tpu.memory_space<vmem>>, vector<1x8x8x128xbf16>
    %81 = vector.shape_cast %80 : vector<1x8x8x128xbf16> to vector<64x128xbf16>
    %c0_130 = arith.constant 0 : index
    %c1024_131 = arith.constant 1024 : index
    %82 = vector.load %arg8[%c0_130, %c1024_131] : memref<64x1152xbf16, #tpu.memory_space<vmem>>, vector<64x128xbf16>
    tpu.vector_store %arg8[%c0_130, %c1024_131], %81 {strides = array<i32>} : memref<64x1152xbf16, #tpu.memory_space<vmem>>, vector<64x128xbf16>,
    %c0_132 = arith.constant 0 : index
    %c0_133 = arith.constant 0 : index
    %83 = vector.load %arg8[%c0_132, %c0_133] : memref<64x1152xbf16, #tpu.memory_space<vmem>>, vector<64x1152xbf16>
    %cst_134 = arith.constant dense<0.000000e+00> : vector<64x128xf32>
    %84 = tpu.matmul %83, %6, %cst_134 {dimension_numbers = #tpu.dot_dimension_numbers<[1], [0], [0], [1], [0, 0, 1, 1], [], []>} : vector<64x1152xbf16>, vector<1152x128xbf16>, vector<64x128xf32> -> vector<64x128xf32>
    %85 = vector.broadcast %12 : vector<1x128xf32> to vector<64x128xf32>
    %86 = arith.mulf %84, %85 : vector<64x128xf32>
    %87 = vector.broadcast %14 : vector<1x128xf32> to vector<64x128xf32>
    %88 = arith.addf %86, %87 : vector<64x128xf32>
    %c0_135 = arith.constant 0 : index
    %c0_136 = arith.constant 0 : index
    %c0_137 = arith.constant 0 : index
    %c0_138 = arith.constant 0 : index
    %89 = vector.load %arg6[%c0_135, %c0_136, %c0_137, %c0_138] : memref<1x8x8x128xf32, #tpu.memory_space<vmem>>, vector<1x8x8x128xf32>
    %90 = vector.shape_cast %89 : vector<1x8x8x128xf32> to vector<64x128xf32>
    %91 = arith.addf %88, %90 : vector<64x128xf32>
    %cst_139 = arith.constant 0.000000e+00 : f32
    %92 = vector.broadcast %cst_139 : f32 to vector<64x128xf32>
    %93 = arith.maximumf %91, %92 : vector<64x128xf32>
    %94 = vector.shape_cast %93 : vector<64x128xf32> to vector<1x8x8x128xf32>
    %c0_140 = arith.constant 0 : index
    %c0_141 = arith.constant 0 : index
    %c0_142 = arith.constant 0 : index
    %c0_143 = arith.constant 0 : index
    %95 = vector.load %arg6[%c0_140, %c0_141, %c0_142, %c0_143] : memref<1x8x8x128xf32, #tpu.memory_space<vmem>>, vector<1x8x8x128xf32>
    tpu.vector_store %arg6[%c0_140, %c0_141, %c0_142, %c0_143], %94 {strides = array<i32>} : memref<1x8x8x128xf32, #tpu.memory_space<vmem>>, vector<1x8x8x128xf32>,
    %c1_i32 = arith.constant 1 : i32
    %96 = arith.cmpi eq, %arg1, %c1_i32 : i32
    %97 = arith.extui %96 : i1 to i32
    %c0_i32_144 = arith.constant 0 : i32
    %98 = arith.cmpi ne, %97, %c0_i32_144 : i32
    scf.if %98 {
      %c0_145 = arith.constant 0 : index
      %c0_146 = arith.constant 0 : index
      %c0_147 = arith.constant 0 : index
      %c0_148 = arith.constant 0 : index
      %99 = vector.load %arg6[%c0_145, %c0_146, %c0_147, %c0_148] : memref<1x8x8x128xf32, #tpu.memory_space<vmem>>, vector<1x8x8x128xf32>
      %c0_149 = arith.constant 0 : index
      %c0_150 = arith.constant 0 : index
      %c0_151 = arith.constant 0 : index
      %c0_152 = arith.constant 0 : index
      %100 = vector.load %arg5[%c0_149, %c0_150, %c0_151, %c0_152] : memref<1x8x8x128xf32, #tpu.memory_space<vmem>>, vector<1x8x8x128xf32>
      tpu.vector_store %arg5[%c0_149, %c0_150, %c0_151, %c0_152], %99 {strides = array<i32>} : memref<1x8x8x128xf32, #tpu.memory_space<vmem>>, vector<1x8x8x128xf32>,
    } else {
    }
    return
  }
  func.func @transform_0(%arg0: i32, %arg1: i32) -> (i32, i32, i32, i32) {
    %c0_i32 = arith.constant 0 : i32
    %c0_i32_0 = arith.constant 0 : i32
    %c0_i32_1 = arith.constant 0 : i32
    %c0_i32_2 = arith.constant 0 : i32
    return %arg0, %c0_i32, %c0_i32_0, %c0_i32_1 : i32, i32, i32, i32
  }
  func.func @transform_1(%arg0: i32, %arg1: i32) -> (i32, i32, i32, i32) {
    %c0_i32 = arith.constant 0 : i32
    %c0_i32_0 = arith.constant 0 : i32
    %c0_i32_1 = arith.constant 0 : i32
    %c0_i32_2 = arith.constant 0 : i32
    return %arg1, %c0_i32, %c0_i32_0, %c0_i32_1 : i32, i32, i32, i32
  }
  func.func @transform_2(%arg0: i32, %arg1: i32) -> (i32, i32, i32) {
    %c0_i32 = arith.constant 0 : i32
    %c0_i32_0 = arith.constant 0 : i32
    %c0_i32_1 = arith.constant 0 : i32
    return %arg1, %c0_i32, %c0_i32_0 : i32, i32, i32
  }
  func.func @transform_3(%arg0: i32, %arg1: i32) -> (i32, i32, i32, i32) {
    %c0_i32 = arith.constant 0 : i32
    %c0_i32_0 = arith.constant 0 : i32
    %c0_i32_1 = arith.constant 0 : i32
    %c0_i32_2 = arith.constant 0 : i32
    return %arg0, %c0_i32, %c0_i32_0, %c0_i32_1 : i32, i32, i32, i32
  }
}

</mosaic_0001>

<llo_original>
// kernel: tpu_custom_call.1
$region0: #{tpu_custom_call.1}
  #allocation0 [shape = 'u32[]', space=smem, size = 0x4, offset = 0x4, fixed_abs, tag = 'smem constant byte address 0x4 - core index']
  #allocation1 [shape = 'u32[72,128]{1,0:T(1,128)}', space=vmem, size = 0x9000, scoped, tag = 'internal scratch']
  #allocation2 [shape = 'f32[1,8,8,128]{3,2,1,0:T(8,128)}', space=vmem, size = 0x8000, scoped, tag = 'scratch operand']
  #allocation3 [shape = 'bf16[1,10,10,128]{3,2,1,0:T(8,128)(2,1)}', space=vmem, size = 0xa000, scoped, tag = 'scratch operand']
  #allocation4 [shape = 'bf16[64,1152]{1,0:T(8,128)(2,1)}', space=vmem, size = 0x24000, scoped, tag = 'scratch operand']
  %s0 = inlined_call_operand.hbm [shape: f32[2,8,8,128], index: 0, kind: input, shape index: {}]
  %s1 = inlined_call_operand.hbm [shape: bf16[2,2,1152,128], index: 1, kind: input, shape index: {}]
  %s2 = inlined_call_operand.hbm [shape: f32[2,4,128], index: 2, kind: input, shape index: {}]
  %s3 = inlined_call_operand.hbm [shape: f32[2,8,8,128], index: 3, kind: output, shape index: {}]
  %s4 = sld [smem:[#allocation0]]
  $region65: #{tpu_custom_call.1} parent=0
    _
  %s6 = ssub.s32 1, %s4
  %s7 = scalar_select 0, %s6, %s4
  $region1: #{tpu_custom_call.1} parent=0
    #allocation5 [shape = 'u8[65536]{0}', space=vmem, size = 0x10000, scoped, tag = 'input window, operand 0']
    #allocation6 [shape = 's32[2]{0}', space=sflag, size = 0x8, scoped, tag = 'scoped memory for tpu_custom_call.1']
    #allocation7 [shape = 's32[2]{0}', space=sflag, size = 0x8, scoped, tag = 'scoped memory for tpu_custom_call.1']
    #allocation8 [shape = 'u8[1179648]{0}', space=vmem, size = 0x120000, scoped, tag = 'input window, operand 1']
    #allocation9 [shape = 's32[2]{0}', space=sflag, size = 0x8, scoped, tag = 'scoped memory for tpu_custom_call.1']
    #allocation10 [shape = 'u8[4096]{0}', space=vmem, size = 0x1000, scoped, tag = 'input window, operand 2']
    #allocation11 [shape = 'u8[65536]{0}', space=vmem, size = 0x10000, scoped, tag = 'output window, operand 0']
    %8 = vsyncpa [#allocation6], 0
    %s9 = scalar_lea.sflag [#allocation6], 1
    %10 = vsyncpa %s9, 0
    %11 = vsyncpa [#allocation9], 0
    %s12 = scalar_lea.sflag [#allocation9], 1
    %13 = vsyncpa %s12, 0
    %14 = vsyncpa [#allocation7], 0
    %s15 = scalar_lea.sflag [#allocation7], 1
    %16 = vsyncpa %s15, 0
    loop: start=0, step=1, limit=6
    $region2: #{tpu_custom_call.1} parent=1 // loop_pre_header
      _
    $region3: #{tpu_custom_call.1} parent=1 // loop_header
      %s18 = sphi 0, %s22
      %p19 = scmp.ge.s32.totalorder %s18, 6
      %s25 = sphi 0, %s37
      %s26 = sphi 0, %s33
      %s27 = sphi 0, %s25
      %s28 = sphi 0, %s26
      %s29 = sphi 0, %s27
      %s30 = sphi 0, %s28
      %s40 = sphi 0, %s42
      %s43 = sphi 0, %s40
      %s44 = sphi 0, %s43
      %s60 = sphi 0, %s44
      %s66 = sphi 0, %s68
      %s69 = sphi 0, %s66
      %s70 = sphi 0, %s69
      %s86 = sphi 0, %s70
      %s92 = sphi 0, %s94
      %s95 = sphi 0, %s92
      %s96 = sphi 0, %s95
      %s112 = sphi 0, %s96
      %s118 = sphi 0, %s120
      %s121 = sphi 0, %s118
      %s122 = sphi 0, %s121
      %s138 = sphi 0, %s122
    $region4: #{tpu_custom_call.1} parent=1 // loop_header_branch
      %21 = sbr.rel (%p19) target = $region8
    $region5: #{tpu_custom_call.1} parent=1 // loop_body
      %s23 = ssub.s32 %s18, 1
      %s24 = ssub.s32 %s18, 2
      %s31 = sadd.s32 1, %s26
      %p32 = scmp.ge.s32.totalorder %s31, 2
      %s33 = scalar_select %p32, 0, %s31
      %s34 = sadd.s32 1, %s25
      %s35 = scalar_select %p32, %s34, %s25
      %p36 = scmp.ge.s32.totalorder %s35, 2
      %s37 = scalar_select %p36, 0, %s35
      %s38 = ssub.s32 %s25, %s37
      %p39 = scmp.eq.s32.totalorder %s38, 0
      %s41 = sadd.s32 %s40, 1
      %s42 = scalar_select %p39, %s40, %s41
      %p45 = pneg %p39
      %p46 = scmp.eq.s32.totalorder %s18, 3
      %p47 = por %p45, %p46
      %p48 = scmp.ne.s32.totalorder %s40, %s43
      %p49 = scmp.eq.s32.totalorder %s18, 0
      %p50 = por %p48, %p49
      %p51 = scmp.ne.s32.totalorder %s40, %s43
      %p52 = scmp.eq.s32.totalorder %s23, 3
      %p53 = por %p51, %p52
      %p54 = scmp.ne.s32.totalorder %s43, %s44
      %p55 = scmp.eq.s32.totalorder %s23, 0
      %p56 = por %p54, %p55
      %p57 = scmp.ne.s32.totalorder %s43, %s44
      %p58 = scmp.eq.s32.totalorder %s24, 3
      %p59 = por %p57, %p58
      %p61 = scmp.ne.s32.totalorder %s44, %s60
      %p62 = scmp.eq.s32.totalorder %s24, 0
      %p63 = por %p61, %p62
      %s64 = ssub.s32 %s26, %s33
      %p65 = scmp.eq.s32.totalorder %s64, 0
      %s67 = sadd.s32 %s66, 1
      %s68 = scalar_select %p65, %s66, %s67
      %p71 = pneg %p65
      %p72 = scmp.eq.s32.totalorder %s18, 3
      %p73 = por %p71, %p72
      %p74 = scmp.ne.s32.totalorder %s66, %s69
      %p75 = scmp.eq.s32.totalorder %s18, 0
      %p76 = por %p74, %p75
      %p77 = scmp.ne.s32.totalorder %s66, %s69
      %p78 = scmp.eq.s32.totalorder %s23, 3
      %p79 = por %p77, %p78
      %p80 = scmp.ne.s32.totalorder %s69, %s70
      %p81 = scmp.eq.s32.totalorder %s23, 0
      %p82 = por %p80, %p81
      %p83 = scmp.ne.s32.totalorder %s69, %s70
      %p84 = scmp.eq.s32.totalorder %s24, 3
      %p85 = por %p83, %p84
      %p87 = scmp.ne.s32.totalorder %s70, %s86
      %p88 = scmp.eq.s32.totalorder %s24, 0
      %p89 = por %p87, %p88
      %s90 = ssub.s32 %s26, %s33
      %p91 = scmp.eq.s32.totalorder %s90, 0
      %s93 = sadd.s32 %s92, 1
      %s94 = scalar_select %p91, %s92, %s93
      %p97 = pneg %p91
      %p98 = scmp.eq.s32.totalorder %s18, 3
      %p99 = por %p97, %p98
      %p100 = scmp.ne.s32.totalorder %s92, %s95
      %p101 = scmp.eq.s32.totalorder %s18, 0
      %p102 = por %p100, %p101
      %p103 = scmp.ne.s32.totalorder %s92, %s95
      %p104 = scmp.eq.s32.totalorder %s23, 3
      %p105 = por %p103, %p104
      %p106 = scmp.ne.s32.totalorder %s95, %s96
      %p107 = scmp.eq.s32.totalorder %s23, 0
      %p108 = por %p106, %p107
      %p109 = scmp.ne.s32.totalorder %s95, %s96
      %p110 = scmp.eq.s32.totalorder %s24, 3
      %p111 = por %p109, %p110
      %p113 = scmp.ne.s32.totalorder %s96, %s112
      %p114 = scmp.eq.s32.totalorder %s24, 0
      %p115 = por %p113, %p114
      %s116 = ssub.s32 %s25, %s37
      %p117 = scmp.eq.s32.totalorder %s116, 0
      %s119 = sadd.s32 %s118, 1
      %s120 = scalar_select %p117, %s118, %s119
      %p123 = pneg %p117
      %p124 = scmp.eq.s32.totalorder %s18, 3
      %p125 = por %p123, %p124
      %p126 = scmp.ne.s32.totalorder %s118, %s121
      %p127 = scmp.eq.s32.totalorder %s18, 0
      %p128 = por %p126, %p127
      %p129 = scmp.ne.s32.totalorder %s118, %s121
      %p130 = scmp.eq.s32.totalorder %s23, 3
      %p131 = por %p129, %p130
      %p132 = scmp.ne.s32.totalorder %s121, %s122
      %p133 = scmp.eq.s32.totalorder %s23, 0
      %p134 = por %p132, %p133
      %p135 = scmp.ne.s32.totalorder %s121, %s122
      %p136 = scmp.eq.s32.totalorder %s24, 3
      %p137 = por %p135, %p136
      %p139 = scmp.ne.s32.totalorder %s122, %s138
      %p140 = scmp.eq.s32.totalorder %s24, 0
      %p141 = por %p139, %p140
      %p142 = scmp.le.s32.totalorder 1, %s18
      %p143 = scmp.lt.s32.totalorder %s18, 5
      %p144 = pnand %p142, %p143
      %p145 = pneg %p144
      // Predicated region
      $region9: #{tpu_custom_call.1} parent=5 // pred_check
        _
      $region10: #{tpu_custom_call.1} parent=5 // pred_check_branch
        %147 = sbr.rel (%p144) target = $region12
      $region11: #{tpu_custom_call.1} parent=5 // pred_region
        %s148 = ssub.s32 %s18, 1
      $region12: #{tpu_custom_call.1} parent=5 // pred_fallthru
        _
      %p149 = scmp.lt.s32.totalorder %s18, 4
      // Predicated region
      $region13: #{tpu_custom_call.1} parent=5 // pred_check
        %p150 = pneg %p149
      $region14: #{tpu_custom_call.1} parent=5 // pred_check_branch
        %152 = sbr.rel (%p150) target = $region16
      $region15: #{tpu_custom_call.1} parent=5 // pred_region
        // Predicated region
        $region17: #{tpu_custom_call.1} parent=15 // pred_check
          %p153 = pneg %p50
        $region18: #{tpu_custom_call.1} parent=15 // pred_check_branch
          %155 = sbr.rel (%p153) target = $region20
        $region19: #{tpu_custom_call.1} parent=15 // pred_region
          %s156 = sand.u32 %s40, 1
          %s157 = scalar_lea.sflag [#allocation6], %s156
          %s158 = sand.u32 %s40, 1
          %s159 = smul.addr %s158, 64
          %s160 = scalar_lea.vmem [#allocation5], %s159
          %162 = vsyncadd %s157, 0
          %s163 = smul.addr %s25, 8
          %s164 = smul.addr %s163, 8
          %s165 = scalar_lea.hbm %s0, %s164
          %s166 = sshll.u32 %s165, 4
          %s167 = int_to_ptr.hbm [resolvable:$true] %s166
          %s168 = sshll.u32 %s160, 4
          %s169 = int_to_ptr.vmem [resolvable:$true] %s168
          %174 = dma.hbm_to_vmem [thread:$0]  %s167, 1024, %s169, %s157, 128, 128, 8
        $region20: #{tpu_custom_call.1} parent=15 // pred_fallthru
          _
        // Predicated region
        $region21: #{tpu_custom_call.1} parent=15 // pred_check
          %p175 = pneg %p76
        $region22: #{tpu_custom_call.1} parent=15 // pred_check_branch
          %177 = sbr.rel (%p175) target = $region24
        $region23: #{tpu_custom_call.1} parent=15 // pred_region
          %s178 = sand.u32 %s18, 1
          %s179 = scalar_lea.sflag [#allocation9], %s178
          %s180 = sand.u32 %s66, 1
          %s181 = smul.addr %s180, 1152
          %s182 = scalar_lea.vmem [#allocation8], %s181
          %184 = vsyncadd %s179, 0
          %s185 = smul.addr %s26, 288
          %s186 = smul.addr %s185, 4
          %s187 = scalar_lea.hbm %s1, %s186
          %s188 = sshll.u32 %s187, 4
          %s189 = int_to_ptr.hbm [resolvable:$true] %s188
          %s190 = sshll.u32 %s182, 4
          %s191 = int_to_ptr.vmem [resolvable:$true] %s190
          %196 = dma.hbm_to_vmem [thread:$0]  %s189, 18432, %s191, %s179, 64, 64, 4
        $region24: #{tpu_custom_call.1} parent=15 // pred_fallthru
          _
        // Predicated region
        $region25: #{tpu_custom_call.1} parent=15 // pred_check
          %p197 = pneg %p102
        $region26: #{tpu_custom_call.1} parent=15 // pred_check_branch
          %199 = sbr.rel (%p197) target = $region28
        $region27: #{tpu_custom_call.1} parent=15 // pred_region
          %s200 = sand.u32 %s18, 1
          %s201 = scalar_lea.sflag [#allocation9], %s200
          %s202 = sand.u32 %s92, 1
          %s203 = smul.addr %s202, 4
          %s204 = scalar_lea.vmem [#allocation10], %s203
          %206 = vsyncadd %s201, 0
          %s207 = smul.addr %s26, 4
          %s208 = scalar_lea.hbm %s2, %s207
          %s210 = sshll.u32 %s208, 4
          %s211 = int_to_ptr.hbm [resolvable:$true] %s210
          %s212 = sshll.u32 %s204, 4
          %s213 = int_to_ptr.vmem [resolvable:$true] %s212
          %215 = dma.hbm_to_vmem [thread:$0]  %s211, 64, %s213, %s201
        $region28: #{tpu_custom_call.1} parent=15 // pred_fallthru
          _
      $region16: #{tpu_custom_call.1} parent=5 // pred_fallthru
        _
      %p216 = scmp.le.s32.totalorder 1, %s18
      %p217 = scmp.lt.s32.totalorder %s18, 5
      %p218 = pnand %p216, %p217
      %p219 = pneg %p218
      // Predicated region
      $region29: #{tpu_custom_call.1} parent=5 // pred_check
        _
      $region30: #{tpu_custom_call.1} parent=5 // pred_check_branch
        %221 = sbr.rel (%p218) target = $region32
      $region31: #{tpu_custom_call.1} parent=5 // pred_region
        %s222 = ssub.s32 %s18, 1
        %s223 = sand.u32 %s43, 1
        %s224 = scalar_lea.sflag [#allocation6], %s223
        %s225 = sand.u32 %s43, 1
        %s226 = smul.addr %s225, 64
        %s227 = scalar_lea.vmem [#allocation5], %s226
        // Predicated region
        $region33: #{tpu_custom_call.1} parent=31 // pred_check
          %p228 = pneg %p56
        $region34: #{tpu_custom_call.1} parent=31 // pred_check_branch
          %230 = sbr.rel (%p228) target = $region36
        $region35: #{tpu_custom_call.1} parent=31 // pred_region
          %232 = dma.done %s224, 1024
        $region36: #{tpu_custom_call.1} parent=31 // pred_fallthru
          _
        %s233 = sand.u32 %s23, 1
        %s234 = scalar_lea.sflag [#allocation9], %s233
        %s235 = sand.u32 %s69, 1
        %s236 = smul.addr %s235, 1152
        %s237 = scalar_lea.vmem [#allocation8], %s236
        // Predicated region
        $region37: #{tpu_custom_call.1} parent=31 // pred_check
          %p238 = pneg %p82
        $region38: #{tpu_custom_call.1} parent=31 // pred_check_branch
          %240 = sbr.rel (%p238) target = $region40
        $region39: #{tpu_custom_call.1} parent=31 // pred_region
          %242 = dma.done %s234, 18432
        $region40: #{tpu_custom_call.1} parent=31 // pred_fallthru
          _
        %s243 = sand.u32 %s23, 1
        %s244 = scalar_lea.sflag [#allocation9], %s243
        %s245 = sand.u32 %s95, 1
        %s246 = smul.addr %s245, 4
        %s247 = scalar_lea.vmem [#allocation10], %s246
        // Predicated region
        $region41: #{tpu_custom_call.1} parent=31 // pred_check
          %p248 = pneg %p108
        $region42: #{tpu_custom_call.1} parent=31 // pred_check_branch
          %250 = sbr.rel (%p248) target = $region44
        $region43: #{tpu_custom_call.1} parent=31 // pred_region
          %252 = dma.done %s244, 64
        $region44: #{tpu_custom_call.1} parent=31 // pred_fallthru
          _
        %s253 = sand.u32 %s43, 1
        %s254 = scalar_lea.sflag [#allocation6], %s253
        %s255 = sand.u32 %s43, 1
        %s256 = smul.addr %s255, 64
        %s257 = scalar_lea.vmem [#allocation5], %s256
        %p258 = pneg %p56
        %p259 = pneg %p53
        %s260 = sand.u32 %s23, 1
        %s261 = scalar_lea.sflag [#allocation9], %s260
        %s262 = sand.u32 %s69, 1
        %s263 = smul.addr %s262, 1152
        %s264 = scalar_lea.vmem [#allocation8], %s263
        %p265 = pneg %p82
        %p266 = pneg %p79
        %s267 = sand.u32 %s23, 1
        %s268 = scalar_lea.sflag [#allocation9], %s267
        %s269 = sand.u32 %s95, 1
        %s270 = smul.addr %s269, 4
        %s271 = scalar_lea.vmem [#allocation10], %s270
        %p272 = pneg %p108
        %p273 = pneg %p105
        %p274 = pneg %p134
        %p275 = pneg %p131
        %s276 = sand.u32 %s121, 1
        %s277 = scalar_lea.sflag [#allocation7], %s276
        %s278 = sand.u32 %s121, 1
        %s279 = smul.addr %s278, 64
        %s280 = scalar_lea.vmem [#allocation11], %s279
        %p282 = scmp.eq.s32.totalorder %s28, 0
        // Predicated region
        $region45: #{tpu_custom_call.1} parent=31 // pred_check
          %p283 = pneg %p282
        $region46: #{tpu_custom_call.1} parent=31 // pred_check_branch
          %285 = sbr.rel (%p283) target = $region48
        $region47: #{tpu_custom_call.1} parent=31 // pred_region
          %v286 = vld [vmem:[%s227] sm:$0xff]
          %v287 = vld [vmem:[%s227 + $0x8] sm:$0xff]
          %v288 = vld [vmem:[%s227 + $0x10] sm:$0xff]
          %v289 = vld [vmem:[%s227 + $0x18] sm:$0xff]
          %v290 = vld [vmem:[%s227 + $0x20] sm:$0xff]
          %v291 = vld [vmem:[%s227 + $0x28] sm:$0xff]
          %v292 = vld [vmem:[%s227 + $0x30] sm:$0xff]
          %v293 = vld [vmem:[%s227 + $0x38] sm:$0xff]
          %294 = vst [vmem:[#allocation2] sm:$0xff] %v286
          %295 = vst [vmem:[#allocation2 + $0x8] sm:$0xff] %v287
          %296 = vst [vmem:[#allocation2 + $0x10] sm:$0xff] %v288
          %297 = vst [vmem:[#allocation2 + $0x18] sm:$0xff] %v289
          %298 = vst [vmem:[#allocation2 + $0x20] sm:$0xff] %v290
          %299 = vst [vmem:[#allocation2 + $0x28] sm:$0xff] %v291
          %300 = vst [vmem:[#allocation2 + $0x30] sm:$0xff] %v292
          %301 = vst [vmem:[#allocation2 + $0x38] sm:$0xff] %v293
          %302 = vst [vmem:[#allocation3] sm:$0xf] 0
          %303 = vst [vmem:[#allocation3 + $0x4] sm:$0x1] 0
          %s304 = scalar_lea.vmem [#allocation3], 72
          %305 = vst [vmem:[%s304] sm:$0xf] 0
          %306 = vst [vmem:[%s304 + $0x4] sm:$0x1] 0
          %s307 = scalar_lea.vmem [#allocation3], 8
          %vm308 = vcmask 1040384
          %vm309 = vsmask.f32 256
          %vm310 = vmand %vm308, %vm309
          %v311 = vld [vmem:[%s307] sm:$0x1]
          %v312 = vsel %vm310, 0, %v311
          %313 = vst [vmem:[%s307] sm:$0x1] %v312
          %v314 = vld [vmem:[%s307 + $0x8] sm:$0x1]
          %v315 = vsel %vm310, 0, %v314
          %316 = vst [vmem:[%s307 + $0x8] sm:$0x1] %v315
          %v317 = vld [vmem:[%s307 + $0x10] sm:$0x1]
          %v318 = vsel %vm310, 0, %v317
          %319 = vst [vmem:[%s307 + $0x10] sm:$0x1] %v318
          %v320 = vld [vmem:[%s307 + $0x18] sm:$0x1]
          %v321 = vsel %vm310, 0, %v320
          %322 = vst [vmem:[%s307 + $0x18] sm:$0x1] %v321
          %v323 = vld [vmem:[%s307 + $0x20] sm:$0x1]
          %v324 = vsel %vm310, 0, %v323
          %325 = vst [vmem:[%s307 + $0x20] sm:$0x1] %v324
          %v326 = vld [vmem:[%s307 + $0x28] sm:$0x1]
          %v327 = vsel %vm310, 0, %v326
          %328 = vst [vmem:[%s307 + $0x28] sm:$0x1] %v327
          %v329 = vld [vmem:[%s307 + $0x30] sm:$0x1]
          %v330 = vsel %vm310, 0, %v329
          %331 = vst [vmem:[%s307 + $0x30] sm:$0x1] %v330
          %v332 = vld [vmem:[%s307 + $0x38] sm:$0x1]
          %v333 = vsel %vm310, 0, %v332
          %334 = vst [vmem:[%s307 + $0x38] sm:$0x1] %v333
          %vm335 = vsmask.f32 7938
          %vm336 = vmand %vm308, %vm335
          %v337 = vld [vmem:[%s307 + $0x4] sm:$0x1]
          %v338 = vsel %vm336, 0, %v337
          %339 = vst [vmem:[%s307 + $0x4] sm:$0x1] %v338
          %v340 = vld [vmem:[%s307 + $0xc] sm:$0x1]
          %v341 = vsel %vm336, 0, %v340
          %342 = vst [vmem:[%s307 + $0xc] sm:$0x1] %v341
          %v343 = vld [vmem:[%s307 + $0x14] sm:$0x1]
          %v344 = vsel %vm336, 0, %v343
          %345 = vst [vmem:[%s307 + $0x14] sm:$0x1] %v344
          %v346 = vld [vmem:[%s307 + $0x1c] sm:$0x1]
          %v347 = vsel %vm336, 0, %v346
          %348 = vst [vmem:[%s307 + $0x1c] sm:$0x1] %v347
          %v349 = vld [vmem:[%s307 + $0x24] sm:$0x1]
          %v350 = vsel %vm336, 0, %v349
          %351 = vst [vmem:[%s307 + $0x24] sm:$0x1] %v350
          %v352 = vld [vmem:[%s307 + $0x2c] sm:$0x1]
          %v353 = vsel %vm336, 0, %v352
          %354 = vst [vmem:[%s307 + $0x2c] sm:$0x1] %v353
          %v355 = vld [vmem:[%s307 + $0x34] sm:$0x1]
          %v356 = vsel %vm336, 0, %v355
          %357 = vst [vmem:[%s307 + $0x34] sm:$0x1] %v356
          %v358 = vld [vmem:[%s307 + $0x3c] sm:$0x1]
          %v359 = vsel %vm336, 0, %v358
          %360 = vst [vmem:[%s307 + $0x3c] sm:$0x1] %v359
        $region48: #{tpu_custom_call.1} parent=31 // pred_fallthru
          _
        %v361 = vld [vmem:[%s237] sm:$0xf]
        %v362 = vld [vmem:[%s237 + $0x4] sm:$0xf]
        %v363 = vld [vmem:[%s237 + $0x8] sm:$0xf]
        %v364 = vld [vmem:[%s237 + $0xc] sm:$0xf]
        %v365 = vld [vmem:[%s237 + $0x10] sm:$0xf]
        %v366 = vld [vmem:[%s237 + $0x14] sm:$0xf]
        %v367 = vld [vmem:[%s237 + $0x18] sm:$0xf]
        %v368 = vld [vmem:[%s237 + $0x1c] sm:$0xf]
        %v369 = vld [vmem:[%s237 + $0x20] sm:$0xf]
        %v370 = vld [vmem:[%s237 + $0x24] sm:$0xf]
        %v371 = vld [vmem:[%s237 + $0x28] sm:$0xf]
        %v372 = vld [vmem:[%s237 + $0x2c] sm:$0xf]
        %v373 = vld [vmem:[%s237 + $0x30] sm:$0xf]
        %v374 = vld [vmem:[%s237 + $0x34] sm:$0xf]
        %v375 = vld [vmem:[%s237 + $0x38] sm:$0xf]
        %v376 = vld [vmem:[%s237 + $0x3c] sm:$0xf]
        %v377 = vld [vmem:[%s237 + $0x40] sm:$0xf]
        %v378 = vld [vmem:[%s237 + $0x44] sm:$0xf]
        %v379 = vld [vmem:[%s237 + $0x48] sm:$0xf]
        %v380 = vld [vmem:[%s237 + $0x4c] sm:$0xf]
        %v381 = vld [vmem:[%s237 + $0x50] sm:$0xf]
        %v382 = vld [vmem:[%s237 + $0x54] sm:$0xf]
        %v383 = vld [vmem:[%s237 + $0x58] sm:$0xf]
        %v384 = vld [vmem:[%s237 + $0x5c] sm:$0xf]
        %v385 = vld [vmem:[%s237 + $0x60] sm:$0xf]
        %v386 = vld [vmem:[%s237 + $0x64] sm:$0xf]
        %v387 = vld [vmem:[%s237 + $0x68] sm:$0xf]
        %v388 = vld [vmem:[%s237 + $0x6c] sm:$0xf]
        %v389 = vld [vmem:[%s237 + $0x70] sm:$0xf]
        %v390 = vld [vmem:[%s237 + $0x74] sm:$0xf]
        %v391 = vld [vmem:[%s237 + $0x78] sm:$0xf]
        %v392 = vld [vmem:[%s237 + $0x7c] sm:$0xf]
        %v393 = vld [vmem:[%s237 + $0x80] sm:$0xf]
        %v394 = vld [vmem:[%s237 + $0x84] sm:$0xf]
        %v395 = vld [vmem:[%s237 + $0x88] sm:$0xf]
        %v396 = vld [vmem:[%s237 + $0x8c] sm:$0xf]
        %v397 = vld [vmem:[%s237 + $0x90] sm:$0xf]
        %v398 = vld [vmem:[%s237 + $0x94] sm:$0xf]
        %v399 = vld [vmem:[%s237 + $0x98] sm:$0xf]
        %v400 = vld [vmem:[%s237 + $0x9c] sm:$0xf]
        %v401 = vld [vmem:[%s237 + $0xa0] sm:$0xf]
        %v402 = vld [vmem:[%s237 + $0xa4] sm:$0xf]
        %v403 = vld [vmem:[%s237 + $0xa8] sm:$0xf]
        %v404 = vld [vmem:[%s237 + $0xac] sm:$0xf]
        %v405 = vld [vmem:[%s237 + $0xb0] sm:$0xf]
        %v406 = vld [vmem:[%s237 + $0xb4] sm:$0xf]
        %v407 = vld [vmem:[%s237 + $0xb8] sm:$0xf]
        %v408 = vld [vmem:[%s237 + $0xbc] sm:$0xf]
        %v409 = vld [vmem:[%s237 + $0xc0] sm:$0xf]
        %v410 = vld [vmem:[%s237 + $0xc4] sm:$0xf]
        %v411 = vld [vmem:[%s237 + $0xc8] sm:$0xf]
        %v412 = vld [vmem:[%s237 + $0xcc] sm:$0xf]
        %v413 = vld [vmem:[%s237 + $0xd0] sm:$0xf]
        %v414 = vld [vmem:[%s237 + $0xd4] sm:$0xf]
        %v415 = vld [vmem:[%s237 + $0xd8] sm:$0xf]
        %v416 = vld [vmem:[%s237 + $0xdc] sm:$0xf]
        %v417 = vld [vmem:[%s237 + $0xe0] sm:$0xf]
        %v418 = vld [vmem:[%s237 + $0xe4] sm:$0xf]
        %v419 = vld [vmem:[%s237 + $0xe8] sm:$0xf]
        %v420 = vld [vmem:[%s237 + $0xec] sm:$0xf]
        %v421 = vld [vmem:[%s237 + $0xf0] sm:$0xf]
        %v422 = vld [vmem:[%s237 + $0xf4] sm:$0xf]
        %v423 = vld [vmem:[%s237 + $0xf8] sm:$0xf]
        %v424 = vld [vmem:[%s237 + $0xfc] sm:$0xf]
        %v425 = vld [vmem:[%s237 + $0x100] sm:$0xf]
        %v426 = vld [vmem:[%s237 + $0x104] sm:$0xf]
        %v427 = vld [vmem:[%s237 + $0x108] sm:$0xf]
        %v428 = vld [vmem:[%s237 + $0x10c] sm:$0xf]
        %v429 = vld [vmem:[%s237 + $0x110] sm:$0xf]
        %v430 = vld [vmem:[%s237 + $0x114] sm:$0xf]
        %v431 = vld [vmem:[%s237 + $0x118] sm:$0xf]
        %v432 = vld [vmem:[%s237 + $0x11c] sm:$0xf]
        %v433 = vld [vmem:[%s237 + $0x120] sm:$0xf]
        %v434 = vld [vmem:[%s237 + $0x124] sm:$0xf]
        %v435 = vld [vmem:[%s237 + $0x128] sm:$0xf]
        %v436 = vld [vmem:[%s237 + $0x12c] sm:$0xf]
        %v437 = vld [vmem:[%s237 + $0x130] sm:$0xf]
        %v438 = vld [vmem:[%s237 + $0x134] sm:$0xf]
        %v439 = vld [vmem:[%s237 + $0x138] sm:$0xf]
        %v440 = vld [vmem:[%s237 + $0x13c] sm:$0xf]
        %v441 = vld [vmem:[%s237 + $0x140] sm:$0xf]
        %v442 = vld [vmem:[%s237 + $0x144] sm:$0xf]
        %v443 = vld [vmem:[%s237 + $0x148] sm:$0xf]
        %v444 = vld [vmem:[%s237 + $0x14c] sm:$0xf]
        %v445 = vld [vmem:[%s237 + $0x150] sm:$0xf]
        %v446 = vld [vmem:[%s237 + $0x154] sm:$0xf]
        %v447 = vld [vmem:[%s237 + $0x158] sm:$0xf]
        %v448 = vld [vmem:[%s237 + $0x15c] sm:$0xf]
        %v449 = vld [vmem:[%s237 + $0x160] sm:$0xf]
        %v450 = vld [vmem:[%s237 + $0x164] sm:$0xf]
        %v451 = vld [vmem:[%s237 + $0x168] sm:$0xf]
        %v452 = vld [vmem:[%s237 + $0x16c] sm:$0xf]
        %v453 = vld [vmem:[%s237 + $0x170] sm:$0xf]
        %v454 = vld [vmem:[%s237 + $0x174] sm:$0xf]
        %v455 = vld [vmem:[%s237 + $0x178] sm:$0xf]
        %v456 = vld [vmem:[%s237 + $0x17c] sm:$0xf]
        %v457 = vld [vmem:[%s237 + $0x180] sm:$0xf]
        %v458 = vld [vmem:[%s237 + $0x184] sm:$0xf]
        %v459 = vld [vmem:[%s237 + $0x188] sm:$0xf]
        %v460 = vld [vmem:[%s237 + $0x18c] sm:$0xf]
        %v461 = vld [vmem:[%s237 + $0x190] sm:$0xf]
        %v462 = vld [vmem:[%s237 + $0x194] sm:$0xf]
        %v463 = vld [vmem:[%s237 + $0x198] sm:$0xf]
        %v464 = vld [vmem:[%s237 + $0x19c] sm:$0xf]
        %v465 = vld [vmem:[%s237 + $0x1a0] sm:$0xf]
        %v466 = vld [vmem:[%s237 + $0x1a4] sm:$0xf]
        %v467 = vld [vmem:[%s237 + $0x1a8] sm:$0xf]
        %v468 = vld [vmem:[%s237 + $0x1ac] sm:$0xf]
        %v469 = vld [vmem:[%s237 + $0x1b0] sm:$0xf]
        %v470 = vld [vmem:[%s237 + $0x1b4] sm:$0xf]
        %v471 = vld [vmem:[%s237 + $0x1b8] sm:$0xf]
        %v472 = vld [vmem:[%s237 + $0x1bc] sm:$0xf]
        %v473 = vld [vmem:[%s237 + $0x1c0] sm:$0xf]
        %v474 = vld [vmem:[%s237 + $0x1c4] sm:$0xf]
        %v475 = vld [vmem:[%s237 + $0x1c8] sm:$0xf]
        %v476 = vld [vmem:[%s237 + $0x1cc] sm:$0xf]
        %v477 = vld [vmem:[%s237 + $0x1d0] sm:$0xf]
        %v478 = vld [vmem:[%s237 + $0x1d4] sm:$0xf]
        %v479 = vld [vmem:[%s237 + $0x1d8] sm:$0xf]
        %v480 = vld [vmem:[%s237 + $0x1dc] sm:$0xf]
        %v481 = vld [vmem:[%s237 + $0x1e0] sm:$0xf]
        %v482 = vld [vmem:[%s237 + $0x1e4] sm:$0xf]
        %v483 = vld [vmem:[%s237 + $0x1e8] sm:$0xf]
        %v484 = vld [vmem:[%s237 + $0x1ec] sm:$0xf]
        %v485 = vld [vmem:[%s237 + $0x1f0] sm:$0xf]
        %v486 = vld [vmem:[%s237 + $0x1f4] sm:$0xf]
        %v487 = vld [vmem:[%s237 + $0x1f8] sm:$0xf]
        %v488 = vld [vmem:[%s237 + $0x1fc] sm:$0xf]
        %v489 = vld [vmem:[%s237 + $0x200] sm:$0xf]
        %v490 = vld [vmem:[%s237 + $0x204] sm:$0xf]
        %v491 = vld [vmem:[%s237 + $0x208] sm:$0xf]
        %v492 = vld [vmem:[%s237 + $0x20c] sm:$0xf]
        %v493 = vld [vmem:[%s237 + $0x210] sm:$0xf]
        %v494 = vld [vmem:[%s237 + $0x214] sm:$0xf]
        %v495 = vld [vmem:[%s237 + $0x218] sm:$0xf]
        %v496 = vld [vmem:[%s237 + $0x21c] sm:$0xf]
        %v497 = vld [vmem:[%s237 + $0x220] sm:$0xf]
        %v498 = vld [vmem:[%s237 + $0x224] sm:$0xf]
        %v499 = vld [vmem:[%s237 + $0x228] sm:$0xf]
        %v500 = vld [vmem:[%s237 + $0x22c] sm:$0xf]
        %v501 = vld [vmem:[%s237 + $0x230] sm:$0xf]
        %v502 = vld [vmem:[%s237 + $0x234] sm:$0xf]
        %v503 = vld [vmem:[%s237 + $0x238] sm:$0xf]
        %v504 = vld [vmem:[%s237 + $0x23c] sm:$0xf]
        %s505 = scalar_lea.vmem %s237, 576 [#allocation8]
        %v506 = vld [vmem:[%s505] sm:$0xf]
        %v507 = vld [vmem:[%s505 + $0x4] sm:$0xf]
        %v508 = vld [vmem:[%s505 + $0x8] sm:$0xf]
        %v509 = vld [vmem:[%s505 + $0xc] sm:$0xf]
        %v510 = vld [vmem:[%s505 + $0x10] sm:$0xf]
        %v511 = vld [vmem:[%s505 + $0x14] sm:$0xf]
        %v512 = vld [vmem:[%s505 + $0x18] sm:$0xf]
        %v513 = vld [vmem:[%s505 + $0x1c] sm:$0xf]
        %v514 = vld [vmem:[%s505 + $0x20] sm:$0xf]
        %v515 = vld [vmem:[%s505 + $0x24] sm:$0xf]
        %v516 = vld [vmem:[%s505 + $0x28] sm:$0xf]
        %v517 = vld [vmem:[%s505 + $0x2c] sm:$0xf]
        %v518 = vld [vmem:[%s505 + $0x30] sm:$0xf]
        %v519 = vld [vmem:[%s505 + $0x34] sm:$0xf]
        %v520 = vld [vmem:[%s505 + $0x38] sm:$0xf]
        %v521 = vld [vmem:[%s505 + $0x3c] sm:$0xf]
        %v522 = vld [vmem:[%s505 + $0x40] sm:$0xf]
        %v523 = vld [vmem:[%s505 + $0x44] sm:$0xf]
        %v524 = vld [vmem:[%s505 + $0x48] sm:$0xf]
        %v525 = vld [vmem:[%s505 + $0x4c] sm:$0xf]
        %v526 = vld [vmem:[%s505 + $0x50] sm:$0xf]
        %v527 = vld [vmem:[%s505 + $0x54] sm:$0xf]
        %v528 = vld [vmem:[%s505 + $0x58] sm:$0xf]
        %v529 = vld [vmem:[%s505 + $0x5c] sm:$0xf]
        %v530 = vld [vmem:[%s505 + $0x60] sm:$0xf]
        %v531 = vld [vmem:[%s505 + $0x64] sm:$0xf]
        %v532 = vld [vmem:[%s505 + $0x68] sm:$0xf]
        %v533 = vld [vmem:[%s505 + $0x6c] sm:$0xf]
        %v534 = vld [vmem:[%s505 + $0x70] sm:$0xf]
        %v535 = vld [vmem:[%s505 + $0x74] sm:$0xf]
        %v536 = vld [vmem:[%s505 + $0x78] sm:$0xf]
        %v537 = vld [vmem:[%s505 + $0x7c] sm:$0xf]
        %v538 = vld [vmem:[%s505 + $0x80] sm:$0xf]
        %v539 = vld [vmem:[%s505 + $0x84] sm:$0xf]
        %v540 = vld [vmem:[%s505 + $0x88] sm:$0xf]
        %v541 = vld [vmem:[%s505 + $0x8c] sm:$0xf]
        %v542 = vld [vmem:[%s505 + $0x90] sm:$0xf]
        %v543 = vld [vmem:[%s505 + $0x94] sm:$0xf]
        %v544 = vld [vmem:[%s505 + $0x98] sm:$0xf]
        %v545 = vld [vmem:[%s505 + $0x9c] sm:$0xf]
        %v546 = vld [vmem:[%s505 + $0xa0] sm:$0xf]
        %v547 = vld [vmem:[%s505 + $0xa4] sm:$0xf]
        %v548 = vld [vmem:[%s505 + $0xa8] sm:$0xf]
        %v549 = vld [vmem:[%s505 + $0xac] sm:$0xf]
        %v550 = vld [vmem:[%s505 + $0xb0] sm:$0xf]
        %v551 = vld [vmem:[%s505 + $0xb4] sm:$0xf]
        %v552 = vld [vmem:[%s505 + $0xb8] sm:$0xf]
        %v553 = vld [vmem:[%s505 + $0xbc] sm:$0xf]
        %v554 = vld [vmem:[%s505 + $0xc0] sm:$0xf]
        %v555 = vld [vmem:[%s505 + $0xc4] sm:$0xf]
        %v556 = vld [vmem:[%s505 + $0xc8] sm:$0xf]
        %v557 = vld [vmem:[%s505 + $0xcc] sm:$0xf]
        %v558 = vld [vmem:[%s505 + $0xd0] sm:$0xf]
        %v559 = vld [vmem:[%s505 + $0xd4] sm:$0xf]
        %v560 = vld [vmem:[%s505 + $0xd8] sm:$0xf]
        %v561 = vld [vmem:[%s505 + $0xdc] sm:$0xf]
        %v562 = vld [vmem:[%s505 + $0xe0] sm:$0xf]
        %v563 = vld [vmem:[%s505 + $0xe4] sm:$0xf]
        %v564 = vld [vmem:[%s505 + $0xe8] sm:$0xf]
        %v565 = vld [vmem:[%s505 + $0xec] sm:$0xf]
        %v566 = vld [vmem:[%s505 + $0xf0] sm:$0xf]
        %v567 = vld [vmem:[%s505 + $0xf4] sm:$0xf]
        %v568 = vld [vmem:[%s505 + $0xf8] sm:$0xf]
        %v569 = vld [vmem:[%s505 + $0xfc] sm:$0xf]
        %v570 = vld [vmem:[%s505 + $0x100] sm:$0xf]
        %v571 = vld [vmem:[%s505 + $0x104] sm:$0xf]
        %v572 = vld [vmem:[%s505 + $0x108] sm:$0xf]
        %v573 = vld [vmem:[%s505 + $0x10c] sm:$0xf]
        %v574 = vld [vmem:[%s505 + $0x110] sm:$0xf]
        %v575 = vld [vmem:[%s505 + $0x114] sm:$0xf]
        %v576 = vld [vmem:[%s505 + $0x118] sm:$0xf]
        %v577 = vld [vmem:[%s505 + $0x11c] sm:$0xf]
        %v578 = vld [vmem:[%s505 + $0x120] sm:$0xf]
        %v579 = vld [vmem:[%s505 + $0x124] sm:$0xf]
        %v580 = vld [vmem:[%s505 + $0x128] sm:$0xf]
        %v581 = vld [vmem:[%s505 + $0x12c] sm:$0xf]
        %v582 = vld [vmem:[%s505 + $0x130] sm:$0xf]
        %v583 = vld [vmem:[%s505 + $0x134] sm:$0xf]
        %v584 = vld [vmem:[%s505 + $0x138] sm:$0xf]
        %v585 = vld [vmem:[%s505 + $0x13c] sm:$0xf]
        %v586 = vld [vmem:[%s505 + $0x140] sm:$0xf]
        %v587 = vld [vmem:[%s505 + $0x144] sm:$0xf]
        %v588 = vld [vmem:[%s505 + $0x148] sm:$0xf]
        %v589 = vld [vmem:[%s505 + $0x14c] sm:$0xf]
        %v590 = vld [vmem:[%s505 + $0x150] sm:$0xf]
        %v591 = vld [vmem:[%s505 + $0x154] sm:$0xf]
        %v592 = vld [vmem:[%s505 + $0x158] sm:$0xf]
        %v593 = vld [vmem:[%s505 + $0x15c] sm:$0xf]
        %v594 = vld [vmem:[%s505 + $0x160] sm:$0xf]
        %v595 = vld [vmem:[%s505 + $0x164] sm:$0xf]
        %v596 = vld [vmem:[%s505 + $0x168] sm:$0xf]
        %v597 = vld [vmem:[%s505 + $0x16c] sm:$0xf]
        %v598 = vld [vmem:[%s505 + $0x170] sm:$0xf]
        %v599 = vld [vmem:[%s505 + $0x174] sm:$0xf]
        %v600 = vld [vmem:[%s505 + $0x178] sm:$0xf]
        %v601 = vld [vmem:[%s505 + $0x17c] sm:$0xf]
        %v602 = vld [vmem:[%s505 + $0x180] sm:$0xf]
        %v603 = vld [vmem:[%s505 + $0x184] sm:$0xf]
        %v604 = vld [vmem:[%s505 + $0x188] sm:$0xf]
        %v605 = vld [vmem:[%s505 + $0x18c] sm:$0xf]
        %v606 = vld [vmem:[%s505 + $0x190] sm:$0xf]
        %v607 = vld [vmem:[%s505 + $0x194] sm:$0xf]
        %v608 = vld [vmem:[%s505 + $0x198] sm:$0xf]
        %v609 = vld [vmem:[%s505 + $0x19c] sm:$0xf]
        %v610 = vld [vmem:[%s505 + $0x1a0] sm:$0xf]
        %v611 = vld [vmem:[%s505 + $0x1a4] sm:$0xf]
        %v612 = vld [vmem:[%s505 + $0x1a8] sm:$0xf]
        %v613 = vld [vmem:[%s505 + $0x1ac] sm:$0xf]
        %v614 = vld [vmem:[%s505 + $0x1b0] sm:$0xf]
        %v615 = vld [vmem:[%s505 + $0x1b4] sm:$0xf]
        %v616 = vld [vmem:[%s505 + $0x1b8] sm:$0xf]
        %v617 = vld [vmem:[%s505 + $0x1bc] sm:$0xf]
        %v618 = vld [vmem:[%s505 + $0x1c0] sm:$0xf]
        %v619 = vld [vmem:[%s505 + $0x1c4] sm:$0xf]
        %v620 = vld [vmem:[%s505 + $0x1c8] sm:$0xf]
        %v621 = vld [vmem:[%s505 + $0x1cc] sm:$0xf]
        %v622 = vld [vmem:[%s505 + $0x1d0] sm:$0xf]
        %v623 = vld [vmem:[%s505 + $0x1d4] sm:$0xf]
        %v624 = vld [vmem:[%s505 + $0x1d8] sm:$0xf]
        %v625 = vld [vmem:[%s505 + $0x1dc] sm:$0xf]
        %v626 = vld [vmem:[%s505 + $0x1e0] sm:$0xf]
        %v627 = vld [vmem:[%s505 + $0x1e4] sm:$0xf]
        %v628 = vld [vmem:[%s505 + $0x1e8] sm:$0xf]
        %v629 = vld [vmem:[%s505 + $0x1ec] sm:$0xf]
        %v630 = vld [vmem:[%s505 + $0x1f0] sm:$0xf]
        %v631 = vld [vmem:[%s505 + $0x1f4] sm:$0xf]
        %v632 = vld [vmem:[%s505 + $0x1f8] sm:$0xf]
        %v633 = vld [vmem:[%s505 + $0x1fc] sm:$0xf]
        %v634 = vld [vmem:[%s505 + $0x200] sm:$0xf]
        %v635 = vld [vmem:[%s505 + $0x204] sm:$0xf]
        %v636 = vld [vmem:[%s505 + $0x208] sm:$0xf]
        %v637 = vld [vmem:[%s505 + $0x20c] sm:$0xf]
        %v638 = vld [vmem:[%s505 + $0x210] sm:$0xf]
        %v639 = vld [vmem:[%s505 + $0x214] sm:$0xf]
        %v640 = vld [vmem:[%s505 + $0x218] sm:$0xf]
        %v641 = vld [vmem:[%s505 + $0x21c] sm:$0xf]
        %v642 = vld [vmem:[%s505 + $0x220] sm:$0xf]
        %v643 = vld [vmem:[%s505 + $0x224] sm:$0xf]
        %v644 = vld [vmem:[%s505 + $0x228] sm:$0xf]
        %v645 = vld [vmem:[%s505 + $0x22c] sm:$0xf]
        %v646 = vld [vmem:[%s505 + $0x230] sm:$0xf]
        %v647 = vld [vmem:[%s505 + $0x234] sm:$0xf]
        %v648 = vld [vmem:[%s505 + $0x238] sm:$0xf]
        %v649 = vld [vmem:[%s505 + $0x23c] sm:$0xf]
        %v650 = vld [vmem:[%s247] sm:$0x1]
        %v651 = vld [vmem:[%s247 + $0x1] sm:$0x1]
        %v652 = vld [vmem:[%s247 + $0x2] sm:$0x1]
        %v653 = vld [vmem:[%s247 + $0x3] sm:$0x1]
        %v654 = vld [vmem:[#allocation2] sm:$0xff]
        %v655 = vld [vmem:[#allocation2 + $0x8] sm:$0xff]
        %v656 = vld [vmem:[#allocation2 + $0x10] sm:$0xff]
        %v657 = vld [vmem:[#allocation2 + $0x18] sm:$0xff]
        %v658 = vld [vmem:[#allocation2 + $0x20] sm:$0xff]
        %v659 = vld [vmem:[#allocation2 + $0x28] sm:$0xff]
        %v660 = vld [vmem:[#allocation2 + $0x30] sm:$0xff]
        %v661 = vld [vmem:[#allocation2 + $0x38] sm:$0xff]
        %v662 = vpack.c.bf16 %v654, %v654
        %v663 = vpack.c.bf16 %v655, %v655
        %v664 = vpack.c.bf16 %v656, %v656
        %v665 = vpack.c.bf16 %v657, %v657
        %v666 = vpack.c.bf16 %v658, %v658
        %v667 = vpack.c.bf16 %v659, %v659
        %v668 = vpack.c.bf16 %v660, %v660
        %v669 = vpack.c.bf16 %v661, %v661
        %v671 = vshrl.u32 %v662, 16
        %v673 = vrot.slane %v671, 7
        %v674 = vshll.u32 %v662, 16
        %v676 = vor.u32 %v673, %v674
        %v677 = vrot.slane %v673, 4
        %v679 = vshrl.u32 %v663, 16
        %v681 = vrot.slane %v679, 7
        %v682 = vshll.u32 %v663, 16
        %v684 = vor.u32 %v681, %v682
        %v685 = vrot.slane %v681, 4
        %v687 = vshrl.u32 %v664, 16
        %v689 = vrot.slane %v687, 7
        %v690 = vshll.u32 %v664, 16
        %v692 = vor.u32 %v689, %v690
        %v693 = vrot.slane %v689, 4
        %v695 = vshrl.u32 %v665, 16
        %v697 = vrot.slane %v695, 7
        %v698 = vshll.u32 %v665, 16
        %v700 = vor.u32 %v697, %v698
        %v701 = vrot.slane %v697, 4
        %v703 = vshrl.u32 %v666, 16
        %v705 = vrot.slane %v703, 7
        %v706 = vshll.u32 %v666, 16
        %v708 = vor.u32 %v705, %v706
        %v709 = vrot.slane %v705, 4
        %v711 = vshrl.u32 %v667, 16
        %v713 = vrot.slane %v711, 7
        %v714 = vshll.u32 %v667, 16
        %v716 = vor.u32 %v713, %v714
        %v717 = vrot.slane %v713, 4
        %v719 = vshrl.u32 %v668, 16
        %v721 = vrot.slane %v719, 7
        %v722 = vshll.u32 %v668, 16
        %v724 = vor.u32 %v721, %v722
        %v725 = vrot.slane %v721, 4
        %v727 = vshrl.u32 %v669, 16
        %v729 = vrot.slane %v727, 7
        %v730 = vshll.u32 %v669, 16
        %v732 = vor.u32 %v729, %v730
        %v733 = vrot.slane %v729, 4
        %s750 = scalar_lea.vmem [#allocation3], 8
        %vm751 = vcmask 1043456
        %vm752 = vsmask.f32 7938
        %vm753 = vmand %vm751, %vm752
        %v754 = vld [vmem:[%s750] sm:$0xf]
        %v755 = vsel %vm753, %v676, %v754
        %756 = vst [vmem:[%s750] sm:$0xf] %v755
        %vm757 = vcmask 1040384
        %vm758 = vsmask.f32 256
        %vm759 = vmand %vm757, %vm758
        %v760 = vld [vmem:[%s750 + $0x4] sm:$0x1]
        %v761 = vsel %vm759, %v677, %v760
        %762 = vst [vmem:[%s750 + $0x4] sm:$0x1] %v761
        %v763 = vld [vmem:[%s750 + $0x8] sm:$0xf]
        %v764 = vsel %vm753, %v684, %v763
        %765 = vst [vmem:[%s750 + $0x8] sm:$0xf] %v764
        %v766 = vld [vmem:[%s750 + $0xc] sm:$0x1]
        %v767 = vsel %vm759, %v685, %v766
        %768 = vst [vmem:[%s750 + $0xc] sm:$0x1] %v767
        %v769 = vld [vmem:[%s750 + $0x10] sm:$0xf]
        %v770 = vsel %vm753, %v692, %v769
        %771 = vst [vmem:[%s750 + $0x10] sm:$0xf] %v770
        %v772 = vld [vmem:[%s750 + $0x14] sm:$0x1]
        %v773 = vsel %vm759, %v693, %v772
        %774 = vst [vmem:[%s750 + $0x14] sm:$0x1] %v773
        %v775 = vld [vmem:[%s750 + $0x18] sm:$0xf]
        %v776 = vsel %vm753, %v700, %v775
        %777 = vst [vmem:[%s750 + $0x18] sm:$0xf] %v776
        %v778 = vld [vmem:[%s750 + $0x1c] sm:$0x1]
        %v779 = vsel %vm759, %v701, %v778
        %780 = vst [vmem:[%s750 + $0x1c] sm:$0x1] %v779
        %v781 = vld [vmem:[%s750 + $0x20] sm:$0xf]
        %v782 = vsel %vm753, %v708, %v781
        %783 = vst [vmem:[%s750 + $0x20] sm:$0xf] %v782
        %v784 = vld [vmem:[%s750 + $0x24] sm:$0x1]
        %v785 = vsel %vm759, %v709, %v784
        %786 = vst [vmem:[%s750 + $0x24] sm:$0x1] %v785
        %v787 = vld [vmem:[%s750 + $0x28] sm:$0xf]
        %v788 = vsel %vm753, %v716, %v787
        %789 = vst [vmem:[%s750 + $0x28] sm:$0xf] %v788
        %v790 = vld [vmem:[%s750 + $0x2c] sm:$0x1]
        %v791 = vsel %vm759, %v717, %v790
        %792 = vst [vmem:[%s750 + $0x2c] sm:$0x1] %v791
        %v793 = vld [vmem:[%s750 + $0x30] sm:$0xf]
        %v794 = vsel %vm753, %v724, %v793
        %795 = vst [vmem:[%s750 + $0x30] sm:$0xf] %v794
        %v796 = vld [vmem:[%s750 + $0x34] sm:$0x1]
        %v797 = vsel %vm759, %v725, %v796
        %798 = vst [vmem:[%s750 + $0x34] sm:$0x1] %v797
        %v799 = vld [vmem:[%s750 + $0x38] sm:$0xf]
        %v800 = vsel %vm753, %v732, %v799
        %801 = vst [vmem:[%s750 + $0x38] sm:$0xf] %v800
        %v802 = vld [vmem:[%s750 + $0x3c] sm:$0x1]
        %v803 = vsel %vm759, %v733, %v802
        %804 = vst [vmem:[%s750 + $0x3c] sm:$0x1] %v803
        %v805 = vld [vmem:[#allocation3] sm:$0xf]
        %v806 = vld [vmem:[#allocation3 + $0x8] sm:$0xf]
        %v807 = vld [vmem:[#allocation3 + $0x10] sm:$0xf]
        %v808 = vld [vmem:[#allocation3 + $0x18] sm:$0xf]
        %v809 = vld [vmem:[#allocation3 + $0x20] sm:$0xf]
        %v810 = vld [vmem:[#allocation3 + $0x28] sm:$0xf]
        %v811 = vld [vmem:[#allocation3 + $0x30] sm:$0xf]
        %v812 = vld [vmem:[#allocation3 + $0x38] sm:$0xf]
        %813 = vst [vmem:[#allocation4] sm:$0xf] %v805
        %814 = vst [vmem:[#allocation4 + $0x24] sm:$0xf] %v806
        %815 = vst [vmem:[#allocation4 + $0x48] sm:$0xf] %v807
        %816 = vst [vmem:[#allocation4 + $0x6c] sm:$0xf] %v808
        %817 = vst [vmem:[#allocation4 + $0x90] sm:$0xf] %v809
        %818 = vst [vmem:[#allocation4 + $0xb4] sm:$0xf] %v810
        %819 = vst [vmem:[#allocation4 + $0xd8] sm:$0xf] %v811
        %820 = vst [vmem:[#allocation4 + $0xfc] sm:$0xf] %v812
        %v821 = vld [vmem:[#allocation3] sm:$0xf]
        %v822 = vld [vmem:[#allocation3 + $0x4] sm:$0x1]
        %v823 = vld [vmem:[#allocation3 + $0x8] sm:$0xf]
        %v824 = vld [vmem:[#allocation3 + $0xc] sm:$0x1]
        %v825 = vld [vmem:[#allocation3 + $0x10] sm:$0xf]
        %v826 = vld [vmem:[#allocation3 + $0x14] sm:$0x1]
        %v827 = vld [vmem:[#allocation3 + $0x18] sm:$0xf]
        %v828 = vld [vmem:[#allocation3 + $0x1c] sm:$0x1]
        %v829 = vld [vmem:[#allocation3 + $0x20] sm:$0xf]
        %v830 = vld [vmem:[#allocation3 + $0x24] sm:$0x1]
        %v831 = vld [vmem:[#allocation3 + $0x28] sm:$0xf]
        %v832 = vld [vmem:[#allocation3 + $0x2c] sm:$0x1]
        %v833 = vld [vmem:[#allocation3 + $0x30] sm:$0xf]
        %v834 = vld [vmem:[#allocation3 + $0x34] sm:$0x1]
        %v835 = vld [vmem:[#allocation3 + $0x38] sm:$0xf]
        %v836 = vld [vmem:[#allocation3 + $0x3c] sm:$0x1]
        %vm837 = vsmask.f32 3328
        %vm838 = vsmask.f32 7440
        %vm839 = vmor %vm837, %vm838
        %v841 = vshrl.u32 %v821, 16
        %v843 = vrot.slane %v841, 4
        %v844 = vshll.u32 %v821, 16
        %v846 = vrot.slane %v844, 5
        %v847 = vor.u32 %v843, %v846
        %v848 = vrot.slane %v847, 4
        %v850 = vshll.u32 %v822, 16
        %v852 = vrot.slane %v850, 5
        %v853 = vsel %vm839, %v848, %v852
        %v855 = vshrl.u32 %v823, 16
        %v857 = vrot.slane %v855, 4
        %v858 = vshll.u32 %v823, 16
        %v860 = vrot.slane %v858, 5
        %v861 = vor.u32 %v857, %v860
        %v862 = vrot.slane %v861, 4
        %v864 = vshll.u32 %v824, 16
        %v866 = vrot.slane %v864, 5
        %v867 = vsel %vm839, %v862, %v866
        %v869 = vshrl.u32 %v825, 16
        %v871 = vrot.slane %v869, 4
        %v872 = vshll.u32 %v825, 16
        %v874 = vrot.slane %v872, 5
        %v875 = vor.u32 %v871, %v874
        %v876 = vrot.slane %v875, 4
        %v878 = vshll.u32 %v826, 16
        %v880 = vrot.slane %v878, 5
        %v881 = vsel %vm839, %v876, %v880
        %v883 = vshrl.u32 %v827, 16
        %v885 = vrot.slane %v883, 4
        %v886 = vshll.u32 %v827, 16
        %v888 = vrot.slane %v886, 5
        %v889 = vor.u32 %v885, %v888
        %v890 = vrot.slane %v889, 4
        %v892 = vshll.u32 %v828, 16
        %v894 = vrot.slane %v892, 5
        %v895 = vsel %vm839, %v890, %v894
        %v897 = vshrl.u32 %v829, 16
        %v899 = vrot.slane %v897, 4
        %v900 = vshll.u32 %v829, 16
        %v902 = vrot.slane %v900, 5
        %v903 = vor.u32 %v899, %v902
        %v904 = vrot.slane %v903, 4
        %v906 = vshll.u32 %v830, 16
        %v908 = vrot.slane %v906, 5
        %v909 = vsel %vm839, %v904, %v908
        %v911 = vshrl.u32 %v831, 16
        %v913 = vrot.slane %v911, 4
        %v914 = vshll.u32 %v831, 16
        %v916 = vrot.slane %v914, 5
        %v917 = vor.u32 %v913, %v916
        %v918 = vrot.slane %v917, 4
        %v920 = vshll.u32 %v832, 16
        %v922 = vrot.slane %v920, 5
        %v923 = vsel %vm839, %v918, %v922
        %v925 = vshrl.u32 %v833, 16
        %v927 = vrot.slane %v925, 4
        %v928 = vshll.u32 %v833, 16
        %v930 = vrot.slane %v928, 5
        %v931 = vor.u32 %v927, %v930
        %v932 = vrot.slane %v931, 4
        %v934 = vshll.u32 %v834, 16
        %v936 = vrot.slane %v934, 5
        %v937 = vsel %vm839, %v932, %v936
        %v939 = vshrl.u32 %v835, 16
        %v941 = vrot.slane %v939, 4
        %v942 = vshll.u32 %v835, 16
        %v944 = vrot.slane %v942, 5
        %v945 = vor.u32 %v941, %v944
        %v946 = vrot.slane %v945, 4
        %v948 = vshll.u32 %v836, 16
        %v950 = vrot.slane %v948, 5
        %v951 = vsel %vm839, %v946, %v950
        %960 = vst [vmem:[#allocation4 + $0x4] sm:$0xf] %v853
        %961 = vst [vmem:[#allocation4 + $0x28] sm:$0xf] %v867
        %962 = vst [vmem:[#allocation4 + $0x4c] sm:$0xf] %v881
        %963 = vst [vmem:[#allocation4 + $0x70] sm:$0xf] %v895
        %964 = vst [vmem:[#allocation4 + $0x94] sm:$0xf] %v909
        %965 = vst [vmem:[#allocation4 + $0xb8] sm:$0xf] %v923
        %966 = vst [vmem:[#allocation4 + $0xdc] sm:$0xf] %v937
        %967 = vst [vmem:[#allocation4 + $0x100] sm:$0xf] %v951
        %v968 = vld [vmem:[#allocation3] sm:$0xe]
        %v969 = vld [vmem:[#allocation3 + $0x4] sm:$0x1]
        %v970 = vld [vmem:[#allocation3 + $0x8] sm:$0xe]
        %v971 = vld [vmem:[#allocation3 + $0xc] sm:$0x1]
        %v972 = vld [vmem:[#allocation3 + $0x10] sm:$0xe]
        %v973 = vld [vmem:[#allocation3 + $0x14] sm:$0x1]
        %v974 = vld [vmem:[#allocation3 + $0x18] sm:$0xe]
        %v975 = vld [vmem:[#allocation3 + $0x1c] sm:$0x1]
        %v976 = vld [vmem:[#allocation3 + $0x20] sm:$0xe]
        %v977 = vld [vmem:[#allocation3 + $0x24] sm:$0x1]
        %v978 = vld [vmem:[#allocation3 + $0x28] sm:$0xe]
        %v979 = vld [vmem:[#allocation3 + $0x2c] sm:$0x1]
        %v980 = vld [vmem:[#allocation3 + $0x30] sm:$0xe]
        %v981 = vld [vmem:[#allocation3 + $0x34] sm:$0x1]
        %v982 = vld [vmem:[#allocation3 + $0x38] sm:$0xe]
        %v983 = vld [vmem:[#allocation3 + $0x3c] sm:$0x1]
        %vm1000 = vcmask 1042432
        %vm1001 = vcmask 1046532
        %vm1002 = vmor %vm1000, %vm1001
        %v1003 = vrot.slane %v968, 5
        %v1004 = vrot.slane %v1003, 4
        %v1005 = vrot.slane %v969, 5
        %v1006 = vsel %vm1002, %v1004, %v1005
        %v1007 = vrot.slane %v970, 5
        %v1008 = vrot.slane %v1007, 4
        %v1009 = vrot.slane %v971, 5
        %v1010 = vsel %vm1002, %v1008, %v1009
        %v1011 = vrot.slane %v972, 5
        %v1012 = vrot.slane %v1011, 4
        %v1013 = vrot.slane %v973, 5
        %v1014 = vsel %vm1002, %v1012, %v1013
        %v1015 = vrot.slane %v974, 5
        %v1016 = vrot.slane %v1015, 4
        %v1017 = vrot.slane %v975, 5
        %v1018 = vsel %vm1002, %v1016, %v1017
        %v1019 = vrot.slane %v976, 5
        %v1020 = vrot.slane %v1019, 4
        %v1021 = vrot.slane %v977, 5
        %v1022 = vsel %vm1002, %v1020, %v1021
        %v1023 = vrot.slane %v978, 5
        %v1024 = vrot.slane %v1023, 4
        %v1025 = vrot.slane %v979, 5
        %v1026 = vsel %vm1002, %v1024, %v1025
        %v1027 = vrot.slane %v980, 5
        %v1028 = vrot.slane %v1027, 4
        %v1029 = vrot.slane %v981, 5
        %v1030 = vsel %vm1002, %v1028, %v1029
        %v1031 = vrot.slane %v982, 5
        %v1032 = vrot.slane %v1031, 4
        %v1033 = vrot.slane %v983, 5
        %v1034 = vsel %vm1002, %v1032, %v1033
        %1043 = vst [vmem:[#allocation4 + $0x8] sm:$0xf] %v1006
        %1044 = vst [vmem:[#allocation4 + $0x2c] sm:$0xf] %v1010
        %1045 = vst [vmem:[#allocation4 + $0x50] sm:$0xf] %v1014
        %1046 = vst [vmem:[#allocation4 + $0x74] sm:$0xf] %v1018
        %1047 = vst [vmem:[#allocation4 + $0x98] sm:$0xf] %v1022
        %1048 = vst [vmem:[#allocation4 + $0xbc] sm:$0xf] %v1026
        %1049 = vst [vmem:[#allocation4 + $0xe0] sm:$0xf] %v1030
        %1050 = vst [vmem:[#allocation4 + $0x104] sm:$0xf] %v1034
        %v1051 = vld [vmem:[%s750] sm:$0xf]
        %v1052 = vld [vmem:[%s750 + $0x8] sm:$0xf]
        %v1053 = vld [vmem:[%s750 + $0x10] sm:$0xf]
        %v1054 = vld [vmem:[%s750 + $0x18] sm:$0xf]
        %v1055 = vld [vmem:[%s750 + $0x20] sm:$0xf]
        %v1056 = vld [vmem:[%s750 + $0x28] sm:$0xf]
        %v1057 = vld [vmem:[%s750 + $0x30] sm:$0xf]
        %v1058 = vld [vmem:[%s750 + $0x38] sm:$0xf]
        %1059 = vst [vmem:[#allocation4 + $0xc] sm:$0xf] %v1051
        %1060 = vst [vmem:[#allocation4 + $0x30] sm:$0xf] %v1052
        %1061 = vst [vmem:[#allocation4 + $0x54] sm:$0xf] %v1053
        %1062 = vst [vmem:[#allocation4 + $0x78] sm:$0xf] %v1054
        %1063 = vst [vmem:[#allocation4 + $0x9c] sm:$0xf] %v1055
        %1064 = vst [vmem:[#allocation4 + $0xc0] sm:$0xf] %v1056
        %1065 = vst [vmem:[#allocation4 + $0xe4] sm:$0xf] %v1057
        %1066 = vst [vmem:[#allocation4 + $0x108] sm:$0xf] %v1058
        %v1067 = vld [vmem:[%s750] sm:$0xf]
        %v1068 = vld [vmem:[%s750 + $0x4] sm:$0x1]
        %v1069 = vld [vmem:[%s750 + $0x8] sm:$0xf]
        %v1070 = vld [vmem:[%s750 + $0xc] sm:$0x1]
        %v1071 = vld [vmem:[%s750 + $0x10] sm:$0xf]
        %v1072 = vld [vmem:[%s750 + $0x14] sm:$0x1]
        %v1073 = vld [vmem:[%s750 + $0x18] sm:$0xf]
        %v1074 = vld [vmem:[%s750 + $0x1c] sm:$0x1]
        %v1075 = vld [vmem:[%s750 + $0x20] sm:$0xf]
        %v1076 = vld [vmem:[%s750 + $0x24] sm:$0x1]
        %v1077 = vld [vmem:[%s750 + $0x28] sm:$0xf]
        %v1078 = vld [vmem:[%s750 + $0x2c] sm:$0x1]
        %v1079 = vld [vmem:[%s750 + $0x30] sm:$0xf]
        %v1080 = vld [vmem:[%s750 + $0x34] sm:$0x1]
        %v1081 = vld [vmem:[%s750 + $0x38] sm:$0xf]
        %v1082 = vld [vmem:[%s750 + $0x3c] sm:$0x1]
        %v1084 = vshrl.u32 %v1067, 16
        %v1086 = vrot.slane %v1084, 4
        %v1087 = vshll.u32 %v1067, 16
        %v1089 = vrot.slane %v1087, 5
        %v1090 = vor.u32 %v1086, %v1089
        %v1091 = vrot.slane %v1090, 4
        %v1093 = vshll.u32 %v1068, 16
        %v1095 = vrot.slane %v1093, 5
        %v1096 = vsel %vm839, %v1091, %v1095
        %v1098 = vshrl.u32 %v1069, 16
        %v1100 = vrot.slane %v1098, 4
        %v1101 = vshll.u32 %v1069, 16
        %v1103 = vrot.slane %v1101, 5
        %v1104 = vor.u32 %v1100, %v1103
        %v1105 = vrot.slane %v1104, 4
        %v1107 = vshll.u32 %v1070, 16
        %v1109 = vrot.slane %v1107, 5
        %v1110 = vsel %vm839, %v1105, %v1109
        %v1112 = vshrl.u32 %v1071, 16
        %v1114 = vrot.slane %v1112, 4
        %v1115 = vshll.u32 %v1071, 16
        %v1117 = vrot.slane %v1115, 5
        %v1118 = vor.u32 %v1114, %v1117
        %v1119 = vrot.slane %v1118, 4
        %v1121 = vshll.u32 %v1072, 16
        %v1123 = vrot.slane %v1121, 5
        %v1124 = vsel %vm839, %v1119, %v1123
        %v1126 = vshrl.u32 %v1073, 16
        %v1128 = vrot.slane %v1126, 4
        %v1129 = vshll.u32 %v1073, 16
        %v1131 = vrot.slane %v1129, 5
        %v1132 = vor.u32 %v1128, %v1131
        %v1133 = vrot.slane %v1132, 4
        %v1135 = vshll.u32 %v1074, 16
        %v1137 = vrot.slane %v1135, 5
        %v1138 = vsel %vm839, %v1133, %v1137
        %v1140 = vshrl.u32 %v1075, 16
        %v1142 = vrot.slane %v1140, 4
        %v1143 = vshll.u32 %v1075, 16
        %v1145 = vrot.slane %v1143, 5
        %v1146 = vor.u32 %v1142, %v1145
        %v1147 = vrot.slane %v1146, 4
        %v1149 = vshll.u32 %v1076, 16
        %v1151 = vrot.slane %v1149, 5
        %v1152 = vsel %vm839, %v1147, %v1151
        %v1154 = vshrl.u32 %v1077, 16
        %v1156 = vrot.slane %v1154, 4
        %v1157 = vshll.u32 %v1077, 16
        %v1159 = vrot.slane %v1157, 5
        %v1160 = vor.u32 %v1156, %v1159
        %v1161 = vrot.slane %v1160, 4
        %v1163 = vshll.u32 %v1078, 16
        %v1165 = vrot.slane %v1163, 5
        %v1166 = vsel %vm839, %v1161, %v1165
        %v1168 = vshrl.u32 %v1079, 16
        %v1170 = vrot.slane %v1168, 4
        %v1171 = vshll.u32 %v1079, 16
        %v1173 = vrot.slane %v1171, 5
        %v1174 = vor.u32 %v1170, %v1173
        %v1175 = vrot.slane %v1174, 4
        %v1177 = vshll.u32 %v1080, 16
        %v1179 = vrot.slane %v1177, 5
        %v1180 = vsel %vm839, %v1175, %v1179
        %v1182 = vshrl.u32 %v1081, 16
        %v1184 = vrot.slane %v1182, 4
        %v1185 = vshll.u32 %v1081, 16
        %v1187 = vrot.slane %v1185, 5
        %v1188 = vor.u32 %v1184, %v1187
        %v1189 = vrot.slane %v1188, 4
        %v1191 = vshll.u32 %v1082, 16
        %v1193 = vrot.slane %v1191, 5
        %v1194 = vsel %vm839, %v1189, %v1193
        %1203 = vst [vmem:[#allocation4 + $0x10] sm:$0xf] %v1096
        %1204 = vst [vmem:[#allocation4 + $0x34] sm:$0xf] %v1110
        %1205 = vst [vmem:[#allocation4 + $0x58] sm:$0xf] %v1124
        %1206 = vst [vmem:[#allocation4 + $0x7c] sm:$0xf] %v1138
        %1207 = vst [vmem:[#allocation4 + $0xa0] sm:$0xf] %v1152
        %1208 = vst [vmem:[#allocation4 + $0xc4] sm:$0xf] %v1166
        %1209 = vst [vmem:[#allocation4 + $0xe8] sm:$0xf] %v1180
        %1210 = vst [vmem:[#allocation4 + $0x10c] sm:$0xf] %v1194
        %v1211 = vld [vmem:[%s750] sm:$0xe]
        %v1212 = vld [vmem:[%s750 + $0x4] sm:$0x1]
        %v1213 = vld [vmem:[%s750 + $0x8] sm:$0xe]
        %v1214 = vld [vmem:[%s750 + $0xc] sm:$0x1]
        %v1215 = vld [vmem:[%s750 + $0x10] sm:$0xe]
        %v1216 = vld [vmem:[%s750 + $0x14] sm:$0x1]
        %v1217 = vld [vmem:[%s750 + $0x18] sm:$0xe]
        %v1218 = vld [vmem:[%s750 + $0x1c] sm:$0x1]
        %v1219 = vld [vmem:[%s750 + $0x20] sm:$0xe]
        %v1220 = vld [vmem:[%s750 + $0x24] sm:$0x1]
        %v1221 = vld [vmem:[%s750 + $0x28] sm:$0xe]
        %v1222 = vld [vmem:[%s750 + $0x2c] sm:$0x1]
        %v1223 = vld [vmem:[%s750 + $0x30] sm:$0xe]
        %v1224 = vld [vmem:[%s750 + $0x34] sm:$0x1]
        %v1225 = vld [vmem:[%s750 + $0x38] sm:$0xe]
        %v1226 = vld [vmem:[%s750 + $0x3c] sm:$0x1]
        %v1243 = vrot.slane %v1211, 5
        %v1244 = vrot.slane %v1243, 4
        %v1245 = vrot.slane %v1212, 5
        %v1246 = vsel %vm1002, %v1244, %v1245
        %v1247 = vrot.slane %v1213, 5
        %v1248 = vrot.slane %v1247, 4
        %v1249 = vrot.slane %v1214, 5
        %v1250 = vsel %vm1002, %v1248, %v1249
        %v1251 = vrot.slane %v1215, 5
        %v1252 = vrot.slane %v1251, 4
        %v1253 = vrot.slane %v1216, 5
        %v1254 = vsel %vm1002, %v1252, %v1253
        %v1255 = vrot.slane %v1217, 5
        %v1256 = vrot.slane %v1255, 4
        %v1257 = vrot.slane %v1218, 5
        %v1258 = vsel %vm1002, %v1256, %v1257
        %v1259 = vrot.slane %v1219, 5
        %v1260 = vrot.slane %v1259, 4
        %v1261 = vrot.slane %v1220, 5
        %v1262 = vsel %vm1002, %v1260, %v1261
        %v1263 = vrot.slane %v1221, 5
        %v1264 = vrot.slane %v1263, 4
        %v1265 = vrot.slane %v1222, 5
        %v1266 = vsel %vm1002, %v1264, %v1265
        %v1267 = vrot.slane %v1223, 5
        %v1268 = vrot.slane %v1267, 4
        %v1269 = vrot.slane %v1224, 5
        %v1270 = vsel %vm1002, %v1268, %v1269
        %v1271 = vrot.slane %v1225, 5
        %v1272 = vrot.slane %v1271, 4
        %v1273 = vrot.slane %v1226, 5
        %v1274 = vsel %vm1002, %v1272, %v1273
        %1283 = vst [vmem:[#allocation4 + $0x14] sm:$0xf] %v1246
        %1284 = vst [vmem:[#allocation4 + $0x38] sm:$0xf] %v1250
        %1285 = vst [vmem:[#allocation4 + $0x5c] sm:$0xf] %v1254
        %1286 = vst [vmem:[#allocation4 + $0x80] sm:$0xf] %v1258
        %1287 = vst [vmem:[#allocation4 + $0xa4] sm:$0xf] %v1262
        %1288 = vst [vmem:[#allocation4 + $0xc8] sm:$0xf] %v1266
        %1289 = vst [vmem:[#allocation4 + $0xec] sm:$0xf] %v1270
        %1290 = vst [vmem:[#allocation4 + $0x110] sm:$0xf] %v1274
        %s1291 = scalar_lea.vmem [#allocation3], 16
        %v1292 = vld [vmem:[%s1291] sm:$0xf]
        %v1293 = vld [vmem:[%s1291 + $0x8] sm:$0xf]
        %v1294 = vld [vmem:[%s1291 + $0x10] sm:$0xf]
        %v1295 = vld [vmem:[%s1291 + $0x18] sm:$0xf]
        %v1296 = vld [vmem:[%s1291 + $0x20] sm:$0xf]
        %v1297 = vld [vmem:[%s1291 + $0x28] sm:$0xf]
        %v1298 = vld [vmem:[%s1291 + $0x30] sm:$0xf]
        %v1299 = vld [vmem:[%s1291 + $0x38] sm:$0xf]
        %1300 = vst [vmem:[#allocation4 + $0x18] sm:$0xf] %v1292
        %1301 = vst [vmem:[#allocation4 + $0x3c] sm:$0xf] %v1293
        %1302 = vst [vmem:[#allocation4 + $0x60] sm:$0xf] %v1294
        %1303 = vst [vmem:[#allocation4 + $0x84] sm:$0xf] %v1295
        %1304 = vst [vmem:[#allocation4 + $0xa8] sm:$0xf] %v1296
        %1305 = vst [vmem:[#allocation4 + $0xcc] sm:$0xf] %v1297
        %1306 = vst [vmem:[#allocation4 + $0xf0] sm:$0xf] %v1298
        %1307 = vst [vmem:[#allocation4 + $0x114] sm:$0xf] %v1299
        %v1308 = vld [vmem:[%s1291] sm:$0xf]
        %v1309 = vld [vmem:[%s1291 + $0x4] sm:$0x1]
        %v1310 = vld [vmem:[%s1291 + $0x8] sm:$0xf]
        %v1311 = vld [vmem:[%s1291 + $0xc] sm:$0x1]
        %v1312 = vld [vmem:[%s1291 + $0x10] sm:$0xf]
        %v1313 = vld [vmem:[%s1291 + $0x14] sm:$0x1]
        %v1314 = vld [vmem:[%s1291 + $0x18] sm:$0xf]
        %v1315 = vld [vmem:[%s1291 + $0x1c] sm:$0x1]
        %v1316 = vld [vmem:[%s1291 + $0x20] sm:$0xf]
        %v1317 = vld [vmem:[%s1291 + $0x24] sm:$0x1]
        %v1318 = vld [vmem:[%s1291 + $0x28] sm:$0xf]
        %v1319 = vld [vmem:[%s1291 + $0x2c] sm:$0x1]
        %v1320 = vld [vmem:[%s1291 + $0x30] sm:$0xf]
        %v1321 = vld [vmem:[%s1291 + $0x34] sm:$0x1]
        %v1322 = vld [vmem:[%s1291 + $0x38] sm:$0xf]
        %v1323 = vld [vmem:[%s1291 + $0x3c] sm:$0x1]
        %v1325 = vshrl.u32 %v1308, 16
        %v1327 = vrot.slane %v1325, 4
        %v1328 = vshll.u32 %v1308, 16
        %v1330 = vrot.slane %v1328, 5
        %v1331 = vor.u32 %v1327, %v1330
        %v1332 = vrot.slane %v1331, 4
        %v1334 = vshll.u32 %v1309, 16
        %v1336 = vrot.slane %v1334, 5
        %v1337 = vsel %vm839, %v1332, %v1336
        %v1339 = vshrl.u32 %v1310, 16
        %v1341 = vrot.slane %v1339, 4
        %v1342 = vshll.u32 %v1310, 16
        %v1344 = vrot.slane %v1342, 5
        %v1345 = vor.u32 %v1341, %v1344
        %v1346 = vrot.slane %v1345, 4
        %v1348 = vshll.u32 %v1311, 16
        %v1350 = vrot.slane %v1348, 5
        %v1351 = vsel %vm839, %v1346, %v1350
        %v1353 = vshrl.u32 %v1312, 16
        %v1355 = vrot.slane %v1353, 4
        %v1356 = vshll.u32 %v1312, 16
        %v1358 = vrot.slane %v1356, 5
        %v1359 = vor.u32 %v1355, %v1358
        %v1360 = vrot.slane %v1359, 4
        %v1362 = vshll.u32 %v1313, 16
        %v1364 = vrot.slane %v1362, 5
        %v1365 = vsel %vm839, %v1360, %v1364
        %v1367 = vshrl.u32 %v1314, 16
        %v1369 = vrot.slane %v1367, 4
        %v1370 = vshll.u32 %v1314, 16
        %v1372 = vrot.slane %v1370, 5
        %v1373 = vor.u32 %v1369, %v1372
        %v1374 = vrot.slane %v1373, 4
        %v1376 = vshll.u32 %v1315, 16
        %v1378 = vrot.slane %v1376, 5
        %v1379 = vsel %vm839, %v1374, %v1378
        %v1381 = vshrl.u32 %v1316, 16
        %v1383 = vrot.slane %v1381, 4
        %v1384 = vshll.u32 %v1316, 16
        %v1386 = vrot.slane %v1384, 5
        %v1387 = vor.u32 %v1383, %v1386
        %v1388 = vrot.slane %v1387, 4
        %v1390 = vshll.u32 %v1317, 16
        %v1392 = vrot.slane %v1390, 5
        %v1393 = vsel %vm839, %v1388, %v1392
        %v1395 = vshrl.u32 %v1318, 16
        %v1397 = vrot.slane %v1395, 4
        %v1398 = vshll.u32 %v1318, 16
        %v1400 = vrot.slane %v1398, 5
        %v1401 = vor.u32 %v1397, %v1400
        %v1402 = vrot.slane %v1401, 4
        %v1404 = vshll.u32 %v1319, 16
        %v1406 = vrot.slane %v1404, 5
        %v1407 = vsel %vm839, %v1402, %v1406
        %v1409 = vshrl.u32 %v1320, 16
        %v1411 = vrot.slane %v1409, 4
        %v1412 = vshll.u32 %v1320, 16
        %v1414 = vrot.slane %v1412, 5
        %v1415 = vor.u32 %v1411, %v1414
        %v1416 = vrot.slane %v1415, 4
        %v1418 = vshll.u32 %v1321, 16
        %v1420 = vrot.slane %v1418, 5
        %v1421 = vsel %vm839, %v1416, %v1420
        %v1423 = vshrl.u32 %v1322, 16
        %v1425 = vrot.slane %v1423, 4
        %v1426 = vshll.u32 %v1322, 16
        %v1428 = vrot.slane %v1426, 5
        %v1429 = vor.u32 %v1425, %v1428
        %v1430 = vrot.slane %v1429, 4
        %v1432 = vshll.u32 %v1323, 16
        %v1434 = vrot.slane %v1432, 5
        %v1435 = vsel %vm839, %v1430, %v1434
        %1444 = vst [vmem:[#allocation4 + $0x1c] sm:$0xf] %v1337
        %1445 = vst [vmem:[#allocation4 + $0x40] sm:$0xf] %v1351
        %1446 = vst [vmem:[#allocation4 + $0x64] sm:$0xf] %v1365
        %1447 = vst [vmem:[#allocation4 + $0x88] sm:$0xf] %v1379
        %1448 = vst [vmem:[#allocation4 + $0xac] sm:$0xf] %v1393
        %1449 = vst [vmem:[#allocation4 + $0xd0] sm:$0xf] %v1407
        %1450 = vst [vmem:[#allocation4 + $0xf4] sm:$0xf] %v1421
        %1451 = vst [vmem:[#allocation4 + $0x118] sm:$0xf] %v1435
        %v1452 = vld [vmem:[%s1291] sm:$0xe]
        %v1453 = vld [vmem:[%s1291 + $0x4] sm:$0x1]
        %v1454 = vld [vmem:[%s1291 + $0x8] sm:$0xe]
        %v1455 = vld [vmem:[%s1291 + $0xc] sm:$0x1]
        %v1456 = vld [vmem:[%s1291 + $0x10] sm:$0xe]
        %v1457 = vld [vmem:[%s1291 + $0x14] sm:$0x1]
        %v1458 = vld [vmem:[%s1291 + $0x18] sm:$0xe]
        %v1459 = vld [vmem:[%s1291 + $0x1c] sm:$0x1]
        %v1460 = vld [vmem:[%s1291 + $0x20] sm:$0xe]
        %v1461 = vld [vmem:[%s1291 + $0x24] sm:$0x1]
        %v1462 = vld [vmem:[%s1291 + $0x28] sm:$0xe]
        %v1463 = vld [vmem:[%s1291 + $0x2c] sm:$0x1]
        %v1464 = vld [vmem:[%s1291 + $0x30] sm:$0xe]
        %v1465 = vld [vmem:[%s1291 + $0x34] sm:$0x1]
        %v1466 = vld [vmem:[%s1291 + $0x38] sm:$0xe]
        %v1467 = vld [vmem:[%s1291 + $0x3c] sm:$0x1]
        %v1484 = vrot.slane %v1452, 5
        %v1485 = vrot.slane %v1484, 4
        %v1486 = vrot.slane %v1453, 5
        %v1487 = vsel %vm1002, %v1485, %v1486
        %v1488 = vrot.slane %v1454, 5
        %v1489 = vrot.slane %v1488, 4
        %v1490 = vrot.slane %v1455, 5
        %v1491 = vsel %vm1002, %v1489, %v1490
        %v1492 = vrot.slane %v1456, 5
        %v1493 = vrot.slane %v1492, 4
        %v1494 = vrot.slane %v1457, 5
        %v1495 = vsel %vm1002, %v1493, %v1494
        %v1496 = vrot.slane %v1458, 5
        %v1497 = vrot.slane %v1496, 4
        %v1498 = vrot.slane %v1459, 5
        %v1499 = vsel %vm1002, %v1497, %v1498
        %v1500 = vrot.slane %v1460, 5
        %v1501 = vrot.slane %v1500, 4
        %v1502 = vrot.slane %v1461, 5
        %v1503 = vsel %vm1002, %v1501, %v1502
        %v1504 = vrot.slane %v1462, 5
        %v1505 = vrot.slane %v1504, 4
        %v1506 = vrot.slane %v1463, 5
        %v1507 = vsel %vm1002, %v1505, %v1506
        %v1508 = vrot.slane %v1464, 5
        %v1509 = vrot.slane %v1508, 4
        %v1510 = vrot.slane %v1465, 5
        %v1511 = vsel %vm1002, %v1509, %v1510
        %v1512 = vrot.slane %v1466, 5
        %v1513 = vrot.slane %v1512, 4
        %v1514 = vrot.slane %v1467, 5
        %v1515 = vsel %vm1002, %v1513, %v1514
        %1524 = vst [vmem:[#allocation4 + $0x20] sm:$0xf] %v1487
        %1525 = vst [vmem:[#allocation4 + $0x44] sm:$0xf] %v1491
        %1526 = vst [vmem:[#allocation4 + $0x68] sm:$0xf] %v1495
        %1527 = vst [vmem:[#allocation4 + $0x8c] sm:$0xf] %v1499
        %1528 = vst [vmem:[#allocation4 + $0xb0] sm:$0xf] %v1503
        %1529 = vst [vmem:[#allocation4 + $0xd4] sm:$0xf] %v1507
        %1530 = vst [vmem:[#allocation4 + $0xf8] sm:$0xf] %v1511
        %1531 = vst [vmem:[#allocation4 + $0x11c] sm:$0xf] %v1515
        %v1532 = vld [vmem:[#allocation4] sm:$0xff]
        %v1533 = vld [vmem:[#allocation4 + $0x8] sm:$0xff]
        %v1534 = vld [vmem:[#allocation4 + $0x10] sm:$0xff]
        %v1535 = vld [vmem:[#allocation4 + $0x18] sm:$0xff]
        %v1536 = vld [vmem:[#allocation4 + $0x20] sm:$0xf]
        %v1537 = vld [vmem:[#allocation4 + $0x24] sm:$0xff]
        %v1538 = vld [vmem:[#allocation4 + $0x2c] sm:$0xff]
        %v1539 = vld [vmem:[#allocation4 + $0x34] sm:$0xff]
        %v1540 = vld [vmem:[#allocation4 + $0x3c] sm:$0xff]
        %v1541 = vld [vmem:[#allocation4 + $0x44] sm:$0xf]
        %v1542 = vld [vmem:[#allocation4 + $0x48] sm:$0xff]
        %v1543 = vld [vmem:[#allocation4 + $0x50] sm:$0xff]
        %v1544 = vld [vmem:[#allocation4 + $0x58] sm:$0xff]
        %v1545 = vld [vmem:[#allocation4 + $0x60] sm:$0xff]
        %v1546 = vld [vmem:[#allocation4 + $0x68] sm:$0xf]
        %v1547 = vld [vmem:[#allocation4 + $0x6c] sm:$0xff]
        %v1548 = vld [vmem:[#allocation4 + $0x74] sm:$0xff]
        %v1549 = vld [vmem:[#allocation4 + $0x7c] sm:$0xff]
        %v1550 = vld [vmem:[#allocation4 + $0x84] sm:$0xff]
        %v1551 = vld [vmem:[#allocation4 + $0x8c] sm:$0xf]
        %v1552 = vld [vmem:[#allocation4 + $0x90] sm:$0xff]
        %v1553 = vld [vmem:[#allocation4 + $0x98] sm:$0xff]
        %v1554 = vld [vmem:[#allocation4 + $0xa0] sm:$0xff]
        %v1555 = vld [vmem:[#allocation4 + $0xa8] sm:$0xff]
        %v1556 = vld [vmem:[#allocation4 + $0xb0] sm:$0xf]
        %v1557 = vld [vmem:[#allocation4 + $0xb4] sm:$0xff]
        %v1558 = vld [vmem:[#allocation4 + $0xbc] sm:$0xff]
        %v1559 = vld [vmem:[#allocation4 + $0xc4] sm:$0xff]
        %v1560 = vld [vmem:[#allocation4 + $0xcc] sm:$0xff]
        %v1561 = vld [vmem:[#allocation4 + $0xd4] sm:$0xf]
        %v1562 = vld [vmem:[#allocation4 + $0xd8] sm:$0xff]
        %v1563 = vld [vmem:[#allocation4 + $0xe0] sm:$0xff]
        %v1564 = vld [vmem:[#allocation4 + $0xe8] sm:$0xff]
        %v1565 = vld [vmem:[#allocation4 + $0xf0] sm:$0xff]
        %v1566 = vld [vmem:[#allocation4 + $0xf8] sm:$0xf]
        %v1567 = vld [vmem:[#allocation4 + $0xfc] sm:$0xff]
        %v1568 = vld [vmem:[#allocation4 + $0x104] sm:$0xff]
        %v1569 = vld [vmem:[#allocation4 + $0x10c] sm:$0xff]
        %v1570 = vld [vmem:[#allocation4 + $0x114] sm:$0xff]
        %v1571 = vld [vmem:[#allocation4 + $0x11c] sm:$0xf]
        %v1612 = vunpack.c.l.b16 %v1532
        %v1613 = vunpack.c.h.b16 %v1532
        %v1614 = vunpack.c.l.b16 %v1533
        %v1615 = vunpack.c.h.b16 %v1533
        %v1616 = vunpack.c.l.b16 %v1534
        %v1617 = vunpack.c.h.b16 %v1534
        %v1618 = vunpack.c.l.b16 %v1535
        %v1619 = vunpack.c.h.b16 %v1535
        %v1620 = vunpack.c.l.b16 %v1536
        %v1621 = vunpack.c.l.b16 %v1537
        %v1622 = vunpack.c.h.b16 %v1537
        %v1623 = vunpack.c.l.b16 %v1538
        %v1624 = vunpack.c.h.b16 %v1538
        %v1625 = vunpack.c.l.b16 %v1539
        %v1626 = vunpack.c.h.b16 %v1539
        %v1627 = vunpack.c.l.b16 %v1540
        %v1628 = vunpack.c.h.b16 %v1540
        %v1629 = vunpack.c.l.b16 %v1541
        %v1630 = vunpack.c.l.b16 %v1542
        %v1631 = vunpack.c.h.b16 %v1542
        %v1632 = vunpack.c.l.b16 %v1543
        %v1633 = vunpack.c.h.b16 %v1543
        %v1634 = vunpack.c.l.b16 %v1544
        %v1635 = vunpack.c.h.b16 %v1544
        %v1636 = vunpack.c.l.b16 %v1545
        %v1637 = vunpack.c.h.b16 %v1545
        %v1638 = vunpack.c.l.b16 %v1546
        %v1639 = vunpack.c.l.b16 %v1547
        %v1640 = vunpack.c.h.b16 %v1547
        %v1641 = vunpack.c.l.b16 %v1548
        %v1642 = vunpack.c.h.b16 %v1548
        %v1643 = vunpack.c.l.b16 %v1549
        %v1644 = vunpack.c.h.b16 %v1549
        %v1645 = vunpack.c.l.b16 %v1550
        %v1646 = vunpack.c.h.b16 %v1550
        %v1647 = vunpack.c.l.b16 %v1551
        %v1648 = vunpack.c.l.b16 %v1552
        %v1649 = vunpack.c.h.b16 %v1552
        %v1650 = vunpack.c.l.b16 %v1553
        %v1651 = vunpack.c.h.b16 %v1553
        %v1652 = vunpack.c.l.b16 %v1554
        %v1653 = vunpack.c.h.b16 %v1554
        %v1654 = vunpack.c.l.b16 %v1555
        %v1655 = vunpack.c.h.b16 %v1555
        %v1656 = vunpack.c.l.b16 %v1556
        %v1657 = vunpack.c.l.b16 %v1557
        %v1658 = vunpack.c.h.b16 %v1557
        %v1659 = vunpack.c.l.b16 %v1558
        %v1660 = vunpack.c.h.b16 %v1558
        %v1661 = vunpack.c.l.b16 %v1559
        %v1662 = vunpack.c.h.b16 %v1559
        %v1663 = vunpack.c.l.b16 %v1560
        %v1664 = vunpack.c.h.b16 %v1560
        %v1665 = vunpack.c.l.b16 %v1561
        %v1666 = vunpack.c.l.b16 %v1562
        %v1667 = vunpack.c.h.b16 %v1562
        %v1668 = vunpack.c.l.b16 %v1563
        %v1669 = vunpack.c.h.b16 %v1563
        %v1670 = vunpack.c.l.b16 %v1564
        %v1671 = vunpack.c.h.b16 %v1564
        %v1672 = vunpack.c.l.b16 %v1565
        %v1673 = vunpack.c.h.b16 %v1565
        %v1674 = vunpack.c.l.b16 %v1566
        %v1675 = vunpack.c.l.b16 %v1567
        %v1676 = vunpack.c.h.b16 %v1567
        %v1677 = vunpack.c.l.b16 %v1568
        %v1678 = vunpack.c.h.b16 %v1568
        %v1679 = vunpack.c.l.b16 %v1569
        %v1680 = vunpack.c.h.b16 %v1569
        %v1681 = vunpack.c.l.b16 %v1570
        %v1682 = vunpack.c.h.b16 %v1570
        %v1683 = vunpack.c.l.b16 %v1571
        %v1684 = vpack.c.b16 %v1621, %v1612
        %v1685 = vpack.c.b16 %v1622, %v1613
        %v1686 = vpack.c.b16 %v1623, %v1614
        %v1687 = vpack.c.b16 %v1624, %v1615
        %v1688 = vpack.c.b16 %v1625, %v1616
        %v1689 = vpack.c.b16 %v1626, %v1617
        %v1690 = vpack.c.b16 %v1627, %v1618
        %v1691 = vpack.c.b16 %v1628, %v1619
        %v1692 = vpack.c.b16 %v1629, %v1620
        %v1693 = vpack.c.b16 %v1639, %v1630
        %v1694 = vpack.c.b16 %v1640, %v1631
        %v1695 = vpack.c.b16 %v1641, %v1632
        %v1696 = vpack.c.b16 %v1642, %v1633
        %v1697 = vpack.c.b16 %v1643, %v1634
        %v1698 = vpack.c.b16 %v1644, %v1635
        %v1699 = vpack.c.b16 %v1645, %v1636
        %v1700 = vpack.c.b16 %v1646, %v1637
        %v1701 = vpack.c.b16 %v1647, %v1638
        %v1702 = vpack.c.b16 %v1657, %v1648
        %v1703 = vpack.c.b16 %v1658, %v1649
        %v1704 = vpack.c.b16 %v1659, %v1650
        %v1705 = vpack.c.b16 %v1660, %v1651
        %v1706 = vpack.c.b16 %v1661, %v1652
        %v1707 = vpack.c.b16 %v1662, %v1653
        %v1708 = vpack.c.b16 %v1663, %v1654
        %v1709 = vpack.c.b16 %v1664, %v1655
        %v1710 = vpack.c.b16 %v1665, %v1656
        %v1711 = vpack.c.b16 %v1675, %v1666
        %v1712 = vpack.c.b16 %v1676, %v1667
        %v1713 = vpack.c.b16 %v1677, %v1668
        %v1714 = vpack.c.b16 %v1678, %v1669
        %v1715 = vpack.c.b16 %v1679, %v1670
        %v1716 = vpack.c.b16 %v1680, %v1671
        %v1717 = vpack.c.b16 %v1681, %v1672
        %v1718 = vpack.c.b16 %v1682, %v1673
        %v1719 = vpack.c.b16 %v1683, %v1674
        %v1900 = vunpack.c.l.b16 %v361
        %v1901 = vunpack.c.l.b16 %v362
        %v1902 = vunpack.c.l.b16 %v363
        %v1903 = vunpack.c.l.b16 %v364
        %v1904 = vunpack.c.l.b16 %v365
        %v1905 = vunpack.c.l.b16 %v366
        %v1906 = vunpack.c.l.b16 %v367
        %v1907 = vunpack.c.l.b16 %v368
        %v1908 = vunpack.c.l.b16 %v369
        %v1909 = vunpack.c.l.b16 %v370
        %v1910 = vunpack.c.l.b16 %v371
        %v1911 = vunpack.c.l.b16 %v372
        %v1912 = vunpack.c.l.b16 %v373
        %v1913 = vunpack.c.l.b16 %v374
        %v1914 = vunpack.c.l.b16 %v375
        %v1915 = vunpack.c.l.b16 %v376
        %v1916 = vunpack.c.l.b16 %v377
        %v1917 = vunpack.c.l.b16 %v378
        %v1918 = vunpack.c.l.b16 %v379
        %v1919 = vunpack.c.l.b16 %v380
        %v1920 = vunpack.c.l.b16 %v381
        %v1921 = vunpack.c.l.b16 %v382
        %v1922 = vunpack.c.l.b16 %v383
        %v1923 = vunpack.c.l.b16 %v384
        %v1924 = vunpack.c.l.b16 %v385
        %v1925 = vunpack.c.l.b16 %v386
        %v1926 = vunpack.c.l.b16 %v387
        %v1927 = vunpack.c.l.b16 %v388
        %v1928 = vunpack.c.l.b16 %v389
        %v1929 = vunpack.c.l.b16 %v390
        %v1930 = vunpack.c.l.b16 %v391
        %v1931 = vunpack.c.l.b16 %v392
        %v1932 = vunpack.c.l.b16 %v393
        %v1933 = vunpack.c.l.b16 %v394
        %v1934 = vunpack.c.l.b16 %v395
        %v1935 = vunpack.c.l.b16 %v396
        %v1936 = vunpack.c.l.b16 %v397
        %v1937 = vunpack.c.l.b16 %v398
        %v1938 = vunpack.c.l.b16 %v399
        %v1939 = vunpack.c.l.b16 %v400
        %v1940 = vunpack.c.l.b16 %v401
        %v1941 = vunpack.c.l.b16 %v402
        %v1942 = vunpack.c.l.b16 %v403
        %v1943 = vunpack.c.l.b16 %v404
        %v1944 = vunpack.c.l.b16 %v405
        %v1945 = vunpack.c.l.b16 %v406
        %v1946 = vunpack.c.l.b16 %v407
        %v1947 = vunpack.c.l.b16 %v408
        %v1948 = vunpack.c.l.b16 %v409
        %v1949 = vunpack.c.l.b16 %v410
        %v1950 = vunpack.c.l.b16 %v411
        %v1951 = vunpack.c.l.b16 %v412
        %v1952 = vunpack.c.l.b16 %v413
        %v1953 = vunpack.c.l.b16 %v414
        %v1954 = vunpack.c.l.b16 %v415
        %v1955 = vunpack.c.l.b16 %v416
        %v1956 = vunpack.c.l.b16 %v417
        %v1957 = vunpack.c.l.b16 %v418
        %v1958 = vunpack.c.l.b16 %v419
        %v1959 = vunpack.c.l.b16 %v420
        %v1960 = vunpack.c.l.b16 %v421
        %v1961 = vunpack.c.l.b16 %v422
        %v1962 = vunpack.c.l.b16 %v423
        %v1963 = vunpack.c.l.b16 %v424
        %v1964 = vunpack.c.l.b16 %v425
        %v1965 = vunpack.c.l.b16 %v426
        %v1966 = vunpack.c.l.b16 %v427
        %v1967 = vunpack.c.l.b16 %v428
        %v1968 = vunpack.c.l.b16 %v429
        %v1969 = vunpack.c.l.b16 %v430
        %v1970 = vunpack.c.l.b16 %v431
        %v1971 = vunpack.c.l.b16 %v432
        %v1972 = vunpack.c.l.b16 %v433
        %v1973 = vunpack.c.l.b16 %v434
        %v1974 = vunpack.c.l.b16 %v435
        %v1975 = vunpack.c.l.b16 %v436
        %v1976 = vunpack.c.l.b16 %v437
        %v1977 = vunpack.c.l.b16 %v438
        %v1978 = vunpack.c.l.b16 %v439
        %v1979 = vunpack.c.l.b16 %v440
        %v1980 = vunpack.c.l.b16 %v441
        %v1981 = vunpack.c.l.b16 %v442
        %v1982 = vunpack.c.l.b16 %v443
        %v1983 = vunpack.c.l.b16 %v444
        %v1984 = vunpack.c.l.b16 %v445
        %v1985 = vunpack.c.l.b16 %v446
        %v1986 = vunpack.c.l.b16 %v447
        %v1987 = vunpack.c.l.b16 %v448
        %v1988 = vunpack.c.l.b16 %v449
        %v1989 = vunpack.c.l.b16 %v450
        %v1990 = vunpack.c.l.b16 %v451
        %v1991 = vunpack.c.l.b16 %v452
        %v1992 = vunpack.c.l.b16 %v453
        %v1993 = vunpack.c.l.b16 %v454
        %v1994 = vunpack.c.l.b16 %v455
        %v1995 = vunpack.c.l.b16 %v456
        %v1996 = vunpack.c.l.b16 %v457
        %v1997 = vunpack.c.l.b16 %v458
        %v1998 = vunpack.c.l.b16 %v459
        %v1999 = vunpack.c.l.b16 %v460
        %v2000 = vunpack.c.l.b16 %v461
        %v2001 = vunpack.c.l.b16 %v462
        %v2002 = vunpack.c.l.b16 %v463
        %v2003 = vunpack.c.l.b16 %v464
        %v2004 = vunpack.c.l.b16 %v465
        %v2005 = vunpack.c.l.b16 %v466
        %v2006 = vunpack.c.l.b16 %v467
        %v2007 = vunpack.c.l.b16 %v468
        %v2008 = vunpack.c.l.b16 %v469
        %v2009 = vunpack.c.l.b16 %v470
        %v2010 = vunpack.c.l.b16 %v471
        %v2011 = vunpack.c.l.b16 %v472
        %v2012 = vunpack.c.l.b16 %v473
        %v2013 = vunpack.c.l.b16 %v474
        %v2014 = vunpack.c.l.b16 %v475
        %v2015 = vunpack.c.l.b16 %v476
        %v2016 = vunpack.c.l.b16 %v477
        %v2017 = vunpack.c.l.b16 %v478
        %v2018 = vunpack.c.l.b16 %v479
        %v2019 = vunpack.c.l.b16 %v480
        %v2020 = vunpack.c.l.b16 %v481
        %v2021 = vunpack.c.l.b16 %v482
        %v2022 = vunpack.c.l.b16 %v483
        %v2023 = vunpack.c.l.b16 %v484
        %v2024 = vunpack.c.l.b16 %v485
        %v2025 = vunpack.c.l.b16 %v486
        %v2026 = vunpack.c.l.b16 %v487
        %v2027 = vunpack.c.l.b16 %v488
        %v2028 = vunpack.c.l.b16 %v489
        %v2029 = vunpack.c.l.b16 %v490
        %v2030 = vunpack.c.l.b16 %v491
        %v2031 = vunpack.c.l.b16 %v492
        %v2032 = vunpack.c.l.b16 %v493
        %v2033 = vunpack.c.l.b16 %v494
        %v2034 = vunpack.c.l.b16 %v495
        %v2035 = vunpack.c.l.b16 %v496
        %v2036 = vunpack.c.l.b16 %v497
        %v2037 = vunpack.c.l.b16 %v498
        %v2038 = vunpack.c.l.b16 %v499
        %v2039 = vunpack.c.l.b16 %v500
        %v2040 = vunpack.c.l.b16 %v501
        %v2041 = vunpack.c.l.b16 %v502
        %v2042 = vunpack.c.l.b16 %v503
        %v2043 = vunpack.c.l.b16 %v504
        %v2044 = vpack.c.b16 %v1901, %v1900
        %v2045 = vpack.c.b16 %v1903, %v1902
        %v2046 = vpack.c.b16 %v1905, %v1904
        %v2047 = vpack.c.b16 %v1907, %v1906
        %v2048 = vpack.c.b16 %v1909, %v1908
        %v2049 = vpack.c.b16 %v1911, %v1910
        %v2050 = vpack.c.b16 %v1913, %v1912
        %v2051 = vpack.c.b16 %v1915, %v1914
        %v2052 = vpack.c.b16 %v1917, %v1916
        %v2053 = vpack.c.b16 %v1919, %v1918
        %v2054 = vpack.c.b16 %v1921, %v1920
        %v2055 = vpack.c.b16 %v1923, %v1922
        %v2056 = vpack.c.b16 %v1925, %v1924
        %v2057 = vpack.c.b16 %v1927, %v1926
        %v2058 = vpack.c.b16 %v1929, %v1928
        %v2059 = vpack.c.b16 %v1931, %v1930
        %v2060 = vpack.c.b16 %v1933, %v1932
        %v2061 = vpack.c.b16 %v1935, %v1934
        %v2062 = vpack.c.b16 %v1937, %v1936
        %v2063 = vpack.c.b16 %v1939, %v1938
        %v2064 = vpack.c.b16 %v1941, %v1940
        %v2065 = vpack.c.b16 %v1943, %v1942
        %v2066 = vpack.c.b16 %v1945, %v1944
        %v2067 = vpack.c.b16 %v1947, %v1946
        %v2068 = vpack.c.b16 %v1949, %v1948
        %v2069 = vpack.c.b16 %v1951, %v1950
        %v2070 = vpack.c.b16 %v1953, %v1952
        %v2071 = vpack.c.b16 %v1955, %v1954
        %v2072 = vpack.c.b16 %v1957, %v1956
        %v2073 = vpack.c.b16 %v1959, %v1958
        %v2074 = vpack.c.b16 %v1961, %v1960
        %v2075 = vpack.c.b16 %v1963, %v1962
        %v2076 = vpack.c.b16 %v1965, %v1964
        %v2077 = vpack.c.b16 %v1967, %v1966
        %v2078 = vpack.c.b16 %v1969, %v1968
        %v2079 = vpack.c.b16 %v1971, %v1970
        %v2080 = vpack.c.b16 %v1973, %v1972
        %v2081 = vpack.c.b16 %v1975, %v1974
        %v2082 = vpack.c.b16 %v1977, %v1976
        %v2083 = vpack.c.b16 %v1979, %v1978
        %v2084 = vpack.c.b16 %v1981, %v1980
        %v2085 = vpack.c.b16 %v1983, %v1982
        %v2086 = vpack.c.b16 %v1985, %v1984
        %v2087 = vpack.c.b16 %v1987, %v1986
        %v2088 = vpack.c.b16 %v1989, %v1988
        %v2089 = vpack.c.b16 %v1991, %v1990
        %v2090 = vpack.c.b16 %v1993, %v1992
        %v2091 = vpack.c.b16 %v1995, %v1994
        %v2092 = vpack.c.b16 %v1997, %v1996
        %v2093 = vpack.c.b16 %v1999, %v1998
        %v2094 = vpack.c.b16 %v2001, %v2000
        %v2095 = vpack.c.b16 %v2003, %v2002
        %v2096 = vpack.c.b16 %v2005, %v2004
        %v2097 = vpack.c.b16 %v2007, %v2006
        %v2098 = vpack.c.b16 %v2009, %v2008
        %v2099 = vpack.c.b16 %v2011, %v2010
        %v2100 = vpack.c.b16 %v2013, %v2012
        %v2101 = vpack.c.b16 %v2015, %v2014
        %v2102 = vpack.c.b16 %v2017, %v2016
        %v2103 = vpack.c.b16 %v2019, %v2018
        %v2104 = vpack.c.b16 %v2021, %v2020
        %v2105 = vpack.c.b16 %v2023, %v2022
        %v2106 = vpack.c.b16 %v2025, %v2024
        %v2107 = vpack.c.b16 %v2027, %v2026
        %v2108 = vpack.c.b16 %v2029, %v2028
        %v2109 = vpack.c.b16 %v2031, %v2030
        %v2110 = vpack.c.b16 %v2033, %v2032
        %v2111 = vpack.c.b16 %v2035, %v2034
        %v2112 = vpack.c.b16 %v2037, %v2036
        %v2113 = vpack.c.b16 %v2039, %v2038
        %v2114 = vpack.c.b16 %v2041, %v2040
        %v2115 = vpack.c.b16 %v2043, %v2042
        %2188 = vmatpush.bf16.msra.mxu0 %v2051
        %2189 = vmatpush.bf16.msra.mxu0 %v2050
        %2190 = vmatpush.bf16.msra.mxu0 %v2049
        %2191 = vmatpush.bf16.msra.mxu0 %v2048
        %2192 = vmatpush.bf16.msra.mxu0 %v2047
        %2193 = vmatpush.bf16.msra.mxu0 %v2046
        %2194 = vmatpush.bf16.msra.mxu0 %v2045
        %2195 = vmatpush.bf16.msra.mxu0 %v2044
        %2196 = vmatmul.bf16.gmra.mxu0 %v1684
        %v2197 = vpop.f32.mrf.mxu0
        %v2198 = vadd.f32 0.0, %v2197
        %v2199 = vpop.f32.mrf.mxu0
        %v2200 = vadd.f32 0.0, %v2199
        %2201 = vmatmul.bf16.gmra.mxu0 %v1693
        %v2202 = vpop.f32.mrf.mxu0
        %v2203 = vadd.f32 0.0, %v2202
        %v2204 = vpop.f32.mrf.mxu0
        %v2205 = vadd.f32 0.0, %v2204
        %2206 = vmatmul.bf16.gmra.mxu0 %v1702
        %v2207 = vpop.f32.mrf.mxu0
        %v2208 = vadd.f32 0.0, %v2207
        %v2209 = vpop.f32.mrf.mxu0
        %v2210 = vadd.f32 0.0, %v2209
        %2211 = vmatmul.bf16.gmra.mxu0 %v1711
        %v2212 = vpop.f32.mrf.mxu0
        %v2213 = vadd.f32 0.0, %v2212
        %v2214 = vpop.f32.mrf.mxu0
        %v2215 = vadd.f32 0.0, %v2214
        %2216 = vdwg.mxu0
        %2217 = vmatpush.bf16.msra.mxu0 %v2059
        %2218 = vmatpush.bf16.msra.mxu0 %v2058
        %2219 = vmatpush.bf16.msra.mxu0 %v2057
        %2220 = vmatpush.bf16.msra.mxu0 %v2056
        %2221 = vmatpush.bf16.msra.mxu0 %v2055
        %2222 = vmatpush.bf16.msra.mxu0 %v2054
        %2223 = vmatpush.bf16.msra.mxu0 %v2053
        %2224 = vmatpush.bf16.msra.mxu0 %v2052
        %2225 = vmatmul.bf16.gmra.mxu0 %v1685
        %v2226 = vpop.f32.mrf.mxu0
        %v2227 = vadd.f32 %v2198, %v2226
        %v2228 = vpop.f32.mrf.mxu0
        %v2229 = vadd.f32 %v2200, %v2228
        %2230 = vmatmul.bf16.gmra.mxu0 %v1694
        %v2231 = vpop.f32.mrf.mxu0
        %v2232 = vadd.f32 %v2203, %v2231
        %v2233 = vpop.f32.mrf.mxu0
        %v2234 = vadd.f32 %v2205, %v2233
        %2235 = vmatmul.bf16.gmra.mxu0 %v1703
        %v2236 = vpop.f32.mrf.mxu0
        %v2237 = vadd.f32 %v2208, %v2236
        %v2238 = vpop.f32.mrf.mxu0
        %v2239 = vadd.f32 %v2210, %v2238
        %2240 = vmatmul.bf16.gmra.mxu0 %v1712
        %v2241 = vpop.f32.mrf.mxu0
        %v2242 = vadd.f32 %v2213, %v2241
        %v2243 = vpop.f32.mrf.mxu0
        %v2244 = vadd.f32 %v2215, %v2243
        %2245 = vdwg.mxu0
        %2246 = vmatpush.bf16.msra.mxu0 %v2067
        %2247 = vmatpush.bf16.msra.mxu0 %v2066
        %2248 = vmatpush.bf16.msra.mxu0 %v2065
        %2249 = vmatpush.bf16.msra.mxu0 %v2064
        %2250 = vmatpush.bf16.msra.mxu0 %v2063
        %2251 = vmatpush.bf16.msra.mxu0 %v2062
        %2252 = vmatpush.bf16.msra.mxu0 %v2061
        %2253 = vmatpush.bf16.msra.mxu0 %v2060
        %2254 = vmatmul.bf16.gmra.mxu0 %v1686
        %v2255 = vpop.f32.mrf.mxu0
        %v2256 = vadd.f32 %v2227, %v2255
        %v2257 = vpop.f32.mrf.mxu0
        %v2258 = vadd.f32 %v2229, %v2257
        %2259 = vmatmul.bf16.gmra.mxu0 %v1695
        %v2260 = vpop.f32.mrf.mxu0
        %v2261 = vadd.f32 %v2232, %v2260
        %v2262 = vpop.f32.mrf.mxu0
        %v2263 = vadd.f32 %v2234, %v2262
        %2264 = vmatmul.bf16.gmra.mxu0 %v1704
        %v2265 = vpop.f32.mrf.mxu0
        %v2266 = vadd.f32 %v2237, %v2265
        %v2267 = vpop.f32.mrf.mxu0
        %v2268 = vadd.f32 %v2239, %v2267
        %2269 = vmatmul.bf16.gmra.mxu0 %v1713
        %v2270 = vpop.f32.mrf.mxu0
        %v2271 = vadd.f32 %v2242, %v2270
        %v2272 = vpop.f32.mrf.mxu0
        %v2273 = vadd.f32 %v2244, %v2272
        %2274 = vdwg.mxu0
        %2275 = vmatpush.bf16.msra.mxu0 %v2075
        %2276 = vmatpush.bf16.msra.mxu0 %v2074
        %2277 = vmatpush.bf16.msra.mxu0 %v2073
        %2278 = vmatpush.bf16.msra.mxu0 %v2072
        %2279 = vmatpush.bf16.msra.mxu0 %v2071
        %2280 = vmatpush.bf16.msra.mxu0 %v2070
        %2281 = vmatpush.bf16.msra.mxu0 %v2069
        %2282 = vmatpush.bf16.msra.mxu0 %v2068
        %2283 = vmatmul.bf16.gmra.mxu0 %v1687
        %v2284 = vpop.f32.mrf.mxu0
        %v2285 = vadd.f32 %v2256, %v2284
        %v2286 = vpop.f32.mrf.mxu0
        %v2287 = vadd.f32 %v2258, %v2286
        %2288 = vmatmul.bf16.gmra.mxu0 %v1696
        %v2289 = vpop.f32.mrf.mxu0
        %v2290 = vadd.f32 %v2261, %v2289
        %v2291 = vpop.f32.mrf.mxu0
        %v2292 = vadd.f32 %v2263, %v2291
        %2293 = vmatmul.bf16.gmra.mxu0 %v1705
        %v2294 = vpop.f32.mrf.mxu0
        %v2295 = vadd.f32 %v2266, %v2294
        %v2296 = vpop.f32.mrf.mxu0
        %v2297 = vadd.f32 %v2268, %v2296
        %2298 = vmatmul.bf16.gmra.mxu0 %v1714
        %v2299 = vpop.f32.mrf.mxu0
        %v2300 = vadd.f32 %v2271, %v2299
        %v2301 = vpop.f32.mrf.mxu0
        %v2302 = vadd.f32 %v2273, %v2301
        %2303 = vdwg.mxu0
        %2304 = vmatpush.bf16.msra.mxu0 %v2083
        %2305 = vmatpush.bf16.msra.mxu0 %v2082
        %2306 = vmatpush.bf16.msra.mxu0 %v2081
        %2307 = vmatpush.bf16.msra.mxu0 %v2080
        %2308 = vmatpush.bf16.msra.mxu0 %v2079
        %2309 = vmatpush.bf16.msra.mxu0 %v2078
        %2310 = vmatpush.bf16.msra.mxu0 %v2077
        %2311 = vmatpush.bf16.msra.mxu0 %v2076
        %2312 = vmatmul.bf16.gmra.mxu0 %v1688
        %v2313 = vpop.f32.mrf.mxu0
        %v2314 = vadd.f32 %v2285, %v2313
        %v2315 = vpop.f32.mrf.mxu0
        %v2316 = vadd.f32 %v2287, %v2315
        %2317 = vmatmul.bf16.gmra.mxu0 %v1697
        %v2318 = vpop.f32.mrf.mxu0
        %v2319 = vadd.f32 %v2290, %v2318
        %v2320 = vpop.f32.mrf.mxu0
        %v2321 = vadd.f32 %v2292, %v2320
        %2322 = vmatmul.bf16.gmra.mxu0 %v1706
        %v2323 = vpop.f32.mrf.mxu0
        %v2324 = vadd.f32 %v2295, %v2323
        %v2325 = vpop.f32.mrf.mxu0
        %v2326 = vadd.f32 %v2297, %v2325
        %2327 = vmatmul.bf16.gmra.mxu0 %v1715
        %v2328 = vpop.f32.mrf.mxu0
        %v2329 = vadd.f32 %v2300, %v2328
        %v2330 = vpop.f32.mrf.mxu0
        %v2331 = vadd.f32 %v2302, %v2330
        %2332 = vdwg.mxu0
        %2333 = vmatpush.bf16.msra.mxu0 %v2091
        %2334 = vmatpush.bf16.msra.mxu0 %v2090
        %2335 = vmatpush.bf16.msra.mxu0 %v2089
        %2336 = vmatpush.bf16.msra.mxu0 %v2088
        %2337 = vmatpush.bf16.msra.mxu0 %v2087
        %2338 = vmatpush.bf16.msra.mxu0 %v2086
        %2339 = vmatpush.bf16.msra.mxu0 %v2085
        %2340 = vmatpush.bf16.msra.mxu0 %v2084
        %2341 = vmatmul.bf16.gmra.mxu0 %v1689
        %v2342 = vpop.f32.mrf.mxu0
        %v2343 = vadd.f32 %v2314, %v2342
        %v2344 = vpop.f32.mrf.mxu0
        %v2345 = vadd.f32 %v2316, %v2344
        %2346 = vmatmul.bf16.gmra.mxu0 %v1698
        %v2347 = vpop.f32.mrf.mxu0
        %v2348 = vadd.f32 %v2319, %v2347
        %v2349 = vpop.f32.mrf.mxu0
        %v2350 = vadd.f32 %v2321, %v2349
        %2351 = vmatmul.bf16.gmra.mxu0 %v1707
        %v2352 = vpop.f32.mrf.mxu0
        %v2353 = vadd.f32 %v2324, %v2352
        %v2354 = vpop.f32.mrf.mxu0
        %v2355 = vadd.f32 %v2326, %v2354
        %2356 = vmatmul.bf16.gmra.mxu0 %v1716
        %v2357 = vpop.f32.mrf.mxu0
        %v2358 = vadd.f32 %v2329, %v2357
        %v2359 = vpop.f32.mrf.mxu0
        %v2360 = vadd.f32 %v2331, %v2359
        %2361 = vdwg.mxu0
        %2362 = vmatpush.bf16.msra.mxu0 %v2099
        %2363 = vmatpush.bf16.msra.mxu0 %v2098
        %2364 = vmatpush.bf16.msra.mxu0 %v2097
        %2365 = vmatpush.bf16.msra.mxu0 %v2096
        %2366 = vmatpush.bf16.msra.mxu0 %v2095
        %2367 = vmatpush.bf16.msra.mxu0 %v2094
        %2368 = vmatpush.bf16.msra.mxu0 %v2093
        %2369 = vmatpush.bf16.msra.mxu0 %v2092
        %2370 = vmatmul.bf16.gmra.mxu0 %v1690
        %v2371 = vpop.f32.mrf.mxu0
        %v2372 = vadd.f32 %v2343, %v2371
        %v2373 = vpop.f32.mrf.mxu0
        %v2374 = vadd.f32 %v2345, %v2373
        %2375 = vmatmul.bf16.gmra.mxu0 %v1699
        %v2376 = vpop.f32.mrf.mxu0
        %v2377 = vadd.f32 %v2348, %v2376
        %v2378 = vpop.f32.mrf.mxu0
        %v2379 = vadd.f32 %v2350, %v2378
        %2380 = vmatmul.bf16.gmra.mxu0 %v1708
        %v2381 = vpop.f32.mrf.mxu0
        %v2382 = vadd.f32 %v2353, %v2381
        %v2383 = vpop.f32.mrf.mxu0
        %v2384 = vadd.f32 %v2355, %v2383
        %2385 = vmatmul.bf16.gmra.mxu0 %v1717
        %v2386 = vpop.f32.mrf.mxu0
        %v2387 = vadd.f32 %v2358, %v2386
        %v2388 = vpop.f32.mrf.mxu0
        %v2389 = vadd.f32 %v2360, %v2388
        %2390 = vdwg.mxu0
        %2391 = vmatpush.bf16.msra.mxu0 %v2107
        %2392 = vmatpush.bf16.msra.mxu0 %v2106
        %2393 = vmatpush.bf16.msra.mxu0 %v2105
        %2394 = vmatpush.bf16.msra.mxu0 %v2104
        %2395 = vmatpush.bf16.msra.mxu0 %v2103
        %2396 = vmatpush.bf16.msra.mxu0 %v2102
        %2397 = vmatpush.bf16.msra.mxu0 %v2101
        %2398 = vmatpush.bf16.msra.mxu0 %v2100
        %2399 = vmatmul.bf16.gmra.mxu0 %v1691
        %v2400 = vpop.f32.mrf.mxu0
        %v2401 = vadd.f32 %v2372, %v2400
        %v2402 = vpop.f32.mrf.mxu0
        %v2403 = vadd.f32 %v2374, %v2402
        %2404 = vmatmul.bf16.gmra.mxu0 %v1700
        %v2405 = vpop.f32.mrf.mxu0
        %v2406 = vadd.f32 %v2377, %v2405
        %v2407 = vpop.f32.mrf.mxu0
        %v2408 = vadd.f32 %v2379, %v2407
        %2409 = vmatmul.bf16.gmra.mxu0 %v1709
        %v2410 = vpop.f32.mrf.mxu0
        %v2411 = vadd.f32 %v2382, %v2410
        %v2412 = vpop.f32.mrf.mxu0
        %v2413 = vadd.f32 %v2384, %v2412
        %2414 = vmatmul.bf16.gmra.mxu0 %v1718
        %v2415 = vpop.f32.mrf.mxu0
        %v2416 = vadd.f32 %v2387, %v2415
        %v2417 = vpop.f32.mrf.mxu0
        %v2418 = vadd.f32 %v2389, %v2417
        %2419 = vdwg.mxu0
        %2420 = vmatpush.bf16.msra.mxu0 %v2115
        %2421 = vmatpush.bf16.msra.mxu0 %v2114
        %2422 = vmatpush.bf16.msra.mxu0 %v2113
        %2423 = vmatpush.bf16.msra.mxu0 %v2112
        %2424 = vmatpush.bf16.msra.mxu0 %v2111
        %2425 = vmatpush.bf16.msra.mxu0 %v2110
        %2426 = vmatpush.bf16.msra.mxu0 %v2109
        %2427 = vmatpush.bf16.msra.mxu0 %v2108
        %2428 = vmatmul.bf16.gmra.mxu0 %v1692
        %v2429 = vpop.f32.mrf.mxu0
        %v2430 = vadd.f32 %v2401, %v2429
        %v2431 = vpop.f32.mrf.mxu0
        %v2432 = vadd.f32 %v2403, %v2431
        %2433 = vmatmul.bf16.gmra.mxu0 %v1701
        %v2434 = vpop.f32.mrf.mxu0
        %v2435 = vadd.f32 %v2406, %v2434
        %v2436 = vpop.f32.mrf.mxu0
        %v2437 = vadd.f32 %v2408, %v2436
        %2438 = vmatmul.bf16.gmra.mxu0 %v1710
        %v2439 = vpop.f32.mrf.mxu0
        %v2440 = vadd.f32 %v2411, %v2439
        %v2441 = vpop.f32.mrf.mxu0
        %v2442 = vadd.f32 %v2413, %v2441
        %2443 = vmatmul.bf16.gmra.mxu0 %v1719
        %v2444 = vpop.f32.mrf.mxu0
        %v2445 = vadd.f32 %v2416, %v2444
        %v2446 = vpop.f32.mrf.mxu0
        %v2447 = vadd.f32 %v2418, %v2446
        %2448 = vdwg.mxu0
        %v2449 = vperm.slane %v650, 0
        %v2450 = vmul.f32 %v2430, %v2449
        %v2451 = vmul.f32 %v2432, %v2449
        %v2452 = vmul.f32 %v2435, %v2449
        %v2453 = vmul.f32 %v2437, %v2449
        %v2454 = vmul.f32 %v2440, %v2449
        %v2455 = vmul.f32 %v2442, %v2449
        %v2456 = vmul.f32 %v2445, %v2449
        %v2457 = vmul.f32 %v2447, %v2449
        %v2458 = vperm.slane %v651, 0
        %v2459 = vadd.f32 %v2450, %v2458
        %v2460 = vadd.f32 %v2451, %v2458
        %v2461 = vadd.f32 %v2452, %v2458
        %v2462 = vadd.f32 %v2453, %v2458
        %v2463 = vadd.f32 %v2454, %v2458
        %v2464 = vadd.f32 %v2455, %v2458
        %v2465 = vadd.f32 %v2456, %v2458
        %v2466 = vadd.f32 %v2457, %v2458
        %v2467 = vmax.f32 %v2459, 0.0
        %v2468 = vmax.f32 %v2460, 0.0
        %v2469 = vmax.f32 %v2461, 0.0
        %v2470 = vmax.f32 %v2462, 0.0
        %v2471 = vmax.f32 %v2463, 0.0
        %v2472 = vmax.f32 %v2464, 0.0
        %v2473 = vmax.f32 %v2465, 0.0
        %v2474 = vmax.f32 %v2466, 0.0
        %v2475 = vpack.c.bf16 %v2467, %v2467
        %v2476 = vpack.c.bf16 %v2468, %v2468
        %v2477 = vpack.c.bf16 %v2469, %v2469
        %v2478 = vpack.c.bf16 %v2470, %v2470
        %v2479 = vpack.c.bf16 %v2471, %v2471
        %v2480 = vpack.c.bf16 %v2472, %v2472
        %v2481 = vpack.c.bf16 %v2473, %v2473
        %v2482 = vpack.c.bf16 %v2474, %v2474
        %v2484 = vshrl.u32 %v2475, 16
        %v2486 = vrot.slane %v2484, 7
        %v2487 = vshll.u32 %v2475, 16
        %v2489 = vor.u32 %v2486, %v2487
        %v2490 = vrot.slane %v2486, 4
        %v2492 = vshrl.u32 %v2476, 16
        %v2494 = vrot.slane %v2492, 7
        %v2495 = vshll.u32 %v2476, 16
        %v2497 = vor.u32 %v2494, %v2495
        %v2498 = vrot.slane %v2494, 4
        %v2500 = vshrl.u32 %v2477, 16
        %v2502 = vrot.slane %v2500, 7
        %v2503 = vshll.u32 %v2477, 16
        %v2505 = vor.u32 %v2502, %v2503
        %v2506 = vrot.slane %v2502, 4
        %v2508 = vshrl.u32 %v2478, 16
        %v2510 = vrot.slane %v2508, 7
        %v2511 = vshll.u32 %v2478, 16
        %v2513 = vor.u32 %v2510, %v2511
        %v2514 = vrot.slane %v2510, 4
        %v2516 = vshrl.u32 %v2479, 16
        %v2518 = vrot.slane %v2516, 7
        %v2519 = vshll.u32 %v2479, 16
        %v2521 = vor.u32 %v2518, %v2519
        %v2522 = vrot.slane %v2518, 4
        %v2524 = vshrl.u32 %v2480, 16
        %v2526 = vrot.slane %v2524, 7
        %v2527 = vshll.u32 %v2480, 16
        %v2529 = vor.u32 %v2526, %v2527
        %v2530 = vrot.slane %v2526, 4
        %v2532 = vshrl.u32 %v2481, 16
        %v2534 = vrot.slane %v2532, 7
        %v2535 = vshll.u32 %v2481, 16
        %v2537 = vor.u32 %v2534, %v2535
        %v2538 = vrot.slane %v2534, 4
        %v2540 = vshrl.u32 %v2482, 16
        %v2542 = vrot.slane %v2540, 7
        %v2543 = vshll.u32 %v2482, 16
        %v2545 = vor.u32 %v2542, %v2543
        %v2546 = vrot.slane %v2542, 4
        %v2563 = vld [vmem:[%s750] sm:$0xf]
        %v2564 = vsel %vm753, %v2489, %v2563
        %2565 = vst [vmem:[%s750] sm:$0xf] %v2564
        %v2566 = vld [vmem:[%s750 + $0x4] sm:$0x1]
        %v2567 = vsel %vm759, %v2490, %v2566
        %2568 = vst [vmem:[%s750 + $0x4] sm:$0x1] %v2567
        %v2569 = vld [vmem:[%s750 + $0x8] sm:$0xf]
        %v2570 = vsel %vm753, %v2497, %v2569
        %2571 = vst [vmem:[%s750 + $0x8] sm:$0xf] %v2570
        %v2572 = vld [vmem:[%s750 + $0xc] sm:$0x1]
        %v2573 = vsel %vm759, %v2498, %v2572
        %2574 = vst [vmem:[%s750 + $0xc] sm:$0x1] %v2573
        %v2575 = vld [vmem:[%s750 + $0x10] sm:$0xf]
        %v2576 = vsel %vm753, %v2505, %v2575
        %2577 = vst [vmem:[%s750 + $0x10] sm:$0xf] %v2576
        %v2578 = vld [vmem:[%s750 + $0x14] sm:$0x1]
        %v2579 = vsel %vm759, %v2506, %v2578
        %2580 = vst [vmem:[%s750 + $0x14] sm:$0x1] %v2579
        %v2581 = vld [vmem:[%s750 + $0x18] sm:$0xf]
        %v2582 = vsel %vm753, %v2513, %v2581
        %2583 = vst [vmem:[%s750 + $0x18] sm:$0xf] %v2582
        %v2584 = vld [vmem:[%s750 + $0x1c] sm:$0x1]
        %v2585 = vsel %vm759, %v2514, %v2584
        %2586 = vst [vmem:[%s750 + $0x1c] sm:$0x1] %v2585
        %v2587 = vld [vmem:[%s750 + $0x20] sm:$0xf]
        %v2588 = vsel %vm753, %v2521, %v2587
        %2589 = vst [vmem:[%s750 + $0x20] sm:$0xf] %v2588
        %v2590 = vld [vmem:[%s750 + $0x24] sm:$0x1]
        %v2591 = vsel %vm759, %v2522, %v2590
        %2592 = vst [vmem:[%s750 + $0x24] sm:$0x1] %v2591
        %v2593 = vld [vmem:[%s750 + $0x28] sm:$0xf]
        %v2594 = vsel %vm753, %v2529, %v2593
        %2595 = vst [vmem:[%s750 + $0x28] sm:$0xf] %v2594
        %v2596 = vld [vmem:[%s750 + $0x2c] sm:$0x1]
        %v2597 = vsel %vm759, %v2530, %v2596
        %2598 = vst [vmem:[%s750 + $0x2c] sm:$0x1] %v2597
        %v2599 = vld [vmem:[%s750 + $0x30] sm:$0xf]
        %v2600 = vsel %vm753, %v2537, %v2599
        %2601 = vst [vmem:[%s750 + $0x30] sm:$0xf] %v2600
        %v2602 = vld [vmem:[%s750 + $0x34] sm:$0x1]
        %v2603 = vsel %vm759, %v2538, %v2602
        %2604 = vst [vmem:[%s750 + $0x34] sm:$0x1] %v2603
        %v2605 = vld [vmem:[%s750 + $0x38] sm:$0xf]
        %v2606 = vsel %vm753, %v2545, %v2605
        %2607 = vst [vmem:[%s750 + $0x38] sm:$0xf] %v2606
        %v2608 = vld [vmem:[%s750 + $0x3c] sm:$0x1]
        %v2609 = vsel %vm759, %v2546, %v2608
        %2610 = vst [vmem:[%s750 + $0x3c] sm:$0x1] %v2609
        %v2611 = vld [vmem:[#allocation3] sm:$0xf]
        %v2612 = vld [vmem:[#allocation3 + $0x8] sm:$0xf]
        %v2613 = vld [vmem:[#allocation3 + $0x10] sm:$0xf]
        %v2614 = vld [vmem:[#allocation3 + $0x18] sm:$0xf]
        %v2615 = vld [vmem:[#allocation3 + $0x20] sm:$0xf]
        %v2616 = vld [vmem:[#allocation3 + $0x28] sm:$0xf]
        %v2617 = vld [vmem:[#allocation3 + $0x30] sm:$0xf]
        %v2618 = vld [vmem:[#allocation3 + $0x38] sm:$0xf]
        %2619 = vst [vmem:[#allocation4] sm:$0xf] %v2611
        %2620 = vst [vmem:[#allocation4 + $0x24] sm:$0xf] %v2612
        %2621 = vst [vmem:[#allocation4 + $0x48] sm:$0xf] %v2613
        %2622 = vst [vmem:[#allocation4 + $0x6c] sm:$0xf] %v2614
        %2623 = vst [vmem:[#allocation4 + $0x90] sm:$0xf] %v2615
        %2624 = vst [vmem:[#allocation4 + $0xb4] sm:$0xf] %v2616
        %2625 = vst [vmem:[#allocation4 + $0xd8] sm:$0xf] %v2617
        %2626 = vst [vmem:[#allocation4 + $0xfc] sm:$0xf] %v2618
        %v2627 = vld [vmem:[#allocation3] sm:$0xf]
        %v2628 = vld [vmem:[#allocation3 + $0x4] sm:$0x1]
        %v2629 = vld [vmem:[#allocation3 + $0x8] sm:$0xf]
        %v2630 = vld [vmem:[#allocation3 + $0xc] sm:$0x1]
        %v2631 = vld [vmem:[#allocation3 + $0x10] sm:$0xf]
        %v2632 = vld [vmem:[#allocation3 + $0x14] sm:$0x1]
        %v2633 = vld [vmem:[#allocation3 + $0x18] sm:$0xf]
        %v2634 = vld [vmem:[#allocation3 + $0x1c] sm:$0x1]
        %v2635 = vld [vmem:[#allocation3 + $0x20] sm:$0xf]
        %v2636 = vld [vmem:[#allocation3 + $0x24] sm:$0x1]
        %v2637 = vld [vmem:[#allocation3 + $0x28] sm:$0xf]
        %v2638 = vld [vmem:[#allocation3 + $0x2c] sm:$0x1]
        %v2639 = vld [vmem:[#allocation3 + $0x30] sm:$0xf]
        %v2640 = vld [vmem:[#allocation3 + $0x34] sm:$0x1]
        %v2641 = vld [vmem:[#allocation3 + $0x38] sm:$0xf]
        %v2642 = vld [vmem:[#allocation3 + $0x3c] sm:$0x1]
        %v2644 = vshrl.u32 %v2627, 16
        %v2646 = vrot.slane %v2644, 4
        %v2647 = vshll.u32 %v2627, 16
        %v2649 = vrot.slane %v2647, 5
        %v2650 = vor.u32 %v2646, %v2649
        %v2651 = vrot.slane %v2650, 4
        %v2653 = vshll.u32 %v2628, 16
        %v2655 = vrot.slane %v2653, 5
        %v2656 = vsel %vm839, %v2651, %v2655
        %v2658 = vshrl.u32 %v2629, 16
        %v2660 = vrot.slane %v2658, 4
        %v2661 = vshll.u32 %v2629, 16
        %v2663 = vrot.slane %v2661, 5
        %v2664 = vor.u32 %v2660, %v2663
        %v2665 = vrot.slane %v2664, 4
        %v2667 = vshll.u32 %v2630, 16
        %v2669 = vrot.slane %v2667, 5
        %v2670 = vsel %vm839, %v2665, %v2669
        %v2672 = vshrl.u32 %v2631, 16
        %v2674 = vrot.slane %v2672, 4
        %v2675 = vshll.u32 %v2631, 16
        %v2677 = vrot.slane %v2675, 5
        %v2678 = vor.u32 %v2674, %v2677
        %v2679 = vrot.slane %v2678, 4
        %v2681 = vshll.u32 %v2632, 16
        %v2683 = vrot.slane %v2681, 5
        %v2684 = vsel %vm839, %v2679, %v2683
        %v2686 = vshrl.u32 %v2633, 16
        %v2688 = vrot.slane %v2686, 4
        %v2689 = vshll.u32 %v2633, 16
        %v2691 = vrot.slane %v2689, 5
        %v2692 = vor.u32 %v2688, %v2691
        %v2693 = vrot.slane %v2692, 4
        %v2695 = vshll.u32 %v2634, 16
        %v2697 = vrot.slane %v2695, 5
        %v2698 = vsel %vm839, %v2693, %v2697
        %v2700 = vshrl.u32 %v2635, 16
        %v2702 = vrot.slane %v2700, 4
        %v2703 = vshll.u32 %v2635, 16
        %v2705 = vrot.slane %v2703, 5
        %v2706 = vor.u32 %v2702, %v2705
        %v2707 = vrot.slane %v2706, 4
        %v2709 = vshll.u32 %v2636, 16
        %v2711 = vrot.slane %v2709, 5
        %v2712 = vsel %vm839, %v2707, %v2711
        %v2714 = vshrl.u32 %v2637, 16
        %v2716 = vrot.slane %v2714, 4
        %v2717 = vshll.u32 %v2637, 16
        %v2719 = vrot.slane %v2717, 5
        %v2720 = vor.u32 %v2716, %v2719
        %v2721 = vrot.slane %v2720, 4
        %v2723 = vshll.u32 %v2638, 16
        %v2725 = vrot.slane %v2723, 5
        %v2726 = vsel %vm839, %v2721, %v2725
        %v2728 = vshrl.u32 %v2639, 16
        %v2730 = vrot.slane %v2728, 4
        %v2731 = vshll.u32 %v2639, 16
        %v2733 = vrot.slane %v2731, 5
        %v2734 = vor.u32 %v2730, %v2733
        %v2735 = vrot.slane %v2734, 4
        %v2737 = vshll.u32 %v2640, 16
        %v2739 = vrot.slane %v2737, 5
        %v2740 = vsel %vm839, %v2735, %v2739
        %v2742 = vshrl.u32 %v2641, 16
        %v2744 = vrot.slane %v2742, 4
        %v2745 = vshll.u32 %v2641, 16
        %v2747 = vrot.slane %v2745, 5
        %v2748 = vor.u32 %v2744, %v2747
        %v2749 = vrot.slane %v2748, 4
        %v2751 = vshll.u32 %v2642, 16
        %v2753 = vrot.slane %v2751, 5
        %v2754 = vsel %vm839, %v2749, %v2753
        %2763 = vst [vmem:[#allocation4 + $0x4] sm:$0xf] %v2656
        %2764 = vst [vmem:[#allocation4 + $0x28] sm:$0xf] %v2670
        %2765 = vst [vmem:[#allocation4 + $0x4c] sm:$0xf] %v2684
        %2766 = vst [vmem:[#allocation4 + $0x70] sm:$0xf] %v2698
        %2767 = vst [vmem:[#allocation4 + $0x94] sm:$0xf] %v2712
        %2768 = vst [vmem:[#allocation4 + $0xb8] sm:$0xf] %v2726
        %2769 = vst [vmem:[#allocation4 + $0xdc] sm:$0xf] %v2740
        %2770 = vst [vmem:[#allocation4 + $0x100] sm:$0xf] %v2754
        %v2771 = vld [vmem:[#allocation3] sm:$0xe]
        %v2772 = vld [vmem:[#allocation3 + $0x4] sm:$0x1]
        %v2773 = vld [vmem:[#allocation3 + $0x8] sm:$0xe]
        %v2774 = vld [vmem:[#allocation3 + $0xc] sm:$0x1]
        %v2775 = vld [vmem:[#allocation3 + $0x10] sm:$0xe]
        %v2776 = vld [vmem:[#allocation3 + $0x14] sm:$0x1]
        %v2777 = vld [vmem:[#allocation3 + $0x18] sm:$0xe]
        %v2778 = vld [vmem:[#allocation3 + $0x1c] sm:$0x1]
        %v2779 = vld [vmem:[#allocation3 + $0x20] sm:$0xe]
        %v2780 = vld [vmem:[#allocation3 + $0x24] sm:$0x1]
        %v2781 = vld [vmem:[#allocation3 + $0x28] sm:$0xe]
        %v2782 = vld [vmem:[#allocation3 + $0x2c] sm:$0x1]
        %v2783 = vld [vmem:[#allocation3 + $0x30] sm:$0xe]
        %v2784 = vld [vmem:[#allocation3 + $0x34] sm:$0x1]
        %v2785 = vld [vmem:[#allocation3 + $0x38] sm:$0xe]
        %v2786 = vld [vmem:[#allocation3 + $0x3c] sm:$0x1]
        %v2803 = vrot.slane %v2771, 5
        %v2804 = vrot.slane %v2803, 4
        %v2805 = vrot.slane %v2772, 5
        %v2806 = vsel %vm1002, %v2804, %v2805
        %v2807 = vrot.slane %v2773, 5
        %v2808 = vrot.slane %v2807, 4
        %v2809 = vrot.slane %v2774, 5
        %v2810 = vsel %vm1002, %v2808, %v2809
        %v2811 = vrot.slane %v2775, 5
        %v2812 = vrot.slane %v2811, 4
        %v2813 = vrot.slane %v2776, 5
        %v2814 = vsel %vm1002, %v2812, %v2813
        %v2815 = vrot.slane %v2777, 5
        %v2816 = vrot.slane %v2815, 4
        %v2817 = vrot.slane %v2778, 5
        %v2818 = vsel %vm1002, %v2816, %v2817
        %v2819 = vrot.slane %v2779, 5
        %v2820 = vrot.slane %v2819, 4
        %v2821 = vrot.slane %v2780, 5
        %v2822 = vsel %vm1002, %v2820, %v2821
        %v2823 = vrot.slane %v2781, 5
        %v2824 = vrot.slane %v2823, 4
        %v2825 = vrot.slane %v2782, 5
        %v2826 = vsel %vm1002, %v2824, %v2825
        %v2827 = vrot.slane %v2783, 5
        %v2828 = vrot.slane %v2827, 4
        %v2829 = vrot.slane %v2784, 5
        %v2830 = vsel %vm1002, %v2828, %v2829
        %v2831 = vrot.slane %v2785, 5
        %v2832 = vrot.slane %v2831, 4
        %v2833 = vrot.slane %v2786, 5
        %v2834 = vsel %vm1002, %v2832, %v2833
        %2843 = vst [vmem:[#allocation4 + $0x8] sm:$0xf] %v2806
        %2844 = vst [vmem:[#allocation4 + $0x2c] sm:$0xf] %v2810
        %2845 = vst [vmem:[#allocation4 + $0x50] sm:$0xf] %v2814
        %2846 = vst [vmem:[#allocation4 + $0x74] sm:$0xf] %v2818
        %2847 = vst [vmem:[#allocation4 + $0x98] sm:$0xf] %v2822
        %2848 = vst [vmem:[#allocation4 + $0xbc] sm:$0xf] %v2826
        %2849 = vst [vmem:[#allocation4 + $0xe0] sm:$0xf] %v2830
        %2850 = vst [vmem:[#allocation4 + $0x104] sm:$0xf] %v2834
        %v2851 = vld [vmem:[%s750] sm:$0xf]
        %v2852 = vld [vmem:[%s750 + $0x8] sm:$0xf]
        %v2853 = vld [vmem:[%s750 + $0x10] sm:$0xf]
        %v2854 = vld [vmem:[%s750 + $0x18] sm:$0xf]
        %v2855 = vld [vmem:[%s750 + $0x20] sm:$0xf]
        %v2856 = vld [vmem:[%s750 + $0x28] sm:$0xf]
        %v2857 = vld [vmem:[%s750 + $0x30] sm:$0xf]
        %v2858 = vld [vmem:[%s750 + $0x38] sm:$0xf]
        %2859 = vst [vmem:[#allocation4 + $0xc] sm:$0xf] %v2851
        %2860 = vst [vmem:[#allocation4 + $0x30] sm:$0xf] %v2852
        %2861 = vst [vmem:[#allocation4 + $0x54] sm:$0xf] %v2853
        %2862 = vst [vmem:[#allocation4 + $0x78] sm:$0xf] %v2854
        %2863 = vst [vmem:[#allocation4 + $0x9c] sm:$0xf] %v2855
        %2864 = vst [vmem:[#allocation4 + $0xc0] sm:$0xf] %v2856
        %2865 = vst [vmem:[#allocation4 + $0xe4] sm:$0xf] %v2857
        %2866 = vst [vmem:[#allocation4 + $0x108] sm:$0xf] %v2858
        %v2867 = vld [vmem:[%s750] sm:$0xf]
        %v2868 = vld [vmem:[%s750 + $0x4] sm:$0x1]
        %v2869 = vld [vmem:[%s750 + $0x8] sm:$0xf]
        %v2870 = vld [vmem:[%s750 + $0xc] sm:$0x1]
        %v2871 = vld [vmem:[%s750 + $0x10] sm:$0xf]
        %v2872 = vld [vmem:[%s750 + $0x14] sm:$0x1]
        %v2873 = vld [vmem:[%s750 + $0x18] sm:$0xf]
        %v2874 = vld [vmem:[%s750 + $0x1c] sm:$0x1]
        %v2875 = vld [vmem:[%s750 + $0x20] sm:$0xf]
        %v2876 = vld [vmem:[%s750 + $0x24] sm:$0x1]
        %v2877 = vld [vmem:[%s750 + $0x28] sm:$0xf]
        %v2878 = vld [vmem:[%s750 + $0x2c] sm:$0x1]
        %v2879 = vld [vmem:[%s750 + $0x30] sm:$0xf]
        %v2880 = vld [vmem:[%s750 + $0x34] sm:$0x1]
        %v2881 = vld [vmem:[%s750 + $0x38] sm:$0xf]
        %v2882 = vld [vmem:[%s750 + $0x3c] sm:$0x1]
        %v2884 = vshrl.u32 %v2867, 16
        %v2886 = vrot.slane %v2884, 4
        %v2887 = vshll.u32 %v2867, 16
        %v2889 = vrot.slane %v2887, 5
        %v2890 = vor.u32 %v2886, %v2889
        %v2891 = vrot.slane %v2890, 4
        %v2893 = vshll.u32 %v2868, 16
        %v2895 = vrot.slane %v2893, 5
        %v2896 = vsel %vm839, %v2891, %v2895
        %v2898 = vshrl.u32 %v2869, 16
        %v2900 = vrot.slane %v2898, 4
        %v2901 = vshll.u32 %v2869, 16
        %v2903 = vrot.slane %v2901, 5
        %v2904 = vor.u32 %v2900, %v2903
        %v2905 = vrot.slane %v2904, 4
        %v2907 = vshll.u32 %v2870, 16
        %v2909 = vrot.slane %v2907, 5
        %v2910 = vsel %vm839, %v2905, %v2909
        %v2912 = vshrl.u32 %v2871, 16
        %v2914 = vrot.slane %v2912, 4
        %v2915 = vshll.u32 %v2871, 16
        %v2917 = vrot.slane %v2915, 5
        %v2918 = vor.u32 %v2914, %v2917
        %v2919 = vrot.slane %v2918, 4
        %v2921 = vshll.u32 %v2872, 16
        %v2923 = vrot.slane %v2921, 5
        %v2924 = vsel %vm839, %v2919, %v2923
        %v2926 = vshrl.u32 %v2873, 16
        %v2928 = vrot.slane %v2926, 4
        %v2929 = vshll.u32 %v2873, 16
        %v2931 = vrot.slane %v2929, 5
        %v2932 = vor.u32 %v2928, %v2931
        %v2933 = vrot.slane %v2932, 4
        %v2935 = vshll.u32 %v2874, 16
        %v2937 = vrot.slane %v2935, 5
        %v2938 = vsel %vm839, %v2933, %v2937
        %v2940 = vshrl.u32 %v2875, 16
        %v2942 = vrot.slane %v2940, 4
        %v2943 = vshll.u32 %v2875, 16
        %v2945 = vrot.slane %v2943, 5
        %v2946 = vor.u32 %v2942, %v2945
        %v2947 = vrot.slane %v2946, 4
        %v2949 = vshll.u32 %v2876, 16
        %v2951 = vrot.slane %v2949, 5
        %v2952 = vsel %vm839, %v2947, %v2951
        %v2954 = vshrl.u32 %v2877, 16
        %v2956 = vrot.slane %v2954, 4
        %v2957 = vshll.u32 %v2877, 16
        %v2959 = vrot.slane %v2957, 5
        %v2960 = vor.u32 %v2956, %v2959
        %v2961 = vrot.slane %v2960, 4
        %v2963 = vshll.u32 %v2878, 16
        %v2965 = vrot.slane %v2963, 5
        %v2966 = vsel %vm839, %v2961, %v2965
        %v2968 = vshrl.u32 %v2879, 16
        %v2970 = vrot.slane %v2968, 4
        %v2971 = vshll.u32 %v2879, 16
        %v2973 = vrot.slane %v2971, 5
        %v2974 = vor.u32 %v2970, %v2973
        %v2975 = vrot.slane %v2974, 4
        %v2977 = vshll.u32 %v2880, 16
        %v2979 = vrot.slane %v2977, 5
        %v2980 = vsel %vm839, %v2975, %v2979
        %v2982 = vshrl.u32 %v2881, 16
        %v2984 = vrot.slane %v2982, 4
        %v2985 = vshll.u32 %v2881, 16
        %v2987 = vrot.slane %v2985, 5
        %v2988 = vor.u32 %v2984, %v2987
        %v2989 = vrot.slane %v2988, 4
        %v2991 = vshll.u32 %v2882, 16
        %v2993 = vrot.slane %v2991, 5
        %v2994 = vsel %vm839, %v2989, %v2993
        %3003 = vst [vmem:[#allocation4 + $0x10] sm:$0xf] %v2896
        %3004 = vst [vmem:[#allocation4 + $0x34] sm:$0xf] %v2910
        %3005 = vst [vmem:[#allocation4 + $0x58] sm:$0xf] %v2924
        %3006 = vst [vmem:[#allocation4 + $0x7c] sm:$0xf] %v2938
        %3007 = vst [vmem:[#allocation4 + $0xa0] sm:$0xf] %v2952
        %3008 = vst [vmem:[#allocation4 + $0xc4] sm:$0xf] %v2966
        %3009 = vst [vmem:[#allocation4 + $0xe8] sm:$0xf] %v2980
        %3010 = vst [vmem:[#allocation4 + $0x10c] sm:$0xf] %v2994
        %v3011 = vld [vmem:[%s750] sm:$0xe]
        %v3012 = vld [vmem:[%s750 + $0x4] sm:$0x1]
        %v3013 = vld [vmem:[%s750 + $0x8] sm:$0xe]
        %v3014 = vld [vmem:[%s750 + $0xc] sm:$0x1]
        %v3015 = vld [vmem:[%s750 + $0x10] sm:$0xe]
        %v3016 = vld [vmem:[%s750 + $0x14] sm:$0x1]
        %v3017 = vld [vmem:[%s750 + $0x18] sm:$0xe]
        %v3018 = vld [vmem:[%s750 + $0x1c] sm:$0x1]
        %v3019 = vld [vmem:[%s750 + $0x20] sm:$0xe]
        %v3020 = vld [vmem:[%s750 + $0x24] sm:$0x1]
        %v3021 = vld [vmem:[%s750 + $0x28] sm:$0xe]
        %v3022 = vld [vmem:[%s750 + $0x2c] sm:$0x1]
        %v3023 = vld [vmem:[%s750 + $0x30] sm:$0xe]
        %v3024 = vld [vmem:[%s750 + $0x34] sm:$0x1]
        %v3025 = vld [vmem:[%s750 + $0x38] sm:$0xe]
        %v3026 = vld [vmem:[%s750 + $0x3c] sm:$0x1]
        %v3043 = vrot.slane %v3011, 5
        %v3044 = vrot.slane %v3043, 4
        %v3045 = vrot.slane %v3012, 5
        %v3046 = vsel %vm1002, %v3044, %v3045
        %v3047 = vrot.slane %v3013, 5
        %v3048 = vrot.slane %v3047, 4
        %v3049 = vrot.slane %v3014, 5
        %v3050 = vsel %vm1002, %v3048, %v3049
        %v3051 = vrot.slane %v3015, 5
        %v3052 = vrot.slane %v3051, 4
        %v3053 = vrot.slane %v3016, 5
        %v3054 = vsel %vm1002, %v3052, %v3053
        %v3055 = vrot.slane %v3017, 5
        %v3056 = vrot.slane %v3055, 4
        %v3057 = vrot.slane %v3018, 5
        %v3058 = vsel %vm1002, %v3056, %v3057
        %v3059 = vrot.slane %v3019, 5
        %v3060 = vrot.slane %v3059, 4
        %v3061 = vrot.slane %v3020, 5
        %v3062 = vsel %vm1002, %v3060, %v3061
        %v3063 = vrot.slane %v3021, 5
        %v3064 = vrot.slane %v3063, 4
        %v3065 = vrot.slane %v3022, 5
        %v3066 = vsel %vm1002, %v3064, %v3065
        %v3067 = vrot.slane %v3023, 5
        %v3068 = vrot.slane %v3067, 4
        %v3069 = vrot.slane %v3024, 5
        %v3070 = vsel %vm1002, %v3068, %v3069
        %v3071 = vrot.slane %v3025, 5
        %v3072 = vrot.slane %v3071, 4
        %v3073 = vrot.slane %v3026, 5
        %v3074 = vsel %vm1002, %v3072, %v3073
        %3083 = vst [vmem:[#allocation4 + $0x14] sm:$0xf] %v3046
        %3084 = vst [vmem:[#allocation4 + $0x38] sm:$0xf] %v3050
        %3085 = vst [vmem:[#allocation4 + $0x5c] sm:$0xf] %v3054
        %3086 = vst [vmem:[#allocation4 + $0x80] sm:$0xf] %v3058
        %3087 = vst [vmem:[#allocation4 + $0xa4] sm:$0xf] %v3062
        %3088 = vst [vmem:[#allocation4 + $0xc8] sm:$0xf] %v3066
        %3089 = vst [vmem:[#allocation4 + $0xec] sm:$0xf] %v3070
        %3090 = vst [vmem:[#allocation4 + $0x110] sm:$0xf] %v3074
        %v3091 = vld [vmem:[%s1291] sm:$0xf]
        %v3092 = vld [vmem:[%s1291 + $0x8] sm:$0xf]
        %v3093 = vld [vmem:[%s1291 + $0x10] sm:$0xf]
        %v3094 = vld [vmem:[%s1291 + $0x18] sm:$0xf]
        %v3095 = vld [vmem:[%s1291 + $0x20] sm:$0xf]
        %v3096 = vld [vmem:[%s1291 + $0x28] sm:$0xf]
        %v3097 = vld [vmem:[%s1291 + $0x30] sm:$0xf]
        %v3098 = vld [vmem:[%s1291 + $0x38] sm:$0xf]
        %3099 = vst [vmem:[#allocation4 + $0x18] sm:$0xf] %v3091
        %3100 = vst [vmem:[#allocation4 + $0x3c] sm:$0xf] %v3092
        %3101 = vst [vmem:[#allocation4 + $0x60] sm:$0xf] %v3093
        %3102 = vst [vmem:[#allocation4 + $0x84] sm:$0xf] %v3094
        %3103 = vst [vmem:[#allocation4 + $0xa8] sm:$0xf] %v3095
        %3104 = vst [vmem:[#allocation4 + $0xcc] sm:$0xf] %v3096
        %3105 = vst [vmem:[#allocation4 + $0xf0] sm:$0xf] %v3097
        %3106 = vst [vmem:[#allocation4 + $0x114] sm:$0xf] %v3098
        %v3107 = vld [vmem:[%s1291] sm:$0xf]
        %v3108 = vld [vmem:[%s1291 + $0x4] sm:$0x1]
        %v3109 = vld [vmem:[%s1291 + $0x8] sm:$0xf]
        %v3110 = vld [vmem:[%s1291 + $0xc] sm:$0x1]
        %v3111 = vld [vmem:[%s1291 + $0x10] sm:$0xf]
        %v3112 = vld [vmem:[%s1291 + $0x14] sm:$0x1]
        %v3113 = vld [vmem:[%s1291 + $0x18] sm:$0xf]
        %v3114 = vld [vmem:[%s1291 + $0x1c] sm:$0x1]
        %v3115 = vld [vmem:[%s1291 + $0x20] sm:$0xf]
        %v3116 = vld [vmem:[%s1291 + $0x24] sm:$0x1]
        %v3117 = vld [vmem:[%s1291 + $0x28] sm:$0xf]
        %v3118 = vld [vmem:[%s1291 + $0x2c] sm:$0x1]
        %v3119 = vld [vmem:[%s1291 + $0x30] sm:$0xf]
        %v3120 = vld [vmem:[%s1291 + $0x34] sm:$0x1]
        %v3121 = vld [vmem:[%s1291 + $0x38] sm:$0xf]
        %v3122 = vld [vmem:[%s1291 + $0x3c] sm:$0x1]
        %v3124 = vshrl.u32 %v3107, 16
        %v3126 = vrot.slane %v3124, 4
        %v3127 = vshll.u32 %v3107, 16
        %v3129 = vrot.slane %v3127, 5
        %v3130 = vor.u32 %v3126, %v3129
        %v3131 = vrot.slane %v3130, 4
        %v3133 = vshll.u32 %v3108, 16
        %v3135 = vrot.slane %v3133, 5
        %v3136 = vsel %vm839, %v3131, %v3135
        %v3138 = vshrl.u32 %v3109, 16
        %v3140 = vrot.slane %v3138, 4
        %v3141 = vshll.u32 %v3109, 16
        %v3143 = vrot.slane %v3141, 5
        %v3144 = vor.u32 %v3140, %v3143
        %v3145 = vrot.slane %v3144, 4
        %v3147 = vshll.u32 %v3110, 16
        %v3149 = vrot.slane %v3147, 5
        %v3150 = vsel %vm839, %v3145, %v3149
        %v3152 = vshrl.u32 %v3111, 16
        %v3154 = vrot.slane %v3152, 4
        %v3155 = vshll.u32 %v3111, 16
        %v3157 = vrot.slane %v3155, 5
        %v3158 = vor.u32 %v3154, %v3157
        %v3159 = vrot.slane %v3158, 4
        %v3161 = vshll.u32 %v3112, 16
        %v3163 = vrot.slane %v3161, 5
        %v3164 = vsel %vm839, %v3159, %v3163
        %v3166 = vshrl.u32 %v3113, 16
        %v3168 = vrot.slane %v3166, 4
        %v3169 = vshll.u32 %v3113, 16
        %v3171 = vrot.slane %v3169, 5
        %v3172 = vor.u32 %v3168, %v3171
        %v3173 = vrot.slane %v3172, 4
        %v3175 = vshll.u32 %v3114, 16
        %v3177 = vrot.slane %v3175, 5
        %v3178 = vsel %vm839, %v3173, %v3177
        %v3180 = vshrl.u32 %v3115, 16
        %v3182 = vrot.slane %v3180, 4
        %v3183 = vshll.u32 %v3115, 16
        %v3185 = vrot.slane %v3183, 5
        %v3186 = vor.u32 %v3182, %v3185
        %v3187 = vrot.slane %v3186, 4
        %v3189 = vshll.u32 %v3116, 16
        %v3191 = vrot.slane %v3189, 5
        %v3192 = vsel %vm839, %v3187, %v3191
        %v3194 = vshrl.u32 %v3117, 16
        %v3196 = vrot.slane %v3194, 4
        %v3197 = vshll.u32 %v3117, 16
        %v3199 = vrot.slane %v3197, 5
        %v3200 = vor.u32 %v3196, %v3199
        %v3201 = vrot.slane %v3200, 4
        %v3203 = vshll.u32 %v3118, 16
        %v3205 = vrot.slane %v3203, 5
        %v3206 = vsel %vm839, %v3201, %v3205
        %v3208 = vshrl.u32 %v3119, 16
        %v3210 = vrot.slane %v3208, 4
        %v3211 = vshll.u32 %v3119, 16
        %v3213 = vrot.slane %v3211, 5
        %v3214 = vor.u32 %v3210, %v3213
        %v3215 = vrot.slane %v3214, 4
        %v3217 = vshll.u32 %v3120, 16
        %v3219 = vrot.slane %v3217, 5
        %v3220 = vsel %vm839, %v3215, %v3219
        %v3222 = vshrl.u32 %v3121, 16
        %v3224 = vrot.slane %v3222, 4
        %v3225 = vshll.u32 %v3121, 16
        %v3227 = vrot.slane %v3225, 5
        %v3228 = vor.u32 %v3224, %v3227
        %v3229 = vrot.slane %v3228, 4
        %v3231 = vshll.u32 %v3122, 16
        %v3233 = vrot.slane %v3231, 5
        %v3234 = vsel %vm839, %v3229, %v3233
        %3243 = vst [vmem:[#allocation4 + $0x1c] sm:$0xf] %v3136
        %3244 = vst [vmem:[#allocation4 + $0x40] sm:$0xf] %v3150
        %3245 = vst [vmem:[#allocation4 + $0x64] sm:$0xf] %v3164
        %3246 = vst [vmem:[#allocation4 + $0x88] sm:$0xf] %v3178
        %3247 = vst [vmem:[#allocation4 + $0xac] sm:$0xf] %v3192
        %3248 = vst [vmem:[#allocation4 + $0xd0] sm:$0xf] %v3206
        %3249 = vst [vmem:[#allocation4 + $0xf4] sm:$0xf] %v3220
        %3250 = vst [vmem:[#allocation4 + $0x118] sm:$0xf] %v3234
        %v3251 = vld [vmem:[%s1291] sm:$0xe]
        %v3252 = vld [vmem:[%s1291 + $0x4] sm:$0x1]
        %v3253 = vld [vmem:[%s1291 + $0x8] sm:$0xe]
        %v3254 = vld [vmem:[%s1291 + $0xc] sm:$0x1]
        %v3255 = vld [vmem:[%s1291 + $0x10] sm:$0xe]
        %v3256 = vld [vmem:[%s1291 + $0x14] sm:$0x1]
        %v3257 = vld [vmem:[%s1291 + $0x18] sm:$0xe]
        %v3258 = vld [vmem:[%s1291 + $0x1c] sm:$0x1]
        %v3259 = vld [vmem:[%s1291 + $0x20] sm:$0xe]
        %v3260 = vld [vmem:[%s1291 + $0x24] sm:$0x1]
        %v3261 = vld [vmem:[%s1291 + $0x28] sm:$0xe]
        %v3262 = vld [vmem:[%s1291 + $0x2c] sm:$0x1]
        %v3263 = vld [vmem:[%s1291 + $0x30] sm:$0xe]
        %v3264 = vld [vmem:[%s1291 + $0x34] sm:$0x1]
        %v3265 = vld [vmem:[%s1291 + $0x38] sm:$0xe]
        %v3266 = vld [vmem:[%s1291 + $0x3c] sm:$0x1]
        %v3283 = vrot.slane %v3251, 5
        %v3284 = vrot.slane %v3283, 4
        %v3285 = vrot.slane %v3252, 5
        %v3286 = vsel %vm1002, %v3284, %v3285
        %v3287 = vrot.slane %v3253, 5
        %v3288 = vrot.slane %v3287, 4
        %v3289 = vrot.slane %v3254, 5
        %v3290 = vsel %vm1002, %v3288, %v3289
        %v3291 = vrot.slane %v3255, 5
        %v3292 = vrot.slane %v3291, 4
        %v3293 = vrot.slane %v3256, 5
        %v3294 = vsel %vm1002, %v3292, %v3293
        %v3295 = vrot.slane %v3257, 5
        %v3296 = vrot.slane %v3295, 4
        %v3297 = vrot.slane %v3258, 5
        %v3298 = vsel %vm1002, %v3296, %v3297
        %v3299 = vrot.slane %v3259, 5
        %v3300 = vrot.slane %v3299, 4
        %v3301 = vrot.slane %v3260, 5
        %v3302 = vsel %vm1002, %v3300, %v3301
        %v3303 = vrot.slane %v3261, 5
        %v3304 = vrot.slane %v3303, 4
        %v3305 = vrot.slane %v3262, 5
        %v3306 = vsel %vm1002, %v3304, %v3305
        %v3307 = vrot.slane %v3263, 5
        %v3308 = vrot.slane %v3307, 4
        %v3309 = vrot.slane %v3264, 5
        %v3310 = vsel %vm1002, %v3308, %v3309
        %v3311 = vrot.slane %v3265, 5
        %v3312 = vrot.slane %v3311, 4
        %v3313 = vrot.slane %v3266, 5
        %v3314 = vsel %vm1002, %v3312, %v3313
        %3323 = vst [vmem:[#allocation4 + $0x20] sm:$0xf] %v3286
        %3324 = vst [vmem:[#allocation4 + $0x44] sm:$0xf] %v3290
        %3325 = vst [vmem:[#allocation4 + $0x68] sm:$0xf] %v3294
        %3326 = vst [vmem:[#allocation4 + $0x8c] sm:$0xf] %v3298
        %3327 = vst [vmem:[#allocation4 + $0xb0] sm:$0xf] %v3302
        %3328 = vst [vmem:[#allocation4 + $0xd4] sm:$0xf] %v3306
        %3329 = vst [vmem:[#allocation4 + $0xf8] sm:$0xf] %v3310
        %3330 = vst [vmem:[#allocation4 + $0x11c] sm:$0xf] %v3314
        %v3331 = vld [vmem:[#allocation4] sm:$0xff]
        %v3332 = vld [vmem:[#allocation4 + $0x8] sm:$0xff]
        %v3333 = vld [vmem:[#allocation4 + $0x10] sm:$0xff]
        %v3334 = vld [vmem:[#allocation4 + $0x18] sm:$0xff]
        %v3335 = vld [vmem:[#allocation4 + $0x20] sm:$0xf]
        %v3336 = vld [vmem:[#allocation4 + $0x24] sm:$0xff]
        %v3337 = vld [vmem:[#allocation4 + $0x2c] sm:$0xff]
        %v3338 = vld [vmem:[#allocation4 + $0x34] sm:$0xff]
        %v3339 = vld [vmem:[#allocation4 + $0x3c] sm:$0xff]
        %v3340 = vld [vmem:[#allocation4 + $0x44] sm:$0xf]
        %v3341 = vld [vmem:[#allocation4 + $0x48] sm:$0xff]
        %v3342 = vld [vmem:[#allocation4 + $0x50] sm:$0xff]
        %v3343 = vld [vmem:[#allocation4 + $0x58] sm:$0xff]
        %v3344 = vld [vmem:[#allocation4 + $0x60] sm:$0xff]
        %v3345 = vld [vmem:[#allocation4 + $0x68] sm:$0xf]
        %v3346 = vld [vmem:[#allocation4 + $0x6c] sm:$0xff]
        %v3347 = vld [vmem:[#allocation4 + $0x74] sm:$0xff]
        %v3348 = vld [vmem:[#allocation4 + $0x7c] sm:$0xff]
        %v3349 = vld [vmem:[#allocation4 + $0x84] sm:$0xff]
        %v3350 = vld [vmem:[#allocation4 + $0x8c] sm:$0xf]
        %v3351 = vld [vmem:[#allocation4 + $0x90] sm:$0xff]
        %v3352 = vld [vmem:[#allocation4 + $0x98] sm:$0xff]
        %v3353 = vld [vmem:[#allocation4 + $0xa0] sm:$0xff]
        %v3354 = vld [vmem:[#allocation4 + $0xa8] sm:$0xff]
        %v3355 = vld [vmem:[#allocation4 + $0xb0] sm:$0xf]
        %v3356 = vld [vmem:[#allocation4 + $0xb4] sm:$0xff]
        %v3357 = vld [vmem:[#allocation4 + $0xbc] sm:$0xff]
        %v3358 = vld [vmem:[#allocation4 + $0xc4] sm:$0xff]
        %v3359 = vld [vmem:[#allocation4 + $0xcc] sm:$0xff]
        %v3360 = vld [vmem:[#allocation4 + $0xd4] sm:$0xf]
        %v3361 = vld [vmem:[#allocation4 + $0xd8] sm:$0xff]
        %v3362 = vld [vmem:[#allocation4 + $0xe0] sm:$0xff]
        %v3363 = vld [vmem:[#allocation4 + $0xe8] sm:$0xff]
        %v3364 = vld [vmem:[#allocation4 + $0xf0] sm:$0xff]
        %v3365 = vld [vmem:[#allocation4 + $0xf8] sm:$0xf]
        %v3366 = vld [vmem:[#allocation4 + $0xfc] sm:$0xff]
        %v3367 = vld [vmem:[#allocation4 + $0x104] sm:$0xff]
        %v3368 = vld [vmem:[#allocation4 + $0x10c] sm:$0xff]
        %v3369 = vld [vmem:[#allocation4 + $0x114] sm:$0xff]
        %v3370 = vld [vmem:[#allocation4 + $0x11c] sm:$0xf]
        %v3411 = vunpack.c.l.b16 %v3331
        %v3412 = vunpack.c.h.b16 %v3331
        %v3413 = vunpack.c.l.b16 %v3332
        %v3414 = vunpack.c.h.b16 %v3332
        %v3415 = vunpack.c.l.b16 %v3333
        %v3416 = vunpack.c.h.b16 %v3333
        %v3417 = vunpack.c.l.b16 %v3334
        %v3418 = vunpack.c.h.b16 %v3334
        %v3419 = vunpack.c.l.b16 %v3335
        %v3420 = vunpack.c.l.b16 %v3336
        %v3421 = vunpack.c.h.b16 %v3336
        %v3422 = vunpack.c.l.b16 %v3337
        %v3423 = vunpack.c.h.b16 %v3337
        %v3424 = vunpack.c.l.b16 %v3338
        %v3425 = vunpack.c.h.b16 %v3338
        %v3426 = vunpack.c.l.b16 %v3339
        %v3427 = vunpack.c.h.b16 %v3339
        %v3428 = vunpack.c.l.b16 %v3340
        %v3429 = vunpack.c.l.b16 %v3341
        %v3430 = vunpack.c.h.b16 %v3341
        %v3431 = vunpack.c.l.b16 %v3342
        %v3432 = vunpack.c.h.b16 %v3342
        %v3433 = vunpack.c.l.b16 %v3343
        %v3434 = vunpack.c.h.b16 %v3343
        %v3435 = vunpack.c.l.b16 %v3344
        %v3436 = vunpack.c.h.b16 %v3344
        %v3437 = vunpack.c.l.b16 %v3345
        %v3438 = vunpack.c.l.b16 %v3346
        %v3439 = vunpack.c.h.b16 %v3346
        %v3440 = vunpack.c.l.b16 %v3347
        %v3441 = vunpack.c.h.b16 %v3347
        %v3442 = vunpack.c.l.b16 %v3348
        %v3443 = vunpack.c.h.b16 %v3348
        %v3444 = vunpack.c.l.b16 %v3349
        %v3445 = vunpack.c.h.b16 %v3349
        %v3446 = vunpack.c.l.b16 %v3350
        %v3447 = vunpack.c.l.b16 %v3351
        %v3448 = vunpack.c.h.b16 %v3351
        %v3449 = vunpack.c.l.b16 %v3352
        %v3450 = vunpack.c.h.b16 %v3352
        %v3451 = vunpack.c.l.b16 %v3353
        %v3452 = vunpack.c.h.b16 %v3353
        %v3453 = vunpack.c.l.b16 %v3354
        %v3454 = vunpack.c.h.b16 %v3354
        %v3455 = vunpack.c.l.b16 %v3355
        %v3456 = vunpack.c.l.b16 %v3356
        %v3457 = vunpack.c.h.b16 %v3356
        %v3458 = vunpack.c.l.b16 %v3357
        %v3459 = vunpack.c.h.b16 %v3357
        %v3460 = vunpack.c.l.b16 %v3358
        %v3461 = vunpack.c.h.b16 %v3358
        %v3462 = vunpack.c.l.b16 %v3359
        %v3463 = vunpack.c.h.b16 %v3359
        %v3464 = vunpack.c.l.b16 %v3360
        %v3465 = vunpack.c.l.b16 %v3361
        %v3466 = vunpack.c.h.b16 %v3361
        %v3467 = vunpack.c.l.b16 %v3362
        %v3468 = vunpack.c.h.b16 %v3362
        %v3469 = vunpack.c.l.b16 %v3363
        %v3470 = vunpack.c.h.b16 %v3363
        %v3471 = vunpack.c.l.b16 %v3364
        %v3472 = vunpack.c.h.b16 %v3364
        %v3473 = vunpack.c.l.b16 %v3365
        %v3474 = vunpack.c.l.b16 %v3366
        %v3475 = vunpack.c.h.b16 %v3366
        %v3476 = vunpack.c.l.b16 %v3367
        %v3477 = vunpack.c.h.b16 %v3367
        %v3478 = vunpack.c.l.b16 %v3368
        %v3479 = vunpack.c.h.b16 %v3368
        %v3480 = vunpack.c.l.b16 %v3369
        %v3481 = vunpack.c.h.b16 %v3369
        %v3482 = vunpack.c.l.b16 %v3370
        %v3483 = vpack.c.b16 %v3420, %v3411
        %v3484 = vpack.c.b16 %v3421, %v3412
        %v3485 = vpack.c.b16 %v3422, %v3413
        %v3486 = vpack.c.b16 %v3423, %v3414
        %v3487 = vpack.c.b16 %v3424, %v3415
        %v3488 = vpack.c.b16 %v3425, %v3416
        %v3489 = vpack.c.b16 %v3426, %v3417
        %v3490 = vpack.c.b16 %v3427, %v3418
        %v3491 = vpack.c.b16 %v3428, %v3419
        %v3492 = vpack.c.b16 %v3438, %v3429
        %v3493 = vpack.c.b16 %v3439, %v3430
        %v3494 = vpack.c.b16 %v3440, %v3431
        %v3495 = vpack.c.b16 %v3441, %v3432
        %v3496 = vpack.c.b16 %v3442, %v3433
        %v3497 = vpack.c.b16 %v3443, %v3434
        %v3498 = vpack.c.b16 %v3444, %v3435
        %v3499 = vpack.c.b16 %v3445, %v3436
        %v3500 = vpack.c.b16 %v3446, %v3437
        %v3501 = vpack.c.b16 %v3456, %v3447
        %v3502 = vpack.c.b16 %v3457, %v3448
        %v3503 = vpack.c.b16 %v3458, %v3449
        %v3504 = vpack.c.b16 %v3459, %v3450
        %v3505 = vpack.c.b16 %v3460, %v3451
        %v3506 = vpack.c.b16 %v3461, %v3452
        %v3507 = vpack.c.b16 %v3462, %v3453
        %v3508 = vpack.c.b16 %v3463, %v3454
        %v3509 = vpack.c.b16 %v3464, %v3455
        %v3510 = vpack.c.b16 %v3474, %v3465
        %v3511 = vpack.c.b16 %v3475, %v3466
        %v3512 = vpack.c.b16 %v3476, %v3467
        %v3513 = vpack.c.b16 %v3477, %v3468
        %v3514 = vpack.c.b16 %v3478, %v3469
        %v3515 = vpack.c.b16 %v3479, %v3470
        %v3516 = vpack.c.b16 %v3480, %v3471
        %v3517 = vpack.c.b16 %v3481, %v3472
        %v3518 = vpack.c.b16 %v3482, %v3473
        %v3699 = vunpack.c.l.b16 %v506
        %v3700 = vunpack.c.l.b16 %v507
        %v3701 = vunpack.c.l.b16 %v508
        %v3702 = vunpack.c.l.b16 %v509
        %v3703 = vunpack.c.l.b16 %v510
        %v3704 = vunpack.c.l.b16 %v511
        %v3705 = vunpack.c.l.b16 %v512
        %v3706 = vunpack.c.l.b16 %v513
        %v3707 = vunpack.c.l.b16 %v514
        %v3708 = vunpack.c.l.b16 %v515
        %v3709 = vunpack.c.l.b16 %v516
        %v3710 = vunpack.c.l.b16 %v517
        %v3711 = vunpack.c.l.b16 %v518
        %v3712 = vunpack.c.l.b16 %v519
        %v3713 = vunpack.c.l.b16 %v520
        %v3714 = vunpack.c.l.b16 %v521
        %v3715 = vunpack.c.l.b16 %v522
        %v3716 = vunpack.c.l.b16 %v523
        %v3717 = vunpack.c.l.b16 %v524
        %v3718 = vunpack.c.l.b16 %v525
        %v3719 = vunpack.c.l.b16 %v526
        %v3720 = vunpack.c.l.b16 %v527
        %v3721 = vunpack.c.l.b16 %v528
        %v3722 = vunpack.c.l.b16 %v529
        %v3723 = vunpack.c.l.b16 %v530
        %v3724 = vunpack.c.l.b16 %v531
        %v3725 = vunpack.c.l.b16 %v532
        %v3726 = vunpack.c.l.b16 %v533
        %v3727 = vunpack.c.l.b16 %v534
        %v3728 = vunpack.c.l.b16 %v535
        %v3729 = vunpack.c.l.b16 %v536
        %v3730 = vunpack.c.l.b16 %v537
        %v3731 = vunpack.c.l.b16 %v538
        %v3732 = vunpack.c.l.b16 %v539
        %v3733 = vunpack.c.l.b16 %v540
        %v3734 = vunpack.c.l.b16 %v541
        %v3735 = vunpack.c.l.b16 %v542
        %v3736 = vunpack.c.l.b16 %v543
        %v3737 = vunpack.c.l.b16 %v544
        %v3738 = vunpack.c.l.b16 %v545
        %v3739 = vunpack.c.l.b16 %v546
        %v3740 = vunpack.c.l.b16 %v547
        %v3741 = vunpack.c.l.b16 %v548
        %v3742 = vunpack.c.l.b16 %v549
        %v3743 = vunpack.c.l.b16 %v550
        %v3744 = vunpack.c.l.b16 %v551
        %v3745 = vunpack.c.l.b16 %v552
        %v3746 = vunpack.c.l.b16 %v553
        %v3747 = vunpack.c.l.b16 %v554
        %v3748 = vunpack.c.l.b16 %v555
        %v3749 = vunpack.c.l.b16 %v556
        %v3750 = vunpack.c.l.b16 %v557
        %v3751 = vunpack.c.l.b16 %v558
        %v3752 = vunpack.c.l.b16 %v559
        %v3753 = vunpack.c.l.b16 %v560
        %v3754 = vunpack.c.l.b16 %v561
        %v3755 = vunpack.c.l.b16 %v562
        %v3756 = vunpack.c.l.b16 %v563
        %v3757 = vunpack.c.l.b16 %v564
        %v3758 = vunpack.c.l.b16 %v565
        %v3759 = vunpack.c.l.b16 %v566
        %v3760 = vunpack.c.l.b16 %v567
        %v3761 = vunpack.c.l.b16 %v568
        %v3762 = vunpack.c.l.b16 %v569
        %v3763 = vunpack.c.l.b16 %v570
        %v3764 = vunpack.c.l.b16 %v571
        %v3765 = vunpack.c.l.b16 %v572
        %v3766 = vunpack.c.l.b16 %v573
        %v3767 = vunpack.c.l.b16 %v574
        %v3768 = vunpack.c.l.b16 %v575
        %v3769 = vunpack.c.l.b16 %v576
        %v3770 = vunpack.c.l.b16 %v577
        %v3771 = vunpack.c.l.b16 %v578
        %v3772 = vunpack.c.l.b16 %v579
        %v3773 = vunpack.c.l.b16 %v580
        %v3774 = vunpack.c.l.b16 %v581
        %v3775 = vunpack.c.l.b16 %v582
        %v3776 = vunpack.c.l.b16 %v583
        %v3777 = vunpack.c.l.b16 %v584
        %v3778 = vunpack.c.l.b16 %v585
        %v3779 = vunpack.c.l.b16 %v586
        %v3780 = vunpack.c.l.b16 %v587
        %v3781 = vunpack.c.l.b16 %v588
        %v3782 = vunpack.c.l.b16 %v589
        %v3783 = vunpack.c.l.b16 %v590
        %v3784 = vunpack.c.l.b16 %v591
        %v3785 = vunpack.c.l.b16 %v592
        %v3786 = vunpack.c.l.b16 %v593
        %v3787 = vunpack.c.l.b16 %v594
        %v3788 = vunpack.c.l.b16 %v595
        %v3789 = vunpack.c.l.b16 %v596
        %v3790 = vunpack.c.l.b16 %v597
        %v3791 = vunpack.c.l.b16 %v598
        %v3792 = vunpack.c.l.b16 %v599
        %v3793 = vunpack.c.l.b16 %v600
        %v3794 = vunpack.c.l.b16 %v601
        %v3795 = vunpack.c.l.b16 %v602
        %v3796 = vunpack.c.l.b16 %v603
        %v3797 = vunpack.c.l.b16 %v604
        %v3798 = vunpack.c.l.b16 %v605
        %v3799 = vunpack.c.l.b16 %v606
        %v3800 = vunpack.c.l.b16 %v607
        %v3801 = vunpack.c.l.b16 %v608
        %v3802 = vunpack.c.l.b16 %v609
        %v3803 = vunpack.c.l.b16 %v610
        %v3804 = vunpack.c.l.b16 %v611
        %v3805 = vunpack.c.l.b16 %v612
        %v3806 = vunpack.c.l.b16 %v613
        %v3807 = vunpack.c.l.b16 %v614
        %v3808 = vunpack.c.l.b16 %v615
        %v3809 = vunpack.c.l.b16 %v616
        %v3810 = vunpack.c.l.b16 %v617
        %v3811 = vunpack.c.l.b16 %v618
        %v3812 = vunpack.c.l.b16 %v619
        %v3813 = vunpack.c.l.b16 %v620
        %v3814 = vunpack.c.l.b16 %v621
        %v3815 = vunpack.c.l.b16 %v622
        %v3816 = vunpack.c.l.b16 %v623
        %v3817 = vunpack.c.l.b16 %v624
        %v3818 = vunpack.c.l.b16 %v625
        %v3819 = vunpack.c.l.b16 %v626
        %v3820 = vunpack.c.l.b16 %v627
        %v3821 = vunpack.c.l.b16 %v628
        %v3822 = vunpack.c.l.b16 %v629
        %v3823 = vunpack.c.l.b16 %v630
        %v3824 = vunpack.c.l.b16 %v631
        %v3825 = vunpack.c.l.b16 %v632
        %v3826 = vunpack.c.l.b16 %v633
        %v3827 = vunpack.c.l.b16 %v634
        %v3828 = vunpack.c.l.b16 %v635
        %v3829 = vunpack.c.l.b16 %v636
        %v3830 = vunpack.c.l.b16 %v637
        %v3831 = vunpack.c.l.b16 %v638
        %v3832 = vunpack.c.l.b16 %v639
        %v3833 = vunpack.c.l.b16 %v640
        %v3834 = vunpack.c.l.b16 %v641
        %v3835 = vunpack.c.l.b16 %v642
        %v3836 = vunpack.c.l.b16 %v643
        %v3837 = vunpack.c.l.b16 %v644
        %v3838 = vunpack.c.l.b16 %v645
        %v3839 = vunpack.c.l.b16 %v646
        %v3840 = vunpack.c.l.b16 %v647
        %v3841 = vunpack.c.l.b16 %v648
        %v3842 = vunpack.c.l.b16 %v649
        %v3843 = vpack.c.b16 %v3700, %v3699
        %v3844 = vpack.c.b16 %v3702, %v3701
        %v3845 = vpack.c.b16 %v3704, %v3703
        %v3846 = vpack.c.b16 %v3706, %v3705
        %v3847 = vpack.c.b16 %v3708, %v3707
        %v3848 = vpack.c.b16 %v3710, %v3709
        %v3849 = vpack.c.b16 %v3712, %v3711
        %v3850 = vpack.c.b16 %v3714, %v3713
        %v3851 = vpack.c.b16 %v3716, %v3715
        %v3852 = vpack.c.b16 %v3718, %v3717
        %v3853 = vpack.c.b16 %v3720, %v3719
        %v3854 = vpack.c.b16 %v3722, %v3721
        %v3855 = vpack.c.b16 %v3724, %v3723
        %v3856 = vpack.c.b16 %v3726, %v3725
        %v3857 = vpack.c.b16 %v3728, %v3727
        %v3858 = vpack.c.b16 %v3730, %v3729
        %v3859 = vpack.c.b16 %v3732, %v3731
        %v3860 = vpack.c.b16 %v3734, %v3733
        %v3861 = vpack.c.b16 %v3736, %v3735
        %v3862 = vpack.c.b16 %v3738, %v3737
        %v3863 = vpack.c.b16 %v3740, %v3739
        %v3864 = vpack.c.b16 %v3742, %v3741
        %v3865 = vpack.c.b16 %v3744, %v3743
        %v3866 = vpack.c.b16 %v3746, %v3745
        %v3867 = vpack.c.b16 %v3748, %v3747
        %v3868 = vpack.c.b16 %v3750, %v3749
        %v3869 = vpack.c.b16 %v3752, %v3751
        %v3870 = vpack.c.b16 %v3754, %v3753
        %v3871 = vpack.c.b16 %v3756, %v3755
        %v3872 = vpack.c.b16 %v3758, %v3757
        %v3873 = vpack.c.b16 %v3760, %v3759
        %v3874 = vpack.c.b16 %v3762, %v3761
        %v3875 = vpack.c.b16 %v3764, %v3763
        %v3876 = vpack.c.b16 %v3766, %v3765
        %v3877 = vpack.c.b16 %v3768, %v3767
        %v3878 = vpack.c.b16 %v3770, %v3769
        %v3879 = vpack.c.b16 %v3772, %v3771
        %v3880 = vpack.c.b16 %v3774, %v3773
        %v3881 = vpack.c.b16 %v3776, %v3775
        %v3882 = vpack.c.b16 %v3778, %v3777
        %v3883 = vpack.c.b16 %v3780, %v3779
        %v3884 = vpack.c.b16 %v3782, %v3781
        %v3885 = vpack.c.b16 %v3784, %v3783
        %v3886 = vpack.c.b16 %v3786, %v3785
        %v3887 = vpack.c.b16 %v3788, %v3787
        %v3888 = vpack.c.b16 %v3790, %v3789
        %v3889 = vpack.c.b16 %v3792, %v3791
        %v3890 = vpack.c.b16 %v3794, %v3793
        %v3891 = vpack.c.b16 %v3796, %v3795
        %v3892 = vpack.c.b16 %v3798, %v3797
        %v3893 = vpack.c.b16 %v3800, %v3799
        %v3894 = vpack.c.b16 %v3802, %v3801
        %v3895 = vpack.c.b16 %v3804, %v3803
        %v3896 = vpack.c.b16 %v3806, %v3805
        %v3897 = vpack.c.b16 %v3808, %v3807
        %v3898 = vpack.c.b16 %v3810, %v3809
        %v3899 = vpack.c.b16 %v3812, %v3811
        %v3900 = vpack.c.b16 %v3814, %v3813
        %v3901 = vpack.c.b16 %v3816, %v3815
        %v3902 = vpack.c.b16 %v3818, %v3817
        %v3903 = vpack.c.b16 %v3820, %v3819
        %v3904 = vpack.c.b16 %v3822, %v3821
        %v3905 = vpack.c.b16 %v3824, %v3823
        %v3906 = vpack.c.b16 %v3826, %v3825
        %v3907 = vpack.c.b16 %v3828, %v3827
        %v3908 = vpack.c.b16 %v3830, %v3829
        %v3909 = vpack.c.b16 %v3832, %v3831
        %v3910 = vpack.c.b16 %v3834, %v3833
        %v3911 = vpack.c.b16 %v3836, %v3835
        %v3912 = vpack.c.b16 %v3838, %v3837
        %v3913 = vpack.c.b16 %v3840, %v3839
        %v3914 = vpack.c.b16 %v3842, %v3841
        %3987 = vmatpush.bf16.msra.mxu0 %v3850
        %3988 = vmatpush.bf16.msra.mxu0 %v3849
        %3989 = vmatpush.bf16.msra.mxu0 %v3848
        %3990 = vmatpush.bf16.msra.mxu0 %v3847
        %3991 = vmatpush.bf16.msra.mxu0 %v3846
        %3992 = vmatpush.bf16.msra.mxu0 %v3845
        %3993 = vmatpush.bf16.msra.mxu0 %v3844
        %3994 = vmatpush.bf16.msra.mxu0 %v3843
        %3995 = vmatmul.bf16.gmra.mxu0 %v3483
        %v3996 = vpop.f32.mrf.mxu0
        %v3997 = vadd.f32 0.0, %v3996
        %v3998 = vpop.f32.mrf.mxu0
        %v3999 = vadd.f32 0.0, %v3998
        %4000 = vmatmul.bf16.gmra.mxu0 %v3492
        %v4001 = vpop.f32.mrf.mxu0
        %v4002 = vadd.f32 0.0, %v4001
        %v4003 = vpop.f32.mrf.mxu0
        %v4004 = vadd.f32 0.0, %v4003
        %4005 = vmatmul.bf16.gmra.mxu0 %v3501
        %v4006 = vpop.f32.mrf.mxu0
        %v4007 = vadd.f32 0.0, %v4006
        %v4008 = vpop.f32.mrf.mxu0
        %v4009 = vadd.f32 0.0, %v4008
        %4010 = vmatmul.bf16.gmra.mxu0 %v3510
        %v4011 = vpop.f32.mrf.mxu0
        %v4012 = vadd.f32 0.0, %v4011
        %v4013 = vpop.f32.mrf.mxu0
        %v4014 = vadd.f32 0.0, %v4013
        %4015 = vdwg.mxu0
        %4016 = vmatpush.bf16.msra.mxu0 %v3858
        %4017 = vmatpush.bf16.msra.mxu0 %v3857
        %4018 = vmatpush.bf16.msra.mxu0 %v3856
        %4019 = vmatpush.bf16.msra.mxu0 %v3855
        %4020 = vmatpush.bf16.msra.mxu0 %v3854
        %4021 = vmatpush.bf16.msra.mxu0 %v3853
        %4022 = vmatpush.bf16.msra.mxu0 %v3852
        %4023 = vmatpush.bf16.msra.mxu0 %v3851
        %4024 = vmatmul.bf16.gmra.mxu0 %v3484
        %v4025 = vpop.f32.mrf.mxu0
        %v4026 = vadd.f32 %v3997, %v4025
        %v4027 = vpop.f32.mrf.mxu0
        %v4028 = vadd.f32 %v3999, %v4027
        %4029 = vmatmul.bf16.gmra.mxu0 %v3493
        %v4030 = vpop.f32.mrf.mxu0
        %v4031 = vadd.f32 %v4002, %v4030
        %v4032 = vpop.f32.mrf.mxu0
        %v4033 = vadd.f32 %v4004, %v4032
        %4034 = vmatmul.bf16.gmra.mxu0 %v3502
        %v4035 = vpop.f32.mrf.mxu0
        %v4036 = vadd.f32 %v4007, %v4035
        %v4037 = vpop.f32.mrf.mxu0
        %v4038 = vadd.f32 %v4009, %v4037
        %4039 = vmatmul.bf16.gmra.mxu0 %v3511
        %v4040 = vpop.f32.mrf.mxu0
        %v4041 = vadd.f32 %v4012, %v4040
        %v4042 = vpop.f32.mrf.mxu0
        %v4043 = vadd.f32 %v4014, %v4042
        %4044 = vdwg.mxu0
        %4045 = vmatpush.bf16.msra.mxu0 %v3866
        %4046 = vmatpush.bf16.msra.mxu0 %v3865
        %4047 = vmatpush.bf16.msra.mxu0 %v3864
        %4048 = vmatpush.bf16.msra.mxu0 %v3863
        %4049 = vmatpush.bf16.msra.mxu0 %v3862
        %4050 = vmatpush.bf16.msra.mxu0 %v3861
        %4051 = vmatpush.bf16.msra.mxu0 %v3860
        %4052 = vmatpush.bf16.msra.mxu0 %v3859
        %4053 = vmatmul.bf16.gmra.mxu0 %v3485
        %v4054 = vpop.f32.mrf.mxu0
        %v4055 = vadd.f32 %v4026, %v4054
        %v4056 = vpop.f32.mrf.mxu0
        %v4057 = vadd.f32 %v4028, %v4056
        %4058 = vmatmul.bf16.gmra.mxu0 %v3494
        %v4059 = vpop.f32.mrf.mxu0
        %v4060 = vadd.f32 %v4031, %v4059
        %v4061 = vpop.f32.mrf.mxu0
        %v4062 = vadd.f32 %v4033, %v4061
        %4063 = vmatmul.bf16.gmra.mxu0 %v3503
        %v4064 = vpop.f32.mrf.mxu0
        %v4065 = vadd.f32 %v4036, %v4064
        %v4066 = vpop.f32.mrf.mxu0
        %v4067 = vadd.f32 %v4038, %v4066
        %4068 = vmatmul.bf16.gmra.mxu0 %v3512
        %v4069 = vpop.f32.mrf.mxu0
        %v4070 = vadd.f32 %v4041, %v4069
        %v4071 = vpop.f32.mrf.mxu0
        %v4072 = vadd.f32 %v4043, %v4071
        %4073 = vdwg.mxu0
        %4074 = vmatpush.bf16.msra.mxu0 %v3874
        %4075 = vmatpush.bf16.msra.mxu0 %v3873
        %4076 = vmatpush.bf16.msra.mxu0 %v3872
        %4077 = vmatpush.bf16.msra.mxu0 %v3871
        %4078 = vmatpush.bf16.msra.mxu0 %v3870
        %4079 = vmatpush.bf16.msra.mxu0 %v3869
        %4080 = vmatpush.bf16.msra.mxu0 %v3868
        %4081 = vmatpush.bf16.msra.mxu0 %v3867
        %4082 = vmatmul.bf16.gmra.mxu0 %v3486
        %v4083 = vpop.f32.mrf.mxu0
        %v4084 = vadd.f32 %v4055, %v4083
        %v4085 = vpop.f32.mrf.mxu0
        %v4086 = vadd.f32 %v4057, %v4085
        %4087 = vmatmul.bf16.gmra.mxu0 %v3495
        %v4088 = vpop.f32.mrf.mxu0
        %v4089 = vadd.f32 %v4060, %v4088
        %v4090 = vpop.f32.mrf.mxu0
        %v4091 = vadd.f32 %v4062, %v4090
        %4092 = vmatmul.bf16.gmra.mxu0 %v3504
        %v4093 = vpop.f32.mrf.mxu0
        %v4094 = vadd.f32 %v4065, %v4093
        %v4095 = vpop.f32.mrf.mxu0
        %v4096 = vadd.f32 %v4067, %v4095
        %4097 = vmatmul.bf16.gmra.mxu0 %v3513
        %v4098 = vpop.f32.mrf.mxu0
        %v4099 = vadd.f32 %v4070, %v4098
        %v4100 = vpop.f32.mrf.mxu0
        %v4101 = vadd.f32 %v4072, %v4100
        %4102 = vdwg.mxu0
        %4103 = vmatpush.bf16.msra.mxu0 %v3882
        %4104 = vmatpush.bf16.msra.mxu0 %v3881
        %4105 = vmatpush.bf16.msra.mxu0 %v3880
        %4106 = vmatpush.bf16.msra.mxu0 %v3879
        %4107 = vmatpush.bf16.msra.mxu0 %v3878
        %4108 = vmatpush.bf16.msra.mxu0 %v3877
        %4109 = vmatpush.bf16.msra.mxu0 %v3876
        %4110 = vmatpush.bf16.msra.mxu0 %v3875
        %4111 = vmatmul.bf16.gmra.mxu0 %v3487
        %v4112 = vpop.f32.mrf.mxu0
        %v4113 = vadd.f32 %v4084, %v4112
        %v4114 = vpop.f32.mrf.mxu0
        %v4115 = vadd.f32 %v4086, %v4114
        %4116 = vmatmul.bf16.gmra.mxu0 %v3496
        %v4117 = vpop.f32.mrf.mxu0
        %v4118 = vadd.f32 %v4089, %v4117
        %v4119 = vpop.f32.mrf.mxu0
        %v4120 = vadd.f32 %v4091, %v4119
        %4121 = vmatmul.bf16.gmra.mxu0 %v3505
        %v4122 = vpop.f32.mrf.mxu0
        %v4123 = vadd.f32 %v4094, %v4122
        %v4124 = vpop.f32.mrf.mxu0
        %v4125 = vadd.f32 %v4096, %v4124
        %4126 = vmatmul.bf16.gmra.mxu0 %v3514
        %v4127 = vpop.f32.mrf.mxu0
        %v4128 = vadd.f32 %v4099, %v4127
        %v4129 = vpop.f32.mrf.mxu0
        %v4130 = vadd.f32 %v4101, %v4129
        %4131 = vdwg.mxu0
        %4132 = vmatpush.bf16.msra.mxu0 %v3890
        %4133 = vmatpush.bf16.msra.mxu0 %v3889
        %4134 = vmatpush.bf16.msra.mxu0 %v3888
        %4135 = vmatpush.bf16.msra.mxu0 %v3887
        %4136 = vmatpush.bf16.msra.mxu0 %v3886
        %4137 = vmatpush.bf16.msra.mxu0 %v3885
        %4138 = vmatpush.bf16.msra.mxu0 %v3884
        %4139 = vmatpush.bf16.msra.mxu0 %v3883
        %4140 = vmatmul.bf16.gmra.mxu0 %v3488
        %v4141 = vpop.f32.mrf.mxu0
        %v4142 = vadd.f32 %v4113, %v4141
        %v4143 = vpop.f32.mrf.mxu0
        %v4144 = vadd.f32 %v4115, %v4143
        %4145 = vmatmul.bf16.gmra.mxu0 %v3497
        %v4146 = vpop.f32.mrf.mxu0
        %v4147 = vadd.f32 %v4118, %v4146
        %v4148 = vpop.f32.mrf.mxu0
        %v4149 = vadd.f32 %v4120, %v4148
        %4150 = vmatmul.bf16.gmra.mxu0 %v3506
        %v4151 = vpop.f32.mrf.mxu0
        %v4152 = vadd.f32 %v4123, %v4151
        %v4153 = vpop.f32.mrf.mxu0
        %v4154 = vadd.f32 %v4125, %v4153
        %4155 = vmatmul.bf16.gmra.mxu0 %v3515
        %v4156 = vpop.f32.mrf.mxu0
        %v4157 = vadd.f32 %v4128, %v4156
        %v4158 = vpop.f32.mrf.mxu0
        %v4159 = vadd.f32 %v4130, %v4158
        %4160 = vdwg.mxu0
        %4161 = vmatpush.bf16.msra.mxu0 %v3898
        %4162 = vmatpush.bf16.msra.mxu0 %v3897
        %4163 = vmatpush.bf16.msra.mxu0 %v3896
        %4164 = vmatpush.bf16.msra.mxu0 %v3895
        %4165 = vmatpush.bf16.msra.mxu0 %v3894
        %4166 = vmatpush.bf16.msra.mxu0 %v3893
        %4167 = vmatpush.bf16.msra.mxu0 %v3892
        %4168 = vmatpush.bf16.msra.mxu0 %v3891
        %4169 = vmatmul.bf16.gmra.mxu0 %v3489
        %v4170 = vpop.f32.mrf.mxu0
        %v4171 = vadd.f32 %v4142, %v4170
        %v4172 = vpop.f32.mrf.mxu0
        %v4173 = vadd.f32 %v4144, %v4172
        %4174 = vmatmul.bf16.gmra.mxu0 %v3498
        %v4175 = vpop.f32.mrf.mxu0
        %v4176 = vadd.f32 %v4147, %v4175
        %v4177 = vpop.f32.mrf.mxu0
        %v4178 = vadd.f32 %v4149, %v4177
        %4179 = vmatmul.bf16.gmra.mxu0 %v3507
        %v4180 = vpop.f32.mrf.mxu0
        %v4181 = vadd.f32 %v4152, %v4180
        %v4182 = vpop.f32.mrf.mxu0
        %v4183 = vadd.f32 %v4154, %v4182
        %4184 = vmatmul.bf16.gmra.mxu0 %v3516
        %v4185 = vpop.f32.mrf.mxu0
        %v4186 = vadd.f32 %v4157, %v4185
        %v4187 = vpop.f32.mrf.mxu0
        %v4188 = vadd.f32 %v4159, %v4187
        %4189 = vdwg.mxu0
        %4190 = vmatpush.bf16.msra.mxu0 %v3906
        %4191 = vmatpush.bf16.msra.mxu0 %v3905
        %4192 = vmatpush.bf16.msra.mxu0 %v3904
        %4193 = vmatpush.bf16.msra.mxu0 %v3903
        %4194 = vmatpush.bf16.msra.mxu0 %v3902
        %4195 = vmatpush.bf16.msra.mxu0 %v3901
        %4196 = vmatpush.bf16.msra.mxu0 %v3900
        %4197 = vmatpush.bf16.msra.mxu0 %v3899
        %4198 = vmatmul.bf16.gmra.mxu0 %v3490
        %v4199 = vpop.f32.mrf.mxu0
        %v4200 = vadd.f32 %v4171, %v4199
        %v4201 = vpop.f32.mrf.mxu0
        %v4202 = vadd.f32 %v4173, %v4201
        %4203 = vmatmul.bf16.gmra.mxu0 %v3499
        %v4204 = vpop.f32.mrf.mxu0
        %v4205 = vadd.f32 %v4176, %v4204
        %v4206 = vpop.f32.mrf.mxu0
        %v4207 = vadd.f32 %v4178, %v4206
        %4208 = vmatmul.bf16.gmra.mxu0 %v3508
        %v4209 = vpop.f32.mrf.mxu0
        %v4210 = vadd.f32 %v4181, %v4209
        %v4211 = vpop.f32.mrf.mxu0
        %v4212 = vadd.f32 %v4183, %v4211
        %4213 = vmatmul.bf16.gmra.mxu0 %v3517
        %v4214 = vpop.f32.mrf.mxu0
        %v4215 = vadd.f32 %v4186, %v4214
        %v4216 = vpop.f32.mrf.mxu0
        %v4217 = vadd.f32 %v4188, %v4216
        %4218 = vdwg.mxu0
        %4219 = vmatpush.bf16.msra.mxu0 %v3914
        %4220 = vmatpush.bf16.msra.mxu0 %v3913
        %4221 = vmatpush.bf16.msra.mxu0 %v3912
        %4222 = vmatpush.bf16.msra.mxu0 %v3911
        %4223 = vmatpush.bf16.msra.mxu0 %v3910
        %4224 = vmatpush.bf16.msra.mxu0 %v3909
        %4225 = vmatpush.bf16.msra.mxu0 %v3908
        %4226 = vmatpush.bf16.msra.mxu0 %v3907
        %4227 = vmatmul.bf16.gmra.mxu0 %v3491
        %v4228 = vpop.f32.mrf.mxu0
        %v4229 = vadd.f32 %v4200, %v4228
        %v4230 = vpop.f32.mrf.mxu0
        %v4231 = vadd.f32 %v4202, %v4230
        %4232 = vmatmul.bf16.gmra.mxu0 %v3500
        %v4233 = vpop.f32.mrf.mxu0
        %v4234 = vadd.f32 %v4205, %v4233
        %v4235 = vpop.f32.mrf.mxu0
        %v4236 = vadd.f32 %v4207, %v4235
        %4237 = vmatmul.bf16.gmra.mxu0 %v3509
        %v4238 = vpop.f32.mrf.mxu0
        %v4239 = vadd.f32 %v4210, %v4238
        %v4240 = vpop.f32.mrf.mxu0
        %v4241 = vadd.f32 %v4212, %v4240
        %4242 = vmatmul.bf16.gmra.mxu0 %v3518
        %v4243 = vpop.f32.mrf.mxu0
        %v4244 = vadd.f32 %v4215, %v4243
        %v4245 = vpop.f32.mrf.mxu0
        %v4246 = vadd.f32 %v4217, %v4245
        %4247 = vdwg.mxu0
        %v4248 = vperm.slane %v652, 0
        %v4249 = vmul.f32 %v4229, %v4248
        %v4250 = vmul.f32 %v4231, %v4248
        %v4251 = vmul.f32 %v4234, %v4248
        %v4252 = vmul.f32 %v4236, %v4248
        %v4253 = vmul.f32 %v4239, %v4248
        %v4254 = vmul.f32 %v4241, %v4248
        %v4255 = vmul.f32 %v4244, %v4248
        %v4256 = vmul.f32 %v4246, %v4248
        %v4257 = vperm.slane %v653, 0
        %v4258 = vadd.f32 %v4249, %v4257
        %v4259 = vadd.f32 %v4250, %v4257
        %v4260 = vadd.f32 %v4251, %v4257
        %v4261 = vadd.f32 %v4252, %v4257
        %v4262 = vadd.f32 %v4253, %v4257
        %v4263 = vadd.f32 %v4254, %v4257
        %v4264 = vadd.f32 %v4255, %v4257
        %v4265 = vadd.f32 %v4256, %v4257
        %v4266 = vld [vmem:[#allocation2] sm:$0xff]
        %v4267 = vld [vmem:[#allocation2 + $0x8] sm:$0xff]
        %v4268 = vld [vmem:[#allocation2 + $0x10] sm:$0xff]
        %v4269 = vld [vmem:[#allocation2 + $0x18] sm:$0xff]
        %v4270 = vld [vmem:[#allocation2 + $0x20] sm:$0xff]
        %v4271 = vld [vmem:[#allocation2 + $0x28] sm:$0xff]
        %v4272 = vld [vmem:[#allocation2 + $0x30] sm:$0xff]
        %v4273 = vld [vmem:[#allocation2 + $0x38] sm:$0xff]
        %v4274 = vadd.f32 %v4258, %v4266
        %v4275 = vadd.f32 %v4259, %v4267
        %v4276 = vadd.f32 %v4260, %v4268
        %v4277 = vadd.f32 %v4261, %v4269
        %v4278 = vadd.f32 %v4262, %v4270
        %v4279 = vadd.f32 %v4263, %v4271
        %v4280 = vadd.f32 %v4264, %v4272
        %v4281 = vadd.f32 %v4265, %v4273
        %v4282 = vmax.f32 %v4274, 0.0
        %v4283 = vmax.f32 %v4275, 0.0
        %v4284 = vmax.f32 %v4276, 0.0
        %v4285 = vmax.f32 %v4277, 0.0
        %v4286 = vmax.f32 %v4278, 0.0
        %v4287 = vmax.f32 %v4279, 0.0
        %v4288 = vmax.f32 %v4280, 0.0
        %v4289 = vmax.f32 %v4281, 0.0
        %4290 = vst [vmem:[#allocation2] sm:$0xff] %v4282
        %4291 = vst [vmem:[#allocation2 + $0x8] sm:$0xff] %v4283
        %4292 = vst [vmem:[#allocation2 + $0x10] sm:$0xff] %v4284
        %4293 = vst [vmem:[#allocation2 + $0x18] sm:$0xff] %v4285
        %4294 = vst [vmem:[#allocation2 + $0x20] sm:$0xff] %v4286
        %4295 = vst [vmem:[#allocation2 + $0x28] sm:$0xff] %v4287
        %4296 = vst [vmem:[#allocation2 + $0x30] sm:$0xff] %v4288
        %4297 = vst [vmem:[#allocation2 + $0x38] sm:$0xff] %v4289
        %p4298 = scmp.eq.s32.totalorder %s28, 1
        // Predicated region
        $region49: #{tpu_custom_call.1} parent=31 // pred_check
          %p4299 = pneg %p4298
        $region50: #{tpu_custom_call.1} parent=31 // pred_check_branch
          %4301 = sbr.rel (%p4299) target = $region52
        $region51: #{tpu_custom_call.1} parent=31 // pred_region
          %v4302 = vld [vmem:[#allocation2] sm:$0xff]
          %v4303 = vld [vmem:[#allocation2 + $0x8] sm:$0xff]
          %v4304 = vld [vmem:[#allocation2 + $0x10] sm:$0xff]
          %v4305 = vld [vmem:[#allocation2 + $0x18] sm:$0xff]
          %v4306 = vld [vmem:[#allocation2 + $0x20] sm:$0xff]
          %v4307 = vld [vmem:[#allocation2 + $0x28] sm:$0xff]
          %v4308 = vld [vmem:[#allocation2 + $0x30] sm:$0xff]
          %v4309 = vld [vmem:[#allocation2 + $0x38] sm:$0xff]
          %4310 = vst [vmem:[%s280] sm:$0xff] %v4302
          %4311 = vst [vmem:[%s280 + $0x8] sm:$0xff] %v4303
          %4312 = vst [vmem:[%s280 + $0x10] sm:$0xff] %v4304
          %4313 = vst [vmem:[%s280 + $0x18] sm:$0xff] %v4305
          %4314 = vst [vmem:[%s280 + $0x20] sm:$0xff] %v4306
          %4315 = vst [vmem:[%s280 + $0x28] sm:$0xff] %v4307
          %4316 = vst [vmem:[%s280 + $0x30] sm:$0xff] %v4308
          %4317 = vst [vmem:[%s280 + $0x38] sm:$0xff] %v4309
        $region52: #{tpu_custom_call.1} parent=31 // pred_fallthru
          _
        %s4318 = sand.u32 %s121, 1
        %s4319 = scalar_lea.sflag [#allocation7], %s4318
        %s4320 = sand.u32 %s121, 1
        %s4321 = smul.addr %s4320, 64
        %s4322 = scalar_lea.vmem [#allocation11], %s4321
        // Predicated region
        $region53: #{tpu_custom_call.1} parent=31 // pred_check
          %p4323 = pneg %p131
        $region54: #{tpu_custom_call.1} parent=31 // pred_check_branch
          %4325 = sbr.rel (%p4323) target = $region56
        $region55: #{tpu_custom_call.1} parent=31 // pred_region
          %4327 = vsyncadd %s4319, 0
          %s4328 = smul.addr %s27, 8
          %s4329 = smul.addr %s4328, 8
          %s4330 = scalar_lea.hbm %s3, %s4329
          %s4331 = sshll.u32 %s4322, 4
          %s4332 = int_to_ptr.vmem [resolvable:$true] %s4331
          %s4333 = sshll.u32 %s4330, 4
          %s4334 = int_to_ptr.hbm [resolvable:$true] %s4333
          %4339 = dma.vmem_to_hbm [thread:$0]  %s4332, 1024, %s4334, %s4319, 128, 128, 8
        $region56: #{tpu_custom_call.1} parent=31 // pred_fallthru
          _
      $region32: #{tpu_custom_call.1} parent=5 // pred_fallthru
        _
      %p4340 = scmp.le.s32.totalorder 2, %s18
      // Predicated region
      $region57: #{tpu_custom_call.1} parent=5 // pred_check
        %p4341 = pneg %p4340
      $region58: #{tpu_custom_call.1} parent=5 // pred_check_branch
        %4343 = sbr.rel (%p4341) target = $region60
      $region59: #{tpu_custom_call.1} parent=5 // pred_region
        %s4344 = ssub.s32 %s18, 2
        // Predicated region
        $region61: #{tpu_custom_call.1} parent=59 // pred_check
          %p4345 = pneg %p137
        $region62: #{tpu_custom_call.1} parent=59 // pred_check_branch
          %4347 = sbr.rel (%p4345) target = $region64
        $region63: #{tpu_custom_call.1} parent=59 // pred_region
          %s4348 = sand.u32 %s122, 1
          %s4349 = scalar_lea.sflag [#allocation7], %s4348
          %s4350 = sand.u32 %s122, 1
          %s4351 = smul.addr %s4350, 64
          %s4352 = scalar_lea.vmem [#allocation11], %s4351
          %4354 = dma.done %s4349, 1024
        $region64: #{tpu_custom_call.1} parent=59 // pred_fallthru
          _
      $region60: #{tpu_custom_call.1} parent=5 // pred_fallthru
        _
    $region6: #{tpu_custom_call.1} parent=1 // loop_footer
      %s22 = sadd.s32 1, %s18
    $region7: #{tpu_custom_call.1} parent=1 // loop_footer_branch
      %17 = sbr.rel target = $region3
    $region8: #{tpu_custom_call.1} parent=1 // loop_exit
      _
    %4355 = vsyncpa [#allocation6], 1
    %s4356 = scalar_lea.sflag [#allocation6], 1
    %4357 = vsyncpa %s4356, 1
    %4358 = vsyncpa [#allocation9], 1
    %s4359 = scalar_lea.sflag [#allocation9], 1
    %4360 = vsyncpa %s4359, 1
    %4361 = vsyncpa [#allocation7], 1
    %s4362 = scalar_lea.sflag [#allocation7], 1
    %4363 = vsyncpa %s4362, 1

</llo_original>
